<compile_context>
chip_gen: v6e
topology: v6e:2x2x1
jax: 0.10.0
libtpu: 0.0.40
codegen_flags: <defaults>
</compile_context>

<pallas_src>
import functools
import math

import jax
import jax.numpy as jnp
from jax import lax
from jax.experimental import pallas as pl
from jax.experimental.pallas import tpu as pltpu


# ----------------------------------------------------------------------------
# Fused autoencoder kernel
# ----------------------------------------------------------------------------
def _rnn_ae_kernel(*refs, T, B, H, num_layers):
    """refs layout:
       [x, enc params (4 + 3*L), dec params (4 + 3*L), re_out, z_out,
        act0_scr, hseq_scr, gates_scr]
       coder params order: w1, b1, (w_ih, w_hh, b) * L, w2, b2
    """
    npc = 4 + 3 * num_layers
    x_ref = refs[0]
    enc = refs[1:1 + npc]
    dec = refs[1 + npc:1 + 2 * npc]
    re_ref = refs[1 + 2 * npc]
    z_ref = refs[2 + 2 * npc]
    act0, hseq, gates = refs[3 + 2 * npc:]

    def run_coder(in_ref, params, out_ref):
        # Dense-1 (+ tanh) over ALL timesteps at once: single lane-dense matmul.
        act0[...] = jnp.tanh(
            jnp.dot(in_ref[...], params[0][...],
                    preferred_element_type=jnp.float32) + params[1][...])

        src = act0
        for layer in range(num_layers):
            w_ih = params[2 + 3 * layer]
            w_hh_v = params[3 + 3 * layer][...]   # loaded once, VMEM/vreg resident
            b = params[4 + 3 * layer]

            # Hoisted input projection + bias: one (T*B, Din) @ (Din, 4H) matmul.
            gates[...] = (
                jnp.dot(src[...], w_ih[...], preferred_element_type=jnp.float32)
                + b[...])

            h = jnp.zeros((B, H), jnp.float32)
            c = jnp.zeros((B, H), jnp.float32)
            # Sequential recurrence: only h @ W_hh + gating per step.
            for t in range(T):
                g = gates[pl.ds(t * B, B), :] + jnp.dot(
                    h, w_hh_v, preferred_element_type=jnp.float32)
                sg = jax.nn.sigmoid(g)   # full 4H-lane vreg
                th = jnp.tanh(g)
                # PyTorch LSTM gate order: i, f, g, o
                c = sg[:, H:2 * H] * c + sg[:, 0:H] * th[:, 2 * H:3 * H]
                h = sg[:, 3 * H:4 * H] * jnp.tanh(c)
                hseq[pl.ds(t * B, B), :] = h
            src = hseq

        # Dense-2 over ALL timesteps at once.
        out_ref[...] = (
            jnp.dot(src[...], params[npc - 2][...],
                    preferred_element_type=jnp.float32) + params[npc - 1][...])

    run_coder(x_ref, enc, z_ref)    # encoder: x -> z
    run_coder(z_ref, dec, re_ref)   # decoder: z -> re_x


def _flatten_coder(p):
    flat = [p["w1"], p["b1"].reshape(1, -1)]
    for lw in p["lstm"]:
        flat += [lw["w_ih"], lw["w_hh"], lw["b"].reshape(1, -1)]
    flat += [p["w2"], p["b2"].reshape(1, -1)]
    return flat


def rnn_autoencoder_forward(params, inp):
    """inp: (batch, seq, inp_dim). Returns (re_inp, z) with PyTorch layouts."""
    Bsz, T, inp_dim = inp.shape
    enc, dec = params["enc"], params["dec"]
    hidden_dim = enc["w1"].shape[1]
    H = enc["lstm"][0]["w_hh"].shape[0]
    num_layers = len(enc["lstm"])
    z_dim = enc["w2"].shape[1]

    # Time-major, flattened over (T, B) for the batched dense / input-projection
    # matmuls inside the kernel.
    x_tm = jnp.transpose(inp, (1, 0, 2)).reshape(T * Bsz, inp_dim)

    flat_inputs = [x_tm] + _flatten_coder(enc) + _flatten_coder(dec)

    kern = functools.partial(_rnn_ae_kernel, T=T, B=Bsz, H=H,
                             num_layers=num_layers)
    vmem_spec = pl.BlockSpec(memory_space=pltpu.MemorySpace.VMEM)

    re_flat, z_flat = pl.pallas_call(
        kern,
        out_shape=(
            jax.ShapeDtypeStruct((T * Bsz, inp_dim), jnp.float32),
            jax.ShapeDtypeStruct((T * Bsz, z_dim), jnp.float32),
        ),
        in_specs=[vmem_spec] * len(flat_inputs),
        out_specs=(vmem_spec, vmem_spec),
        scratch_shapes=[
            pltpu.VMEM((T * Bsz, hidden_dim), jnp.float32),  # dense1 activations
            pltpu.VMEM((T * Bsz, H), jnp.float32),           # LSTM hidden history
            pltpu.VMEM((T * Bsz, 4 * H), jnp.float32),       # precomputed gates
        ],
    )(*flat_inputs)

    re_inp = jnp.transpose(re_flat.reshape(T, Bsz, inp_dim), (1, 0, 2))
    z = jnp.transpose(z_flat.reshape(T, Bsz, z_dim), (1, 0, 2))
    return re_inp, z


# ----------------------------------------------------------------------------
# Parameter initialization (deterministic, PyTorch-default-style uniform)
# ----------------------------------------------------------------------------
def _uniform(key, shape, bound):
    return jax.random.uniform(key, shape, jnp.float32, -bound, bound)


def init_coder(key, in_dim, out_dim, hidden_dim, rnn_hidden_dim, num_layers):
    """Params for one RNNEncoder / RNNDecoder half (unidirectional LSTM)."""
    k = key

    def nxt():
        nonlocal k
        k, sub = jax.random.split(k)
        return sub

    p = {}
    b1 = 1.0 / math.sqrt(in_dim)
    p["w1"] = _uniform(nxt(), (in_dim, hidden_dim), b1)
    p["b1"] = _uniform(nxt(), (hidden_dim,), b1)

    p["lstm"] = []
    br = 1.0 / math.sqrt(rnn_hidden_dim)
    for layer in range(num_layers):
        din = hidden_dim if layer == 0 else rnn_hidden_dim
        w_ih = _uniform(nxt(), (din, 4 * rnn_hidden_dim), br)
        w_hh = _uniform(nxt(), (rnn_hidden_dim, 4 * rnn_hidden_dim), br)
        b_ih = _uniform(nxt(), (4 * rnn_hidden_dim,), br)
        b_hh = _uniform(nxt(), (4 * rnn_hidden_dim,), br)
        p["lstm"].append({"w_ih": w_ih, "w_hh": w_hh, "b": b_ih + b_hh})

    b2 = 1.0 / math.sqrt(rnn_hidden_dim)
    p["w2"] = _uniform(nxt(), (rnn_hidden_dim, out_dim), b2)
    p["b2"] = _uniform(nxt(), (out_dim,), b2)
    return p


def init_autoencoder(key, inp_dim, z_dim, hidden_dim, rnn_hidden_dim, num_layers):
    k_enc, k_dec = jax.random.split(key)
    return {
        "enc": init_coder(k_enc, inp_dim, z_dim, hidden_dim, rnn_hidden_dim, num_layers),
        "dec": init_coder(k_dec, z_dim, inp_dim, hidden_dim, rnn_hidden_dim, num_layers),
    }


# ----------------------------------------------------------------------------
# Pure-JAX reference (for correctness verification)
# ----------------------------------------------------------------------------
def _lstm_ref(x_tbd, w_ih, w_hh, b):
    T, B, _ = x_tbd.shape
    H = w_hh.shape[0]

    def step(carry, x_t):
        h, c = carry
        gts = x_t @ w_ih + h @ w_hh + b
        i = jax.nn.sigmoid(gts[:, :H])
        f = jax.nn.sigmoid(gts[:, H:2 * H])
        g = jnp.tanh(gts[:, 2 * H:3 * H])
        o = jax.nn.sigmoid(gts[:, 3 * H:4 * H])
        c = f * c + i * g
        h = o * jnp.tanh(c)
        return (h, c), h

    _, ys = lax.scan(step, (jnp.zeros((B, H)), jnp.zeros((B, H))), x_tbd)
    return ys


def _coder_ref(p, x_tbd):
    h = jnp.tanh(x_tbd @ p["w1"] + p["b1"])
    for lw in p["lstm"]:
        h = _lstm_ref(h, lw["w_ih"], lw["w_hh"], lw["b"])
    return h @ p["w2"] + p["b2"]


def rnn_autoencoder_ref(params, inp):
    x = jnp.transpose(inp, (1, 0, 2))
    z = _coder_ref(params["enc"], x)
    re = _coder_ref(params["dec"], z)
    return jnp.transpose(re, (1, 0, 2)), jnp.transpose(z, (1, 0, 2))


# ----------------------------------------------------------------------------
if __name__ == "__main__":
    B, T = 2, 8
    inp_dim, z_dim = 16, 8
    hidden_dim, rnn_hidden_dim, num_layers = 32, 32, 2
    # TODO(synk): bidirectional=True and cell in {'gru','rnn'} paths not
    #             implemented (module defaults: cell='lstm', bidirectional=False).

    key = jax.random.PRNGKey(0)
    k_param, k_inp = jax.random.split(key)
    params = init_autoencoder(k_param, inp_dim, z_dim, hidden_dim,
                              rnn_hidden_dim, num_layers)
    inp = jax.random.normal(k_inp, (B, T, inp_dim), dtype=jnp.float32)

    fwd = jax.jit(rnn_autoencoder_forward)
    re_inp, z = jax.block_until_ready(fwd(params, inp))
    re_ref, z_ref = jax.block_until_ready(rnn_autoencoder_ref(params, inp))

    assert re_inp.shape == (B, T, inp_dim) and z.shape == (B, T, z_dim)
    assert jnp.allclose(re_inp, re_ref, atol=1e-4, rtol=1e-4)
    assert jnp.allclose(z, z_ref, atol=1e-4, rtol=1e-4)
    print("KERNEL_OK")
</pallas_src>

<mosaic_0001>
module attributes {stable_mosaic.version = 11 : i64} {
  func.func @_rnn_ae_kernel(%arg0: memref<16x16xf32, #tpu.memory_space<vmem>>, %arg1: memref<16x32xf32, #tpu.memory_space<vmem>>, %arg2: memref<1x32xf32, #tpu.memory_space<vmem>>, %arg3: memref<32x128xf32, #tpu.memory_space<vmem>>, %arg4: memref<32x128xf32, #tpu.memory_space<vmem>>, %arg5: memref<1x128xf32, #tpu.memory_space<vmem>>, %arg6: memref<32x128xf32, #tpu.memory_space<vmem>>, %arg7: memref<32x128xf32, #tpu.memory_space<vmem>>, %arg8: memref<1x128xf32, #tpu.memory_space<vmem>>, %arg9: memref<32x8xf32, #tpu.memory_space<vmem>>, %arg10: memref<1x8xf32, #tpu.memory_space<vmem>>, %arg11: memref<8x32xf32, #tpu.memory_space<vmem>>, %arg12: memref<1x32xf32, #tpu.memory_space<vmem>>, %arg13: memref<32x128xf32, #tpu.memory_space<vmem>>, %arg14: memref<32x128xf32, #tpu.memory_space<vmem>>, %arg15: memref<1x128xf32, #tpu.memory_space<vmem>>, %arg16: memref<32x128xf32, #tpu.memory_space<vmem>>, %arg17: memref<32x128xf32, #tpu.memory_space<vmem>>, %arg18: memref<1x128xf32, #tpu.memory_space<vmem>>, %arg19: memref<32x16xf32, #tpu.memory_space<vmem>>, %arg20: memref<1x16xf32, #tpu.memory_space<vmem>>, %arg21: memref<16x16xf32, #tpu.memory_space<vmem>>, %arg22: memref<16x8xf32, #tpu.memory_space<vmem>>, %arg23: memref<16x32xf32, #tpu.memory_space<vmem>>, %arg24: memref<16x32xf32, #tpu.memory_space<vmem>>, %arg25: memref<16x128xf32, #tpu.memory_space<vmem>>) attributes {dimension_semantics = [], scalar_prefetch = 0 : i64, scratch_operands = 3 : i64, tpu.core_type = #tpu.core_type<tc>} {
    %c0 = arith.constant 0 : index
    %c0_0 = arith.constant 0 : index
    %0 = vector.load %arg0[%c0, %c0_0] : memref<16x16xf32, #tpu.memory_space<vmem>>, vector<16x16xf32>
    %c0_1 = arith.constant 0 : index
    %c0_2 = arith.constant 0 : index
    %1 = vector.load %arg1[%c0_1, %c0_2] : memref<16x32xf32, #tpu.memory_space<vmem>>, vector<16x32xf32>
    %cst = arith.constant dense<0.000000e+00> : vector<16x32xf32>
    %2 = tpu.matmul %0, %1, %cst {dimension_numbers = #tpu.dot_dimension_numbers<[1], [0], [0], [1], [0, 0, 1, 1], [], []>} : vector<16x16xf32>, vector<16x32xf32>, vector<16x32xf32> -> vector<16x32xf32>
    %c0_3 = arith.constant 0 : index
    %c0_4 = arith.constant 0 : index
    %3 = vector.load %arg2[%c0_3, %c0_4] : memref<1x32xf32, #tpu.memory_space<vmem>>, vector<1x32xf32>
    %4 = vector.broadcast %3 : vector<1x32xf32> to vector<16x32xf32>
    %5 = arith.addf %2, %4 : vector<16x32xf32>
    %6 = math.tanh %5 : vector<16x32xf32>
    %c0_5 = arith.constant 0 : index
    %c0_6 = arith.constant 0 : index
    %7 = vector.load %arg23[%c0_5, %c0_6] : memref<16x32xf32, #tpu.memory_space<vmem>>, vector<16x32xf32>
    tpu.vector_store %arg23[%c0_5, %c0_6], %6 {strides = array<i32>} : memref<16x32xf32, #tpu.memory_space<vmem>>, vector<16x32xf32>,
    %c0_7 = arith.constant 0 : index
    %c0_8 = arith.constant 0 : index
    %8 = vector.load %arg4[%c0_7, %c0_8] : memref<32x128xf32, #tpu.memory_space<vmem>>, vector<32x128xf32>
    %c0_9 = arith.constant 0 : index
    %c0_10 = arith.constant 0 : index
    %9 = vector.load %arg23[%c0_9, %c0_10] : memref<16x32xf32, #tpu.memory_space<vmem>>, vector<16x32xf32>
    %c0_11 = arith.constant 0 : index
    %c0_12 = arith.constant 0 : index
    %10 = vector.load %arg3[%c0_11, %c0_12] : memref<32x128xf32, #tpu.memory_space<vmem>>, vector<32x128xf32>
    %cst_13 = arith.constant dense<0.000000e+00> : vector<16x128xf32>
    %11 = tpu.matmul %9, %10, %cst_13 {dimension_numbers = #tpu.dot_dimension_numbers<[1], [0], [0], [1], [0, 0, 1, 1], [], []>} : vector<16x32xf32>, vector<32x128xf32>, vector<16x128xf32> -> vector<16x128xf32>
    %c0_14 = arith.constant 0 : index
    %c0_15 = arith.constant 0 : index
    %12 = vector.load %arg5[%c0_14, %c0_15] : memref<1x128xf32, #tpu.memory_space<vmem>>, vector<1x128xf32>
    %13 = vector.broadcast %12 : vector<1x128xf32> to vector<16x128xf32>
    %14 = arith.addf %11, %13 : vector<16x128xf32>
    %c0_16 = arith.constant 0 : index
    %c0_17 = arith.constant 0 : index
    %15 = vector.load %arg25[%c0_16, %c0_17] : memref<16x128xf32, #tpu.memory_space<vmem>>, vector<16x128xf32>
    tpu.vector_store %arg25[%c0_16, %c0_17], %14 {strides = array<i32>} : memref<16x128xf32, #tpu.memory_space<vmem>>, vector<16x128xf32>,
    %cst_18 = arith.constant 0.000000e+00 : f32
    %16 = vector.broadcast %cst_18 : f32 to vector<2x32xf32>
    %cst_19 = arith.constant 0.000000e+00 : f32
    %17 = vector.broadcast %cst_19 : f32 to vector<2x32xf32>
    %c0_20 = arith.constant 0 : index
    %c0_21 = arith.constant 0 : index
    %18 = vector.load %arg25[%c0_20, %c0_21] : memref<16x128xf32, #tpu.memory_space<vmem>>, vector<2x128xf32>
    %cst_22 = arith.constant dense<0.000000e+00> : vector<2x128xf32>
    %19 = tpu.matmul %16, %8, %cst_22 {dimension_numbers = #tpu.dot_dimension_numbers<[1], [0], [0], [1], [0, 0, 1, 1], [], []>} : vector<2x32xf32>, vector<32x128xf32>, vector<2x128xf32> -> vector<2x128xf32>
    %20 = arith.addf %18, %19 : vector<2x128xf32>
    %21 = arith.negf %20 : vector<2x128xf32>
    %22 = math.exp %21 : vector<2x128xf32>
    %cst_23 = arith.constant 1.000000e+00 : f32
    %23 = vector.broadcast %cst_23 : f32 to vector<2x128xf32>
    %24 = arith.addf %23, %22 : vector<2x128xf32>
    %25 = arith.divf %23, %24 : vector<2x128xf32>
    %26 = math.tanh %20 : vector<2x128xf32>
    %27 = vector.extract_strided_slice %25 {offsets = [0, 32], sizes = [2, 32], strides = [1, 1]} : vector<2x128xf32> to vector<2x32xf32>
    %28 = arith.mulf %27, %17 : vector<2x32xf32>
    %29 = vector.extract_strided_slice %25 {offsets = [0, 0], sizes = [2, 32], strides = [1, 1]} : vector<2x128xf32> to vector<2x32xf32>
    %30 = vector.extract_strided_slice %26 {offsets = [0, 64], sizes = [2, 32], strides = [1, 1]} : vector<2x128xf32> to vector<2x32xf32>
    %31 = arith.mulf %29, %30 : vector<2x32xf32>
    %32 = arith.addf %28, %31 : vector<2x32xf32>
    %33 = vector.extract_strided_slice %25 {offsets = [0, 96], sizes = [2, 32], strides = [1, 1]} : vector<2x128xf32> to vector<2x32xf32>
    %34 = math.tanh %32 : vector<2x32xf32>
    %35 = arith.mulf %33, %34 : vector<2x32xf32>
    %c0_24 = arith.constant 0 : index
    %c0_25 = arith.constant 0 : index
    %36 = vector.load %arg24[%c0_24, %c0_25] : memref<16x32xf32, #tpu.memory_space<vmem>>, vector<2x32xf32>
    tpu.vector_store %arg24[%c0_24, %c0_25], %35 {strides = array<i32>} : memref<16x32xf32, #tpu.memory_space<vmem>>, vector<2x32xf32>,
    %c2 = arith.constant 2 : index
    %c0_26 = arith.constant 0 : index
    %37 = vector.load %arg25[%c2, %c0_26] : memref<16x128xf32, #tpu.memory_space<vmem>>, vector<2x128xf32>
    %cst_27 = arith.constant dense<0.000000e+00> : vector<2x128xf32>
    %38 = tpu.matmul %35, %8, %cst_27 {dimension_numbers = #tpu.dot_dimension_numbers<[1], [0], [0], [1], [0, 0, 1, 1], [], []>} : vector<2x32xf32>, vector<32x128xf32>, vector<2x128xf32> -> vector<2x128xf32>
    %39 = arith.addf %37, %38 : vector<2x128xf32>
    %40 = arith.negf %39 : vector<2x128xf32>
    %41 = math.exp %40 : vector<2x128xf32>
    %cst_28 = arith.constant 1.000000e+00 : f32
    %42 = vector.broadcast %cst_28 : f32 to vector<2x128xf32>
    %43 = arith.addf %42, %41 : vector<2x128xf32>
    %44 = arith.divf %42, %43 : vector<2x128xf32>
    %45 = math.tanh %39 : vector<2x128xf32>
    %46 = vector.extract_strided_slice %44 {offsets = [0, 32], sizes = [2, 32], strides = [1, 1]} : vector<2x128xf32> to vector<2x32xf32>
    %47 = arith.mulf %46, %32 : vector<2x32xf32>
    %48 = vector.extract_strided_slice %44 {offsets = [0, 0], sizes = [2, 32], strides = [1, 1]} : vector<2x128xf32> to vector<2x32xf32>
    %49 = vector.extract_strided_slice %45 {offsets = [0, 64], sizes = [2, 32], strides = [1, 1]} : vector<2x128xf32> to vector<2x32xf32>
    %50 = arith.mulf %48, %49 : vector<2x32xf32>
    %51 = arith.addf %47, %50 : vector<2x32xf32>
    %52 = vector.extract_strided_slice %44 {offsets = [0, 96], sizes = [2, 32], strides = [1, 1]} : vector<2x128xf32> to vector<2x32xf32>
    %53 = math.tanh %51 : vector<2x32xf32>
    %54 = arith.mulf %52, %53 : vector<2x32xf32>
    %c2_29 = arith.constant 2 : index
    %c0_30 = arith.constant 0 : index
    %55 = vector.load %arg24[%c2_29, %c0_30] : memref<16x32xf32, #tpu.memory_space<vmem>>, vector<2x32xf32>
    tpu.vector_store %arg24[%c2_29, %c0_30], %54 {strides = array<i32>} : memref<16x32xf32, #tpu.memory_space<vmem>>, vector<2x32xf32>,
    %c4 = arith.constant 4 : index
    %c0_31 = arith.constant 0 : index
    %56 = vector.load %arg25[%c4, %c0_31] : memref<16x128xf32, #tpu.memory_space<vmem>>, vector<2x128xf32>
    %cst_32 = arith.constant dense<0.000000e+00> : vector<2x128xf32>
    %57 = tpu.matmul %54, %8, %cst_32 {dimension_numbers = #tpu.dot_dimension_numbers<[1], [0], [0], [1], [0, 0, 1, 1], [], []>} : vector<2x32xf32>, vector<32x128xf32>, vector<2x128xf32> -> vector<2x128xf32>
    %58 = arith.addf %56, %57 : vector<2x128xf32>
    %59 = arith.negf %58 : vector<2x128xf32>
    %60 = math.exp %59 : vector<2x128xf32>
    %cst_33 = arith.constant 1.000000e+00 : f32
    %61 = vector.broadcast %cst_33 : f32 to vector<2x128xf32>
    %62 = arith.addf %61, %60 : vector<2x128xf32>
    %63 = arith.divf %61, %62 : vector<2x128xf32>
    %64 = math.tanh %58 : vector<2x128xf32>
    %65 = vector.extract_strided_slice %63 {offsets = [0, 32], sizes = [2, 32], strides = [1, 1]} : vector<2x128xf32> to vector<2x32xf32>
    %66 = arith.mulf %65, %51 : vector<2x32xf32>
    %67 = vector.extract_strided_slice %63 {offsets = [0, 0], sizes = [2, 32], strides = [1, 1]} : vector<2x128xf32> to vector<2x32xf32>
    %68 = vector.extract_strided_slice %64 {offsets = [0, 64], sizes = [2, 32], strides = [1, 1]} : vector<2x128xf32> to vector<2x32xf32>
    %69 = arith.mulf %67, %68 : vector<2x32xf32>
    %70 = arith.addf %66, %69 : vector<2x32xf32>
    %71 = vector.extract_strided_slice %63 {offsets = [0, 96], sizes = [2, 32], strides = [1, 1]} : vector<2x128xf32> to vector<2x32xf32>
    %72 = math.tanh %70 : vector<2x32xf32>
    %73 = arith.mulf %71, %72 : vector<2x32xf32>
    %c4_34 = arith.constant 4 : index
    %c0_35 = arith.constant 0 : index
    %74 = vector.load %arg24[%c4_34, %c0_35] : memref<16x32xf32, #tpu.memory_space<vmem>>, vector<2x32xf32>
    tpu.vector_store %arg24[%c4_34, %c0_35], %73 {strides = array<i32>} : memref<16x32xf32, #tpu.memory_space<vmem>>, vector<2x32xf32>,
    %c6 = arith.constant 6 : index
    %c0_36 = arith.constant 0 : index
    %75 = vector.load %arg25[%c6, %c0_36] : memref<16x128xf32, #tpu.memory_space<vmem>>, vector<2x128xf32>
    %cst_37 = arith.constant dense<0.000000e+00> : vector<2x128xf32>
    %76 = tpu.matmul %73, %8, %cst_37 {dimension_numbers = #tpu.dot_dimension_numbers<[1], [0], [0], [1], [0, 0, 1, 1], [], []>} : vector<2x32xf32>, vector<32x128xf32>, vector<2x128xf32> -> vector<2x128xf32>
    %77 = arith.addf %75, %76 : vector<2x128xf32>
    %78 = arith.negf %77 : vector<2x128xf32>
    %79 = math.exp %78 : vector<2x128xf32>
    %cst_38 = arith.constant 1.000000e+00 : f32
    %80 = vector.broadcast %cst_38 : f32 to vector<2x128xf32>
    %81 = arith.addf %80, %79 : vector<2x128xf32>
    %82 = arith.divf %80, %81 : vector<2x128xf32>
    %83 = math.tanh %77 : vector<2x128xf32>
    %84 = vector.extract_strided_slice %82 {offsets = [0, 32], sizes = [2, 32], strides = [1, 1]} : vector<2x128xf32> to vector<2x32xf32>
    %85 = arith.mulf %84, %70 : vector<2x32xf32>
    %86 = vector.extract_strided_slice %82 {offsets = [0, 0], sizes = [2, 32], strides = [1, 1]} : vector<2x128xf32> to vector<2x32xf32>
    %87 = vector.extract_strided_slice %83 {offsets = [0, 64], sizes = [2, 32], strides = [1, 1]} : vector<2x128xf32> to vector<2x32xf32>
    %88 = arith.mulf %86, %87 : vector<2x32xf32>
    %89 = arith.addf %85, %88 : vector<2x32xf32>
    %90 = vector.extract_strided_slice %82 {offsets = [0, 96], sizes = [2, 32], strides = [1, 1]} : vector<2x128xf32> to vector<2x32xf32>
    %91 = math.tanh %89 : vector<2x32xf32>
    %92 = arith.mulf %90, %91 : vector<2x32xf32>
    %c6_39 = arith.constant 6 : index
    %c0_40 = arith.constant 0 : index
    %93 = vector.load %arg24[%c6_39, %c0_40] : memref<16x32xf32, #tpu.memory_space<vmem>>, vector<2x32xf32>
    tpu.vector_store %arg24[%c6_39, %c0_40], %92 {strides = array<i32>} : memref<16x32xf32, #tpu.memory_space<vmem>>, vector<2x32xf32>,
    %c8 = arith.constant 8 : index
    %c0_41 = arith.constant 0 : index
    %94 = vector.load %arg25[%c8, %c0_41] : memref<16x128xf32, #tpu.memory_space<vmem>>, vector<2x128xf32>
    %cst_42 = arith.constant dense<0.000000e+00> : vector<2x128xf32>
    %95 = tpu.matmul %92, %8, %cst_42 {dimension_numbers = #tpu.dot_dimension_numbers<[1], [0], [0], [1], [0, 0, 1, 1], [], []>} : vector<2x32xf32>, vector<32x128xf32>, vector<2x128xf32> -> vector<2x128xf32>
    %96 = arith.addf %94, %95 : vector<2x128xf32>
    %97 = arith.negf %96 : vector<2x128xf32>
    %98 = math.exp %97 : vector<2x128xf32>
    %cst_43 = arith.constant 1.000000e+00 : f32
    %99 = vector.broadcast %cst_43 : f32 to vector<2x128xf32>
    %100 = arith.addf %99, %98 : vector<2x128xf32>
    %101 = arith.divf %99, %100 : vector<2x128xf32>
    %102 = math.tanh %96 : vector<2x128xf32>
    %103 = vector.extract_strided_slice %101 {offsets = [0, 32], sizes = [2, 32], strides = [1, 1]} : vector<2x128xf32> to vector<2x32xf32>
    %104 = arith.mulf %103, %89 : vector<2x32xf32>
    %105 = vector.extract_strided_slice %101 {offsets = [0, 0], sizes = [2, 32], strides = [1, 1]} : vector<2x128xf32> to vector<2x32xf32>
    %106 = vector.extract_strided_slice %102 {offsets = [0, 64], sizes = [2, 32], strides = [1, 1]} : vector<2x128xf32> to vector<2x32xf32>
    %107 = arith.mulf %105, %106 : vector<2x32xf32>
    %108 = arith.addf %104, %107 : vector<2x32xf32>
    %109 = vector.extract_strided_slice %101 {offsets = [0, 96], sizes = [2, 32], strides = [1, 1]} : vector<2x128xf32> to vector<2x32xf32>
    %110 = math.tanh %108 : vector<2x32xf32>
    %111 = arith.mulf %109, %110 : vector<2x32xf32>
    %c8_44 = arith.constant 8 : index
    %c0_45 = arith.constant 0 : index
    %112 = vector.load %arg24[%c8_44, %c0_45] : memref<16x32xf32, #tpu.memory_space<vmem>>, vector<2x32xf32>
    tpu.vector_store %arg24[%c8_44, %c0_45], %111 {strides = array<i32>} : memref<16x32xf32, #tpu.memory_space<vmem>>, vector<2x32xf32>,
    %c10 = arith.constant 10 : index
    %c0_46 = arith.constant 0 : index
    %113 = vector.load %arg25[%c10, %c0_46] : memref<16x128xf32, #tpu.memory_space<vmem>>, vector<2x128xf32>
    %cst_47 = arith.constant dense<0.000000e+00> : vector<2x128xf32>
    %114 = tpu.matmul %111, %8, %cst_47 {dimension_numbers = #tpu.dot_dimension_numbers<[1], [0], [0], [1], [0, 0, 1, 1], [], []>} : vector<2x32xf32>, vector<32x128xf32>, vector<2x128xf32> -> vector<2x128xf32>
    %115 = arith.addf %113, %114 : vector<2x128xf32>
    %116 = arith.negf %115 : vector<2x128xf32>
    %117 = math.exp %116 : vector<2x128xf32>
    %cst_48 = arith.constant 1.000000e+00 : f32
    %118 = vector.broadcast %cst_48 : f32 to vector<2x128xf32>
    %119 = arith.addf %118, %117 : vector<2x128xf32>
    %120 = arith.divf %118, %119 : vector<2x128xf32>
    %121 = math.tanh %115 : vector<2x128xf32>
    %122 = vector.extract_strided_slice %120 {offsets = [0, 32], sizes = [2, 32], strides = [1, 1]} : vector<2x128xf32> to vector<2x32xf32>
    %123 = arith.mulf %122, %108 : vector<2x32xf32>
    %124 = vector.extract_strided_slice %120 {offsets = [0, 0], sizes = [2, 32], strides = [1, 1]} : vector<2x128xf32> to vector<2x32xf32>
    %125 = vector.extract_strided_slice %121 {offsets = [0, 64], sizes = [2, 32], strides = [1, 1]} : vector<2x128xf32> to vector<2x32xf32>
    %126 = arith.mulf %124, %125 : vector<2x32xf32>
    %127 = arith.addf %123, %126 : vector<2x32xf32>
    %128 = vector.extract_strided_slice %120 {offsets = [0, 96], sizes = [2, 32], strides = [1, 1]} : vector<2x128xf32> to vector<2x32xf32>
    %129 = math.tanh %127 : vector<2x32xf32>
    %130 = arith.mulf %128, %129 : vector<2x32xf32>
    %c10_49 = arith.constant 10 : index
    %c0_50 = arith.constant 0 : index
    %131 = vector.load %arg24[%c10_49, %c0_50] : memref<16x32xf32, #tpu.memory_space<vmem>>, vector<2x32xf32>
    tpu.vector_store %arg24[%c10_49, %c0_50], %130 {strides = array<i32>} : memref<16x32xf32, #tpu.memory_space<vmem>>, vector<2x32xf32>,
    %c12 = arith.constant 12 : index
    %c0_51 = arith.constant 0 : index
    %132 = vector.load %arg25[%c12, %c0_51] : memref<16x128xf32, #tpu.memory_space<vmem>>, vector<2x128xf32>
    %cst_52 = arith.constant dense<0.000000e+00> : vector<2x128xf32>
    %133 = tpu.matmul %130, %8, %cst_52 {dimension_numbers = #tpu.dot_dimension_numbers<[1], [0], [0], [1], [0, 0, 1, 1], [], []>} : vector<2x32xf32>, vector<32x128xf32>, vector<2x128xf32> -> vector<2x128xf32>
    %134 = arith.addf %132, %133 : vector<2x128xf32>
    %135 = arith.negf %134 : vector<2x128xf32>
    %136 = math.exp %135 : vector<2x128xf32>
    %cst_53 = arith.constant 1.000000e+00 : f32
    %137 = vector.broadcast %cst_53 : f32 to vector<2x128xf32>
    %138 = arith.addf %137, %136 : vector<2x128xf32>
    %139 = arith.divf %137, %138 : vector<2x128xf32>
    %140 = math.tanh %134 : vector<2x128xf32>
    %141 = vector.extract_strided_slice %139 {offsets = [0, 32], sizes = [2, 32], strides = [1, 1]} : vector<2x128xf32> to vector<2x32xf32>
    %142 = arith.mulf %141, %127 : vector<2x32xf32>
    %143 = vector.extract_strided_slice %139 {offsets = [0, 0], sizes = [2, 32], strides = [1, 1]} : vector<2x128xf32> to vector<2x32xf32>
    %144 = vector.extract_strided_slice %140 {offsets = [0, 64], sizes = [2, 32], strides = [1, 1]} : vector<2x128xf32> to vector<2x32xf32>
    %145 = arith.mulf %143, %144 : vector<2x32xf32>
    %146 = arith.addf %142, %145 : vector<2x32xf32>
    %147 = vector.extract_strided_slice %139 {offsets = [0, 96], sizes = [2, 32], strides = [1, 1]} : vector<2x128xf32> to vector<2x32xf32>
    %148 = math.tanh %146 : vector<2x32xf32>
    %149 = arith.mulf %147, %148 : vector<2x32xf32>
    %c12_54 = arith.constant 12 : index
    %c0_55 = arith.constant 0 : index
    %150 = vector.load %arg24[%c12_54, %c0_55] : memref<16x32xf32, #tpu.memory_space<vmem>>, vector<2x32xf32>
    tpu.vector_store %arg24[%c12_54, %c0_55], %149 {strides = array<i32>} : memref<16x32xf32, #tpu.memory_space<vmem>>, vector<2x32xf32>,
    %c14 = arith.constant 14 : index
    %c0_56 = arith.constant 0 : index
    %151 = vector.load %arg25[%c14, %c0_56] : memref<16x128xf32, #tpu.memory_space<vmem>>, vector<2x128xf32>
    %cst_57 = arith.constant dense<0.000000e+00> : vector<2x128xf32>
    %152 = tpu.matmul %149, %8, %cst_57 {dimension_numbers = #tpu.dot_dimension_numbers<[1], [0], [0], [1], [0, 0, 1, 1], [], []>} : vector<2x32xf32>, vector<32x128xf32>, vector<2x128xf32> -> vector<2x128xf32>
    %153 = arith.addf %151, %152 : vector<2x128xf32>
    %154 = arith.negf %153 : vector<2x128xf32>
    %155 = math.exp %154 : vector<2x128xf32>
    %cst_58 = arith.constant 1.000000e+00 : f32
    %156 = vector.broadcast %cst_58 : f32 to vector<2x128xf32>
    %157 = arith.addf %156, %155 : vector<2x128xf32>
    %158 = arith.divf %156, %157 : vector<2x128xf32>
    %159 = math.tanh %153 : vector<2x128xf32>
    %160 = vector.extract_strided_slice %158 {offsets = [0, 32], sizes = [2, 32], strides = [1, 1]} : vector<2x128xf32> to vector<2x32xf32>
    %161 = arith.mulf %160, %146 : vector<2x32xf32>
    %162 = vector.extract_strided_slice %158 {offsets = [0, 0], sizes = [2, 32], strides = [1, 1]} : vector<2x128xf32> to vector<2x32xf32>
    %163 = vector.extract_strided_slice %159 {offsets = [0, 64], sizes = [2, 32], strides = [1, 1]} : vector<2x128xf32> to vector<2x32xf32>
    %164 = arith.mulf %162, %163 : vector<2x32xf32>
    %165 = arith.addf %161, %164 : vector<2x32xf32>
    %166 = vector.extract_strided_slice %158 {offsets = [0, 96], sizes = [2, 32], strides = [1, 1]} : vector<2x128xf32> to vector<2x32xf32>
    %167 = math.tanh %165 : vector<2x32xf32>
    %168 = arith.mulf %166, %167 : vector<2x32xf32>
    %c14_59 = arith.constant 14 : index
    %c0_60 = arith.constant 0 : index
    %169 = vector.load %arg24[%c14_59, %c0_60] : memref<16x32xf32, #tpu.memory_space<vmem>>, vector<2x32xf32>
    tpu.vector_store %arg24[%c14_59, %c0_60], %168 {strides = array<i32>} : memref<16x32xf32, #tpu.memory_space<vmem>>, vector<2x32xf32>,
    %c0_61 = arith.constant 0 : index
    %c0_62 = arith.constant 0 : index
    %170 = vector.load %arg7[%c0_61, %c0_62] : memref<32x128xf32, #tpu.memory_space<vmem>>, vector<32x128xf32>
    %c0_63 = arith.constant 0 : index
    %c0_64 = arith.constant 0 : index
    %171 = vector.load %arg24[%c0_63, %c0_64] : memref<16x32xf32, #tpu.memory_space<vmem>>, vector<16x32xf32>
    %c0_65 = arith.constant 0 : index
    %c0_66 = arith.constant 0 : index
    %172 = vector.load %arg6[%c0_65, %c0_66] : memref<32x128xf32, #tpu.memory_space<vmem>>, vector<32x128xf32>
    %cst_67 = arith.constant dense<0.000000e+00> : vector<16x128xf32>
    %173 = tpu.matmul %171, %172, %cst_67 {dimension_numbers = #tpu.dot_dimension_numbers<[1], [0], [0], [1], [0, 0, 1, 1], [], []>} : vector<16x32xf32>, vector<32x128xf32>, vector<16x128xf32> -> vector<16x128xf32>
    %c0_68 = arith.constant 0 : index
    %c0_69 = arith.constant 0 : index
    %174 = vector.load %arg8[%c0_68, %c0_69] : memref<1x128xf32, #tpu.memory_space<vmem>>, vector<1x128xf32>
    %175 = vector.broadcast %174 : vector<1x128xf32> to vector<16x128xf32>
    %176 = arith.addf %173, %175 : vector<16x128xf32>
    %c0_70 = arith.constant 0 : index
    %c0_71 = arith.constant 0 : index
    %177 = vector.load %arg25[%c0_70, %c0_71] : memref<16x128xf32, #tpu.memory_space<vmem>>, vector<16x128xf32>
    tpu.vector_store %arg25[%c0_70, %c0_71], %176 {strides = array<i32>} : memref<16x128xf32, #tpu.memory_space<vmem>>, vector<16x128xf32>,
    %cst_72 = arith.constant 0.000000e+00 : f32
    %178 = vector.broadcast %cst_72 : f32 to vector<2x32xf32>
    %cst_73 = arith.constant 0.000000e+00 : f32
    %179 = vector.broadcast %cst_73 : f32 to vector<2x32xf32>
    %c0_74 = arith.constant 0 : index
    %c0_75 = arith.constant 0 : index
    %180 = vector.load %arg25[%c0_74, %c0_75] : memref<16x128xf32, #tpu.memory_space<vmem>>, vector<2x128xf32>
    %cst_76 = arith.constant dense<0.000000e+00> : vector<2x128xf32>
    %181 = tpu.matmul %178, %170, %cst_76 {dimension_numbers = #tpu.dot_dimension_numbers<[1], [0], [0], [1], [0, 0, 1, 1], [], []>} : vector<2x32xf32>, vector<32x128xf32>, vector<2x128xf32> -> vector<2x128xf32>
    %182 = arith.addf %180, %181 : vector<2x128xf32>
    %183 = arith.negf %182 : vector<2x128xf32>
    %184 = math.exp %183 : vector<2x128xf32>
    %cst_77 = arith.constant 1.000000e+00 : f32
    %185 = vector.broadcast %cst_77 : f32 to vector<2x128xf32>
    %186 = arith.addf %185, %184 : vector<2x128xf32>
    %187 = arith.divf %185, %186 : vector<2x128xf32>
    %188 = math.tanh %182 : vector<2x128xf32>
    %189 = vector.extract_strided_slice %187 {offsets = [0, 32], sizes = [2, 32], strides = [1, 1]} : vector<2x128xf32> to vector<2x32xf32>
    %190 = arith.mulf %189, %179 : vector<2x32xf32>
    %191 = vector.extract_strided_slice %187 {offsets = [0, 0], sizes = [2, 32], strides = [1, 1]} : vector<2x128xf32> to vector<2x32xf32>
    %192 = vector.extract_strided_slice %188 {offsets = [0, 64], sizes = [2, 32], strides = [1, 1]} : vector<2x128xf32> to vector<2x32xf32>
    %193 = arith.mulf %191, %192 : vector<2x32xf32>
    %194 = arith.addf %190, %193 : vector<2x32xf32>
    %195 = vector.extract_strided_slice %187 {offsets = [0, 96], sizes = [2, 32], strides = [1, 1]} : vector<2x128xf32> to vector<2x32xf32>
    %196 = math.tanh %194 : vector<2x32xf32>
    %197 = arith.mulf %195, %196 : vector<2x32xf32>
    %c0_78 = arith.constant 0 : index
    %c0_79 = arith.constant 0 : index
    %198 = vector.load %arg24[%c0_78, %c0_79] : memref<16x32xf32, #tpu.memory_space<vmem>>, vector<2x32xf32>
    tpu.vector_store %arg24[%c0_78, %c0_79], %197 {strides = array<i32>} : memref<16x32xf32, #tpu.memory_space<vmem>>, vector<2x32xf32>,
    %c2_80 = arith.constant 2 : index
    %c0_81 = arith.constant 0 : index
    %199 = vector.load %arg25[%c2_80, %c0_81] : memref<16x128xf32, #tpu.memory_space<vmem>>, vector<2x128xf32>
    %cst_82 = arith.constant dense<0.000000e+00> : vector<2x128xf32>
    %200 = tpu.matmul %197, %170, %cst_82 {dimension_numbers = #tpu.dot_dimension_numbers<[1], [0], [0], [1], [0, 0, 1, 1], [], []>} : vector<2x32xf32>, vector<32x128xf32>, vector<2x128xf32> -> vector<2x128xf32>
    %201 = arith.addf %199, %200 : vector<2x128xf32>
    %202 = arith.negf %201 : vector<2x128xf32>
    %203 = math.exp %202 : vector<2x128xf32>
    %cst_83 = arith.constant 1.000000e+00 : f32
    %204 = vector.broadcast %cst_83 : f32 to vector<2x128xf32>
    %205 = arith.addf %204, %203 : vector<2x128xf32>
    %206 = arith.divf %204, %205 : vector<2x128xf32>
    %207 = math.tanh %201 : vector<2x128xf32>
    %208 = vector.extract_strided_slice %206 {offsets = [0, 32], sizes = [2, 32], strides = [1, 1]} : vector<2x128xf32> to vector<2x32xf32>
    %209 = arith.mulf %208, %194 : vector<2x32xf32>
    %210 = vector.extract_strided_slice %206 {offsets = [0, 0], sizes = [2, 32], strides = [1, 1]} : vector<2x128xf32> to vector<2x32xf32>
    %211 = vector.extract_strided_slice %207 {offsets = [0, 64], sizes = [2, 32], strides = [1, 1]} : vector<2x128xf32> to vector<2x32xf32>
    %212 = arith.mulf %210, %211 : vector<2x32xf32>
    %213 = arith.addf %209, %212 : vector<2x32xf32>
    %214 = vector.extract_strided_slice %206 {offsets = [0, 96], sizes = [2, 32], strides = [1, 1]} : vector<2x128xf32> to vector<2x32xf32>
    %215 = math.tanh %213 : vector<2x32xf32>
    %216 = arith.mulf %214, %215 : vector<2x32xf32>
    %c2_84 = arith.constant 2 : index
    %c0_85 = arith.constant 0 : index
    %217 = vector.load %arg24[%c2_84, %c0_85] : memref<16x32xf32, #tpu.memory_space<vmem>>, vector<2x32xf32>
    tpu.vector_store %arg24[%c2_84, %c0_85], %216 {strides = array<i32>} : memref<16x32xf32, #tpu.memory_space<vmem>>, vector<2x32xf32>,
    %c4_86 = arith.constant 4 : index
    %c0_87 = arith.constant 0 : index
    %218 = vector.load %arg25[%c4_86, %c0_87] : memref<16x128xf32, #tpu.memory_space<vmem>>, vector<2x128xf32>
    %cst_88 = arith.constant dense<0.000000e+00> : vector<2x128xf32>
    %219 = tpu.matmul %216, %170, %cst_88 {dimension_numbers = #tpu.dot_dimension_numbers<[1], [0], [0], [1], [0, 0, 1, 1], [], []>} : vector<2x32xf32>, vector<32x128xf32>, vector<2x128xf32> -> vector<2x128xf32>
    %220 = arith.addf %218, %219 : vector<2x128xf32>
    %221 = arith.negf %220 : vector<2x128xf32>
    %222 = math.exp %221 : vector<2x128xf32>
    %cst_89 = arith.constant 1.000000e+00 : f32
    %223 = vector.broadcast %cst_89 : f32 to vector<2x128xf32>
    %224 = arith.addf %223, %222 : vector<2x128xf32>
    %225 = arith.divf %223, %224 : vector<2x128xf32>
    %226 = math.tanh %220 : vector<2x128xf32>
    %227 = vector.extract_strided_slice %225 {offsets = [0, 32], sizes = [2, 32], strides = [1, 1]} : vector<2x128xf32> to vector<2x32xf32>
    %228 = arith.mulf %227, %213 : vector<2x32xf32>
    %229 = vector.extract_strided_slice %225 {offsets = [0, 0], sizes = [2, 32], strides = [1, 1]} : vector<2x128xf32> to vector<2x32xf32>
    %230 = vector.extract_strided_slice %226 {offsets = [0, 64], sizes = [2, 32], strides = [1, 1]} : vector<2x128xf32> to vector<2x32xf32>
    %231 = arith.mulf %229, %230 : vector<2x32xf32>
    %232 = arith.addf %228, %231 : vector<2x32xf32>
    %233 = vector.extract_strided_slice %225 {offsets = [0, 96], sizes = [2, 32], strides = [1, 1]} : vector<2x128xf32> to vector<2x32xf32>
    %234 = math.tanh %232 : vector<2x32xf32>
    %235 = arith.mulf %233, %234 : vector<2x32xf32>
    %c4_90 = arith.constant 4 : index
    %c0_91 = arith.constant 0 : index
    %236 = vector.load %arg24[%c4_90, %c0_91] : memref<16x32xf32, #tpu.memory_space<vmem>>, vector<2x32xf32>
    tpu.vector_store %arg24[%c4_90, %c0_91], %235 {strides = array<i32>} : memref<16x32xf32, #tpu.memory_space<vmem>>, vector<2x32xf32>,
    %c6_92 = arith.constant 6 : index
    %c0_93 = arith.constant 0 : index
    %237 = vector.load %arg25[%c6_92, %c0_93] : memref<16x128xf32, #tpu.memory_space<vmem>>, vector<2x128xf32>
    %cst_94 = arith.constant dense<0.000000e+00> : vector<2x128xf32>
    %238 = tpu.matmul %235, %170, %cst_94 {dimension_numbers = #tpu.dot_dimension_numbers<[1], [0], [0], [1], [0, 0, 1, 1], [], []>} : vector<2x32xf32>, vector<32x128xf32>, vector<2x128xf32> -> vector<2x128xf32>
    %239 = arith.addf %237, %238 : vector<2x128xf32>
    %240 = arith.negf %239 : vector<2x128xf32>
    %241 = math.exp %240 : vector<2x128xf32>
    %cst_95 = arith.constant 1.000000e+00 : f32
    %242 = vector.broadcast %cst_95 : f32 to vector<2x128xf32>
    %243 = arith.addf %242, %241 : vector<2x128xf32>
    %244 = arith.divf %242, %243 : vector<2x128xf32>
    %245 = math.tanh %239 : vector<2x128xf32>
    %246 = vector.extract_strided_slice %244 {offsets = [0, 32], sizes = [2, 32], strides = [1, 1]} : vector<2x128xf32> to vector<2x32xf32>
    %247 = arith.mulf %246, %232 : vector<2x32xf32>
    %248 = vector.extract_strided_slice %244 {offsets = [0, 0], sizes = [2, 32], strides = [1, 1]} : vector<2x128xf32> to vector<2x32xf32>
    %249 = vector.extract_strided_slice %245 {offsets = [0, 64], sizes = [2, 32], strides = [1, 1]} : vector<2x128xf32> to vector<2x32xf32>
    %250 = arith.mulf %248, %249 : vector<2x32xf32>
    %251 = arith.addf %247, %250 : vector<2x32xf32>
    %252 = vector.extract_strided_slice %244 {offsets = [0, 96], sizes = [2, 32], strides = [1, 1]} : vector<2x128xf32> to vector<2x32xf32>
    %253 = math.tanh %251 : vector<2x32xf32>
    %254 = arith.mulf %252, %253 : vector<2x32xf32>
    %c6_96 = arith.constant 6 : index
    %c0_97 = arith.constant 0 : index
    %255 = vector.load %arg24[%c6_96, %c0_97] : memref<16x32xf32, #tpu.memory_space<vmem>>, vector<2x32xf32>
    tpu.vector_store %arg24[%c6_96, %c0_97], %254 {strides = array<i32>} : memref<16x32xf32, #tpu.memory_space<vmem>>, vector<2x32xf32>,
    %c8_98 = arith.constant 8 : index
    %c0_99 = arith.constant 0 : index
    %256 = vector.load %arg25[%c8_98, %c0_99] : memref<16x128xf32, #tpu.memory_space<vmem>>, vector<2x128xf32>
    %cst_100 = arith.constant dense<0.000000e+00> : vector<2x128xf32>
    %257 = tpu.matmul %254, %170, %cst_100 {dimension_numbers = #tpu.dot_dimension_numbers<[1], [0], [0], [1], [0, 0, 1, 1], [], []>} : vector<2x32xf32>, vector<32x128xf32>, vector<2x128xf32> -> vector<2x128xf32>
    %258 = arith.addf %256, %257 : vector<2x128xf32>
    %259 = arith.negf %258 : vector<2x128xf32>
    %260 = math.exp %259 : vector<2x128xf32>
    %cst_101 = arith.constant 1.000000e+00 : f32
    %261 = vector.broadcast %cst_101 : f32 to vector<2x128xf32>
    %262 = arith.addf %261, %260 : vector<2x128xf32>
    %263 = arith.divf %261, %262 : vector<2x128xf32>
    %264 = math.tanh %258 : vector<2x128xf32>
    %265 = vector.extract_strided_slice %263 {offsets = [0, 32], sizes = [2, 32], strides = [1, 1]} : vector<2x128xf32> to vector<2x32xf32>
    %266 = arith.mulf %265, %251 : vector<2x32xf32>
    %267 = vector.extract_strided_slice %263 {offsets = [0, 0], sizes = [2, 32], strides = [1, 1]} : vector<2x128xf32> to vector<2x32xf32>
    %268 = vector.extract_strided_slice %264 {offsets = [0, 64], sizes = [2, 32], strides = [1, 1]} : vector<2x128xf32> to vector<2x32xf32>
    %269 = arith.mulf %267, %268 : vector<2x32xf32>
    %270 = arith.addf %266, %269 : vector<2x32xf32>
    %271 = vector.extract_strided_slice %263 {offsets = [0, 96], sizes = [2, 32], strides = [1, 1]} : vector<2x128xf32> to vector<2x32xf32>
    %272 = math.tanh %270 : vector<2x32xf32>
    %273 = arith.mulf %271, %272 : vector<2x32xf32>
    %c8_102 = arith.constant 8 : index
    %c0_103 = arith.constant 0 : index
    %274 = vector.load %arg24[%c8_102, %c0_103] : memref<16x32xf32, #tpu.memory_space<vmem>>, vector<2x32xf32>
    tpu.vector_store %arg24[%c8_102, %c0_103], %273 {strides = array<i32>} : memref<16x32xf32, #tpu.memory_space<vmem>>, vector<2x32xf32>,
    %c10_104 = arith.constant 10 : index
    %c0_105 = arith.constant 0 : index
    %275 = vector.load %arg25[%c10_104, %c0_105] : memref<16x128xf32, #tpu.memory_space<vmem>>, vector<2x128xf32>
    %cst_106 = arith.constant dense<0.000000e+00> : vector<2x128xf32>
    %276 = tpu.matmul %273, %170, %cst_106 {dimension_numbers = #tpu.dot_dimension_numbers<[1], [0], [0], [1], [0, 0, 1, 1], [], []>} : vector<2x32xf32>, vector<32x128xf32>, vector<2x128xf32> -> vector<2x128xf32>
    %277 = arith.addf %275, %276 : vector<2x128xf32>
    %278 = arith.negf %277 : vector<2x128xf32>
    %279 = math.exp %278 : vector<2x128xf32>
    %cst_107 = arith.constant 1.000000e+00 : f32
    %280 = vector.broadcast %cst_107 : f32 to vector<2x128xf32>
    %281 = arith.addf %280, %279 : vector<2x128xf32>
    %282 = arith.divf %280, %281 : vector<2x128xf32>
    %283 = math.tanh %277 : vector<2x128xf32>
    %284 = vector.extract_strided_slice %282 {offsets = [0, 32], sizes = [2, 32], strides = [1, 1]} : vector<2x128xf32> to vector<2x32xf32>
    %285 = arith.mulf %284, %270 : vector<2x32xf32>
    %286 = vector.extract_strided_slice %282 {offsets = [0, 0], sizes = [2, 32], strides = [1, 1]} : vector<2x128xf32> to vector<2x32xf32>
    %287 = vector.extract_strided_slice %283 {offsets = [0, 64], sizes = [2, 32], strides = [1, 1]} : vector<2x128xf32> to vector<2x32xf32>
    %288 = arith.mulf %286, %287 : vector<2x32xf32>
    %289 = arith.addf %285, %288 : vector<2x32xf32>
    %290 = vector.extract_strided_slice %282 {offsets = [0, 96], sizes = [2, 32], strides = [1, 1]} : vector<2x128xf32> to vector<2x32xf32>
    %291 = math.tanh %289 : vector<2x32xf32>
    %292 = arith.mulf %290, %291 : vector<2x32xf32>
    %c10_108 = arith.constant 10 : index
    %c0_109 = arith.constant 0 : index
    %293 = vector.load %arg24[%c10_108, %c0_109] : memref<16x32xf32, #tpu.memory_space<vmem>>, vector<2x32xf32>
    tpu.vector_store %arg24[%c10_108, %c0_109], %292 {strides = array<i32>} : memref<16x32xf32, #tpu.memory_space<vmem>>, vector<2x32xf32>,
    %c12_110 = arith.constant 12 : index
    %c0_111 = arith.constant 0 : index
    %294 = vector.load %arg25[%c12_110, %c0_111] : memref<16x128xf32, #tpu.memory_space<vmem>>, vector<2x128xf32>
    %cst_112 = arith.constant dense<0.000000e+00> : vector<2x128xf32>
    %295 = tpu.matmul %292, %170, %cst_112 {dimension_numbers = #tpu.dot_dimension_numbers<[1], [0], [0], [1], [0, 0, 1, 1], [], []>} : vector<2x32xf32>, vector<32x128xf32>, vector<2x128xf32> -> vector<2x128xf32>
    %296 = arith.addf %294, %295 : vector<2x128xf32>
    %297 = arith.negf %296 : vector<2x128xf32>
    %298 = math.exp %297 : vector<2x128xf32>
    %cst_113 = arith.constant 1.000000e+00 : f32
    %299 = vector.broadcast %cst_113 : f32 to vector<2x128xf32>
    %300 = arith.addf %299, %298 : vector<2x128xf32>
    %301 = arith.divf %299, %300 : vector<2x128xf32>
    %302 = math.tanh %296 : vector<2x128xf32>
    %303 = vector.extract_strided_slice %301 {offsets = [0, 32], sizes = [2, 32], strides = [1, 1]} : vector<2x128xf32> to vector<2x32xf32>
    %304 = arith.mulf %303, %289 : vector<2x32xf32>
    %305 = vector.extract_strided_slice %301 {offsets = [0, 0], sizes = [2, 32], strides = [1, 1]} : vector<2x128xf32> to vector<2x32xf32>
    %306 = vector.extract_strided_slice %302 {offsets = [0, 64], sizes = [2, 32], strides = [1, 1]} : vector<2x128xf32> to vector<2x32xf32>
    %307 = arith.mulf %305, %306 : vector<2x32xf32>
    %308 = arith.addf %304, %307 : vector<2x32xf32>
    %309 = vector.extract_strided_slice %301 {offsets = [0, 96], sizes = [2, 32], strides = [1, 1]} : vector<2x128xf32> to vector<2x32xf32>
    %310 = math.tanh %308 : vector<2x32xf32>
    %311 = arith.mulf %309, %310 : vector<2x32xf32>
    %c12_114 = arith.constant 12 : index
    %c0_115 = arith.constant 0 : index
    %312 = vector.load %arg24[%c12_114, %c0_115] : memref<16x32xf32, #tpu.memory_space<vmem>>, vector<2x32xf32>
    tpu.vector_store %arg24[%c12_114, %c0_115], %311 {strides = array<i32>} : memref<16x32xf32, #tpu.memory_space<vmem>>, vector<2x32xf32>,
    %c14_116 = arith.constant 14 : index
    %c0_117 = arith.constant 0 : index
    %313 = vector.load %arg25[%c14_116, %c0_117] : memref<16x128xf32, #tpu.memory_space<vmem>>, vector<2x128xf32>
    %cst_118 = arith.constant dense<0.000000e+00> : vector<2x128xf32>
    %314 = tpu.matmul %311, %170, %cst_118 {dimension_numbers = #tpu.dot_dimension_numbers<[1], [0], [0], [1], [0, 0, 1, 1], [], []>} : vector<2x32xf32>, vector<32x128xf32>, vector<2x128xf32> -> vector<2x128xf32>
    %315 = arith.addf %313, %314 : vector<2x128xf32>
    %316 = arith.negf %315 : vector<2x128xf32>
    %317 = math.exp %316 : vector<2x128xf32>
    %cst_119 = arith.constant 1.000000e+00 : f32
    %318 = vector.broadcast %cst_119 : f32 to vector<2x128xf32>
    %319 = arith.addf %318, %317 : vector<2x128xf32>
    %320 = arith.divf %318, %319 : vector<2x128xf32>
    %321 = math.tanh %315 : vector<2x128xf32>
    %322 = vector.extract_strided_slice %320 {offsets = [0, 32], sizes = [2, 32], strides = [1, 1]} : vector<2x128xf32> to vector<2x32xf32>
    %323 = arith.mulf %322, %308 : vector<2x32xf32>
    %324 = vector.extract_strided_slice %320 {offsets = [0, 0], sizes = [2, 32], strides = [1, 1]} : vector<2x128xf32> to vector<2x32xf32>
    %325 = vector.extract_strided_slice %321 {offsets = [0, 64], sizes = [2, 32], strides = [1, 1]} : vector<2x128xf32> to vector<2x32xf32>
    %326 = arith.mulf %324, %325 : vector<2x32xf32>
    %327 = arith.addf %323, %326 : vector<2x32xf32>
    %328 = vector.extract_strided_slice %320 {offsets = [0, 96], sizes = [2, 32], strides = [1, 1]} : vector<2x128xf32> to vector<2x32xf32>
    %329 = math.tanh %327 : vector<2x32xf32>
    %330 = arith.mulf %328, %329 : vector<2x32xf32>
    %c14_120 = arith.constant 14 : index
    %c0_121 = arith.constant 0 : index
    %331 = vector.load %arg24[%c14_120, %c0_121] : memref<16x32xf32, #tpu.memory_space<vmem>>, vector<2x32xf32>
    tpu.vector_store %arg24[%c14_120, %c0_121], %330 {strides = array<i32>} : memref<16x32xf32, #tpu.memory_space<vmem>>, vector<2x32xf32>,
    %c0_122 = arith.constant 0 : index
    %c0_123 = arith.constant 0 : index
    %332 = vector.load %arg24[%c0_122, %c0_123] : memref<16x32xf32, #tpu.memory_space<vmem>>, vector<16x32xf32>
    %c0_124 = arith.constant 0 : index
    %c0_125 = arith.constant 0 : index
    %333 = vector.load %arg9[%c0_124, %c0_125] : memref<32x8xf32, #tpu.memory_space<vmem>>, vector<32x8xf32>
    %cst_126 = arith.constant dense<0.000000e+00> : vector<16x8xf32>
    %334 = tpu.matmul %332, %333, %cst_126 {dimension_numbers = #tpu.dot_dimension_numbers<[1], [0], [0], [1], [0, 0, 1, 1], [], []>} : vector<16x32xf32>, vector<32x8xf32>, vector<16x8xf32> -> vector<16x8xf32>
    %c0_127 = arith.constant 0 : index
    %c0_128 = arith.constant 0 : index
    %335 = vector.load %arg10[%c0_127, %c0_128] : memref<1x8xf32, #tpu.memory_space<vmem>>, vector<1x8xf32>
    %336 = vector.broadcast %335 : vector<1x8xf32> to vector<16x8xf32>
    %337 = arith.addf %334, %336 : vector<16x8xf32>
    %c0_129 = arith.constant 0 : index
    %c0_130 = arith.constant 0 : index
    %338 = vector.load %arg22[%c0_129, %c0_130] : memref<16x8xf32, #tpu.memory_space<vmem>>, vector<16x8xf32>
    tpu.vector_store %arg22[%c0_129, %c0_130], %337 {strides = array<i32>} : memref<16x8xf32, #tpu.memory_space<vmem>>, vector<16x8xf32>,
    %c0_131 = arith.constant 0 : index
    %c0_132 = arith.constant 0 : index
    %339 = vector.load %arg22[%c0_131, %c0_132] : memref<16x8xf32, #tpu.memory_space<vmem>>, vector<16x8xf32>
    %c0_133 = arith.constant 0 : index
    %c0_134 = arith.constant 0 : index
    %340 = vector.load %arg11[%c0_133, %c0_134] : memref<8x32xf32, #tpu.memory_space<vmem>>, vector<8x32xf32>
    %cst_135 = arith.constant dense<0.000000e+00> : vector<16x32xf32>
    %341 = tpu.matmul %339, %340, %cst_135 {dimension_numbers = #tpu.dot_dimension_numbers<[1], [0], [0], [1], [0, 0, 1, 1], [], []>} : vector<16x8xf32>, vector<8x32xf32>, vector<16x32xf32> -> vector<16x32xf32>
    %c0_136 = arith.constant 0 : index
    %c0_137 = arith.constant 0 : index
    %342 = vector.load %arg12[%c0_136, %c0_137] : memref<1x32xf32, #tpu.memory_space<vmem>>, vector<1x32xf32>
    %343 = vector.broadcast %342 : vector<1x32xf32> to vector<16x32xf32>
    %344 = arith.addf %341, %343 : vector<16x32xf32>
    %345 = math.tanh %344 : vector<16x32xf32>
    %c0_138 = arith.constant 0 : index
    %c0_139 = arith.constant 0 : index
    %346 = vector.load %arg23[%c0_138, %c0_139] : memref<16x32xf32, #tpu.memory_space<vmem>>, vector<16x32xf32>
    tpu.vector_store %arg23[%c0_138, %c0_139], %345 {strides = array<i32>} : memref<16x32xf32, #tpu.memory_space<vmem>>, vector<16x32xf32>,
    %c0_140 = arith.constant 0 : index
    %c0_141 = arith.constant 0 : index
    %347 = vector.load %arg14[%c0_140, %c0_141] : memref<32x128xf32, #tpu.memory_space<vmem>>, vector<32x128xf32>
    %c0_142 = arith.constant 0 : index
    %c0_143 = arith.constant 0 : index
    %348 = vector.load %arg23[%c0_142, %c0_143] : memref<16x32xf32, #tpu.memory_space<vmem>>, vector<16x32xf32>
    %c0_144 = arith.constant 0 : index
    %c0_145 = arith.constant 0 : index
    %349 = vector.load %arg13[%c0_144, %c0_145] : memref<32x128xf32, #tpu.memory_space<vmem>>, vector<32x128xf32>
    %cst_146 = arith.constant dense<0.000000e+00> : vector<16x128xf32>
    %350 = tpu.matmul %348, %349, %cst_146 {dimension_numbers = #tpu.dot_dimension_numbers<[1], [0], [0], [1], [0, 0, 1, 1], [], []>} : vector<16x32xf32>, vector<32x128xf32>, vector<16x128xf32> -> vector<16x128xf32>
    %c0_147 = arith.constant 0 : index
    %c0_148 = arith.constant 0 : index
    %351 = vector.load %arg15[%c0_147, %c0_148] : memref<1x128xf32, #tpu.memory_space<vmem>>, vector<1x128xf32>
    %352 = vector.broadcast %351 : vector<1x128xf32> to vector<16x128xf32>
    %353 = arith.addf %350, %352 : vector<16x128xf32>
    %c0_149 = arith.constant 0 : index
    %c0_150 = arith.constant 0 : index
    %354 = vector.load %arg25[%c0_149, %c0_150] : memref<16x128xf32, #tpu.memory_space<vmem>>, vector<16x128xf32>
    tpu.vector_store %arg25[%c0_149, %c0_150], %353 {strides = array<i32>} : memref<16x128xf32, #tpu.memory_space<vmem>>, vector<16x128xf32>,
    %cst_151 = arith.constant 0.000000e+00 : f32
    %355 = vector.broadcast %cst_151 : f32 to vector<2x32xf32>
    %cst_152 = arith.constant 0.000000e+00 : f32
    %356 = vector.broadcast %cst_152 : f32 to vector<2x32xf32>
    %c0_153 = arith.constant 0 : index
    %c0_154 = arith.constant 0 : index
    %357 = vector.load %arg25[%c0_153, %c0_154] : memref<16x128xf32, #tpu.memory_space<vmem>>, vector<2x128xf32>
    %cst_155 = arith.constant dense<0.000000e+00> : vector<2x128xf32>
    %358 = tpu.matmul %355, %347, %cst_155 {dimension_numbers = #tpu.dot_dimension_numbers<[1], [0], [0], [1], [0, 0, 1, 1], [], []>} : vector<2x32xf32>, vector<32x128xf32>, vector<2x128xf32> -> vector<2x128xf32>
    %359 = arith.addf %357, %358 : vector<2x128xf32>
    %360 = arith.negf %359 : vector<2x128xf32>
    %361 = math.exp %360 : vector<2x128xf32>
    %cst_156 = arith.constant 1.000000e+00 : f32
    %362 = vector.broadcast %cst_156 : f32 to vector<2x128xf32>
    %363 = arith.addf %362, %361 : vector<2x128xf32>
    %364 = arith.divf %362, %363 : vector<2x128xf32>
    %365 = math.tanh %359 : vector<2x128xf32>
    %366 = vector.extract_strided_slice %364 {offsets = [0, 32], sizes = [2, 32], strides = [1, 1]} : vector<2x128xf32> to vector<2x32xf32>
    %367 = arith.mulf %366, %356 : vector<2x32xf32>
    %368 = vector.extract_strided_slice %364 {offsets = [0, 0], sizes = [2, 32], strides = [1, 1]} : vector<2x128xf32> to vector<2x32xf32>
    %369 = vector.extract_strided_slice %365 {offsets = [0, 64], sizes = [2, 32], strides = [1, 1]} : vector<2x128xf32> to vector<2x32xf32>
    %370 = arith.mulf %368, %369 : vector<2x32xf32>
    %371 = arith.addf %367, %370 : vector<2x32xf32>
    %372 = vector.extract_strided_slice %364 {offsets = [0, 96], sizes = [2, 32], strides = [1, 1]} : vector<2x128xf32> to vector<2x32xf32>
    %373 = math.tanh %371 : vector<2x32xf32>
    %374 = arith.mulf %372, %373 : vector<2x32xf32>
    %c0_157 = arith.constant 0 : index
    %c0_158 = arith.constant 0 : index
    %375 = vector.load %arg24[%c0_157, %c0_158] : memref<16x32xf32, #tpu.memory_space<vmem>>, vector<2x32xf32>
    tpu.vector_store %arg24[%c0_157, %c0_158], %374 {strides = array<i32>} : memref<16x32xf32, #tpu.memory_space<vmem>>, vector<2x32xf32>,
    %c2_159 = arith.constant 2 : index
    %c0_160 = arith.constant 0 : index
    %376 = vector.load %arg25[%c2_159, %c0_160] : memref<16x128xf32, #tpu.memory_space<vmem>>, vector<2x128xf32>
    %cst_161 = arith.constant dense<0.000000e+00> : vector<2x128xf32>
    %377 = tpu.matmul %374, %347, %cst_161 {dimension_numbers = #tpu.dot_dimension_numbers<[1], [0], [0], [1], [0, 0, 1, 1], [], []>} : vector<2x32xf32>, vector<32x128xf32>, vector<2x128xf32> -> vector<2x128xf32>
    %378 = arith.addf %376, %377 : vector<2x128xf32>
    %379 = arith.negf %378 : vector<2x128xf32>
    %380 = math.exp %379 : vector<2x128xf32>
    %cst_162 = arith.constant 1.000000e+00 : f32
    %381 = vector.broadcast %cst_162 : f32 to vector<2x128xf32>
    %382 = arith.addf %381, %380 : vector<2x128xf32>
    %383 = arith.divf %381, %382 : vector<2x128xf32>
    %384 = math.tanh %378 : vector<2x128xf32>
    %385 = vector.extract_strided_slice %383 {offsets = [0, 32], sizes = [2, 32], strides = [1, 1]} : vector<2x128xf32> to vector<2x32xf32>
    %386 = arith.mulf %385, %371 : vector<2x32xf32>
    %387 = vector.extract_strided_slice %383 {offsets = [0, 0], sizes = [2, 32], strides = [1, 1]} : vector<2x128xf32> to vector<2x32xf32>
    %388 = vector.extract_strided_slice %384 {offsets = [0, 64], sizes = [2, 32], strides = [1, 1]} : vector<2x128xf32> to vector<2x32xf32>
    %389 = arith.mulf %387, %388 : vector<2x32xf32>
    %390 = arith.addf %386, %389 : vector<2x32xf32>
    %391 = vector.extract_strided_slice %383 {offsets = [0, 96], sizes = [2, 32], strides = [1, 1]} : vector<2x128xf32> to vector<2x32xf32>
    %392 = math.tanh %390 : vector<2x32xf32>
    %393 = arith.mulf %391, %392 : vector<2x32xf32>
    %c2_163 = arith.constant 2 : index
    %c0_164 = arith.constant 0 : index
    %394 = vector.load %arg24[%c2_163, %c0_164] : memref<16x32xf32, #tpu.memory_space<vmem>>, vector<2x32xf32>
    tpu.vector_store %arg24[%c2_163, %c0_164], %393 {strides = array<i32>} : memref<16x32xf32, #tpu.memory_space<vmem>>, vector<2x32xf32>,
    %c4_165 = arith.constant 4 : index
    %c0_166 = arith.constant 0 : index
    %395 = vector.load %arg25[%c4_165, %c0_166] : memref<16x128xf32, #tpu.memory_space<vmem>>, vector<2x128xf32>
    %cst_167 = arith.constant dense<0.000000e+00> : vector<2x128xf32>
    %396 = tpu.matmul %393, %347, %cst_167 {dimension_numbers = #tpu.dot_dimension_numbers<[1], [0], [0], [1], [0, 0, 1, 1], [], []>} : vector<2x32xf32>, vector<32x128xf32>, vector<2x128xf32> -> vector<2x128xf32>
    %397 = arith.addf %395, %396 : vector<2x128xf32>
    %398 = arith.negf %397 : vector<2x128xf32>
    %399 = math.exp %398 : vector<2x128xf32>
    %cst_168 = arith.constant 1.000000e+00 : f32
    %400 = vector.broadcast %cst_168 : f32 to vector<2x128xf32>
    %401 = arith.addf %400, %399 : vector<2x128xf32>
    %402 = arith.divf %400, %401 : vector<2x128xf32>
    %403 = math.tanh %397 : vector<2x128xf32>
    %404 = vector.extract_strided_slice %402 {offsets = [0, 32], sizes = [2, 32], strides = [1, 1]} : vector<2x128xf32> to vector<2x32xf32>
    %405 = arith.mulf %404, %390 : vector<2x32xf32>
    %406 = vector.extract_strided_slice %402 {offsets = [0, 0], sizes = [2, 32], strides = [1, 1]} : vector<2x128xf32> to vector<2x32xf32>
    %407 = vector.extract_strided_slice %403 {offsets = [0, 64], sizes = [2, 32], strides = [1, 1]} : vector<2x128xf32> to vector<2x32xf32>
    %408 = arith.mulf %406, %407 : vector<2x32xf32>
    %409 = arith.addf %405, %408 : vector<2x32xf32>
    %410 = vector.extract_strided_slice %402 {offsets = [0, 96], sizes = [2, 32], strides = [1, 1]} : vector<2x128xf32> to vector<2x32xf32>
    %411 = math.tanh %409 : vector<2x32xf32>
    %412 = arith.mulf %410, %411 : vector<2x32xf32>
    %c4_169 = arith.constant 4 : index
    %c0_170 = arith.constant 0 : index
    %413 = vector.load %arg24[%c4_169, %c0_170] : memref<16x32xf32, #tpu.memory_space<vmem>>, vector<2x32xf32>
    tpu.vector_store %arg24[%c4_169, %c0_170], %412 {strides = array<i32>} : memref<16x32xf32, #tpu.memory_space<vmem>>, vector<2x32xf32>,
    %c6_171 = arith.constant 6 : index
    %c0_172 = arith.constant 0 : index
    %414 = vector.load %arg25[%c6_171, %c0_172] : memref<16x128xf32, #tpu.memory_space<vmem>>, vector<2x128xf32>
    %cst_173 = arith.constant dense<0.000000e+00> : vector<2x128xf32>
    %415 = tpu.matmul %412, %347, %cst_173 {dimension_numbers = #tpu.dot_dimension_numbers<[1], [0], [0], [1], [0, 0, 1, 1], [], []>} : vector<2x32xf32>, vector<32x128xf32>, vector<2x128xf32> -> vector<2x128xf32>
    %416 = arith.addf %414, %415 : vector<2x128xf32>
    %417 = arith.negf %416 : vector<2x128xf32>
    %418 = math.exp %417 : vector<2x128xf32>
    %cst_174 = arith.constant 1.000000e+00 : f32
    %419 = vector.broadcast %cst_174 : f32 to vector<2x128xf32>
    %420 = arith.addf %419, %418 : vector<2x128xf32>
    %421 = arith.divf %419, %420 : vector<2x128xf32>
    %422 = math.tanh %416 : vector<2x128xf32>
    %423 = vector.extract_strided_slice %421 {offsets = [0, 32], sizes = [2, 32], strides = [1, 1]} : vector<2x128xf32> to vector<2x32xf32>
    %424 = arith.mulf %423, %409 : vector<2x32xf32>
    %425 = vector.extract_strided_slice %421 {offsets = [0, 0], sizes = [2, 32], strides = [1, 1]} : vector<2x128xf32> to vector<2x32xf32>
    %426 = vector.extract_strided_slice %422 {offsets = [0, 64], sizes = [2, 32], strides = [1, 1]} : vector<2x128xf32> to vector<2x32xf32>
    %427 = arith.mulf %425, %426 : vector<2x32xf32>
    %428 = arith.addf %424, %427 : vector<2x32xf32>
    %429 = vector.extract_strided_slice %421 {offsets = [0, 96], sizes = [2, 32], strides = [1, 1]} : vector<2x128xf32> to vector<2x32xf32>
    %430 = math.tanh %428 : vector<2x32xf32>
    %431 = arith.mulf %429, %430 : vector<2x32xf32>
    %c6_175 = arith.constant 6 : index
    %c0_176 = arith.constant 0 : index
    %432 = vector.load %arg24[%c6_175, %c0_176] : memref<16x32xf32, #tpu.memory_space<vmem>>, vector<2x32xf32>
    tpu.vector_store %arg24[%c6_175, %c0_176], %431 {strides = array<i32>} : memref<16x32xf32, #tpu.memory_space<vmem>>, vector<2x32xf32>,
    %c8_177 = arith.constant 8 : index
    %c0_178 = arith.constant 0 : index
    %433 = vector.load %arg25[%c8_177, %c0_178] : memref<16x128xf32, #tpu.memory_space<vmem>>, vector<2x128xf32>
    %cst_179 = arith.constant dense<0.000000e+00> : vector<2x128xf32>
    %434 = tpu.matmul %431, %347, %cst_179 {dimension_numbers = #tpu.dot_dimension_numbers<[1], [0], [0], [1], [0, 0, 1, 1], [], []>} : vector<2x32xf32>, vector<32x128xf32>, vector<2x128xf32> -> vector<2x128xf32>
    %435 = arith.addf %433, %434 : vector<2x128xf32>
    %436 = arith.negf %435 : vector<2x128xf32>
    %437 = math.exp %436 : vector<2x128xf32>
    %cst_180 = arith.constant 1.000000e+00 : f32
    %438 = vector.broadcast %cst_180 : f32 to vector<2x128xf32>
    %439 = arith.addf %438, %437 : vector<2x128xf32>
    %440 = arith.divf %438, %439 : vector<2x128xf32>
    %441 = math.tanh %435 : vector<2x128xf32>
    %442 = vector.extract_strided_slice %440 {offsets = [0, 32], sizes = [2, 32], strides = [1, 1]} : vector<2x128xf32> to vector<2x32xf32>
    %443 = arith.mulf %442, %428 : vector<2x32xf32>
    %444 = vector.extract_strided_slice %440 {offsets = [0, 0], sizes = [2, 32], strides = [1, 1]} : vector<2x128xf32> to vector<2x32xf32>
    %445 = vector.extract_strided_slice %441 {offsets = [0, 64], sizes = [2, 32], strides = [1, 1]} : vector<2x128xf32> to vector<2x32xf32>
    %446 = arith.mulf %444, %445 : vector<2x32xf32>
    %447 = arith.addf %443, %446 : vector<2x32xf32>
    %448 = vector.extract_strided_slice %440 {offsets = [0, 96], sizes = [2, 32], strides = [1, 1]} : vector<2x128xf32> to vector<2x32xf32>
    %449 = math.tanh %447 : vector<2x32xf32>
    %450 = arith.mulf %448, %449 : vector<2x32xf32>
    %c8_181 = arith.constant 8 : index
    %c0_182 = arith.constant 0 : index
    %451 = vector.load %arg24[%c8_181, %c0_182] : memref<16x32xf32, #tpu.memory_space<vmem>>, vector<2x32xf32>
    tpu.vector_store %arg24[%c8_181, %c0_182], %450 {strides = array<i32>} : memref<16x32xf32, #tpu.memory_space<vmem>>, vector<2x32xf32>,
    %c10_183 = arith.constant 10 : index
    %c0_184 = arith.constant 0 : index
    %452 = vector.load %arg25[%c10_183, %c0_184] : memref<16x128xf32, #tpu.memory_space<vmem>>, vector<2x128xf32>
    %cst_185 = arith.constant dense<0.000000e+00> : vector<2x128xf32>
    %453 = tpu.matmul %450, %347, %cst_185 {dimension_numbers = #tpu.dot_dimension_numbers<[1], [0], [0], [1], [0, 0, 1, 1], [], []>} : vector<2x32xf32>, vector<32x128xf32>, vector<2x128xf32> -> vector<2x128xf32>
    %454 = arith.addf %452, %453 : vector<2x128xf32>
    %455 = arith.negf %454 : vector<2x128xf32>
    %456 = math.exp %455 : vector<2x128xf32>
    %cst_186 = arith.constant 1.000000e+00 : f32
    %457 = vector.broadcast %cst_186 : f32 to vector<2x128xf32>
    %458 = arith.addf %457, %456 : vector<2x128xf32>
    %459 = arith.divf %457, %458 : vector<2x128xf32>
    %460 = math.tanh %454 : vector<2x128xf32>
    %461 = vector.extract_strided_slice %459 {offsets = [0, 32], sizes = [2, 32], strides = [1, 1]} : vector<2x128xf32> to vector<2x32xf32>
    %462 = arith.mulf %461, %447 : vector<2x32xf32>
    %463 = vector.extract_strided_slice %459 {offsets = [0, 0], sizes = [2, 32], strides = [1, 1]} : vector<2x128xf32> to vector<2x32xf32>
    %464 = vector.extract_strided_slice %460 {offsets = [0, 64], sizes = [2, 32], strides = [1, 1]} : vector<2x128xf32> to vector<2x32xf32>
    %465 = arith.mulf %463, %464 : vector<2x32xf32>
    %466 = arith.addf %462, %465 : vector<2x32xf32>
    %467 = vector.extract_strided_slice %459 {offsets = [0, 96], sizes = [2, 32], strides = [1, 1]} : vector<2x128xf32> to vector<2x32xf32>
    %468 = math.tanh %466 : vector<2x32xf32>
    %469 = arith.mulf %467, %468 : vector<2x32xf32>
    %c10_187 = arith.constant 10 : index
    %c0_188 = arith.constant 0 : index
    %470 = vector.load %arg24[%c10_187, %c0_188] : memref<16x32xf32, #tpu.memory_space<vmem>>, vector<2x32xf32>
    tpu.vector_store %arg24[%c10_187, %c0_188], %469 {strides = array<i32>} : memref<16x32xf32, #tpu.memory_space<vmem>>, vector<2x32xf32>,
    %c12_189 = arith.constant 12 : index
    %c0_190 = arith.constant 0 : index
    %471 = vector.load %arg25[%c12_189, %c0_190] : memref<16x128xf32, #tpu.memory_space<vmem>>, vector<2x128xf32>
    %cst_191 = arith.constant dense<0.000000e+00> : vector<2x128xf32>
    %472 = tpu.matmul %469, %347, %cst_191 {dimension_numbers = #tpu.dot_dimension_numbers<[1], [0], [0], [1], [0, 0, 1, 1], [], []>} : vector<2x32xf32>, vector<32x128xf32>, vector<2x128xf32> -> vector<2x128xf32>
    %473 = arith.addf %471, %472 : vector<2x128xf32>
    %474 = arith.negf %473 : vector<2x128xf32>
    %475 = math.exp %474 : vector<2x128xf32>
    %cst_192 = arith.constant 1.000000e+00 : f32
    %476 = vector.broadcast %cst_192 : f32 to vector<2x128xf32>
    %477 = arith.addf %476, %475 : vector<2x128xf32>
    %478 = arith.divf %476, %477 : vector<2x128xf32>
    %479 = math.tanh %473 : vector<2x128xf32>
    %480 = vector.extract_strided_slice %478 {offsets = [0, 32], sizes = [2, 32], strides = [1, 1]} : vector<2x128xf32> to vector<2x32xf32>
    %481 = arith.mulf %480, %466 : vector<2x32xf32>
    %482 = vector.extract_strided_slice %478 {offsets = [0, 0], sizes = [2, 32], strides = [1, 1]} : vector<2x128xf32> to vector<2x32xf32>
    %483 = vector.extract_strided_slice %479 {offsets = [0, 64], sizes = [2, 32], strides = [1, 1]} : vector<2x128xf32> to vector<2x32xf32>
    %484 = arith.mulf %482, %483 : vector<2x32xf32>
    %485 = arith.addf %481, %484 : vector<2x32xf32>
    %486 = vector.extract_strided_slice %478 {offsets = [0, 96], sizes = [2, 32], strides = [1, 1]} : vector<2x128xf32> to vector<2x32xf32>
    %487 = math.tanh %485 : vector<2x32xf32>
    %488 = arith.mulf %486, %487 : vector<2x32xf32>
    %c12_193 = arith.constant 12 : index
    %c0_194 = arith.constant 0 : index
    %489 = vector.load %arg24[%c12_193, %c0_194] : memref<16x32xf32, #tpu.memory_space<vmem>>, vector<2x32xf32>
    tpu.vector_store %arg24[%c12_193, %c0_194], %488 {strides = array<i32>} : memref<16x32xf32, #tpu.memory_space<vmem>>, vector<2x32xf32>,
    %c14_195 = arith.constant 14 : index
    %c0_196 = arith.constant 0 : index
    %490 = vector.load %arg25[%c14_195, %c0_196] : memref<16x128xf32, #tpu.memory_space<vmem>>, vector<2x128xf32>
    %cst_197 = arith.constant dense<0.000000e+00> : vector<2x128xf32>
    %491 = tpu.matmul %488, %347, %cst_197 {dimension_numbers = #tpu.dot_dimension_numbers<[1], [0], [0], [1], [0, 0, 1, 1], [], []>} : vector<2x32xf32>, vector<32x128xf32>, vector<2x128xf32> -> vector<2x128xf32>
    %492 = arith.addf %490, %491 : vector<2x128xf32>
    %493 = arith.negf %492 : vector<2x128xf32>
    %494 = math.exp %493 : vector<2x128xf32>
    %cst_198 = arith.constant 1.000000e+00 : f32
    %495 = vector.broadcast %cst_198 : f32 to vector<2x128xf32>
    %496 = arith.addf %495, %494 : vector<2x128xf32>
    %497 = arith.divf %495, %496 : vector<2x128xf32>
    %498 = math.tanh %492 : vector<2x128xf32>
    %499 = vector.extract_strided_slice %497 {offsets = [0, 32], sizes = [2, 32], strides = [1, 1]} : vector<2x128xf32> to vector<2x32xf32>
    %500 = arith.mulf %499, %485 : vector<2x32xf32>
    %501 = vector.extract_strided_slice %497 {offsets = [0, 0], sizes = [2, 32], strides = [1, 1]} : vector<2x128xf32> to vector<2x32xf32>
    %502 = vector.extract_strided_slice %498 {offsets = [0, 64], sizes = [2, 32], strides = [1, 1]} : vector<2x128xf32> to vector<2x32xf32>
    %503 = arith.mulf %501, %502 : vector<2x32xf32>
    %504 = arith.addf %500, %503 : vector<2x32xf32>
    %505 = vector.extract_strided_slice %497 {offsets = [0, 96], sizes = [2, 32], strides = [1, 1]} : vector<2x128xf32> to vector<2x32xf32>
    %506 = math.tanh %504 : vector<2x32xf32>
    %507 = arith.mulf %505, %506 : vector<2x32xf32>
    %c14_199 = arith.constant 14 : index
    %c0_200 = arith.constant 0 : index
    %508 = vector.load %arg24[%c14_199, %c0_200] : memref<16x32xf32, #tpu.memory_space<vmem>>, vector<2x32xf32>
    tpu.vector_store %arg24[%c14_199, %c0_200], %507 {strides = array<i32>} : memref<16x32xf32, #tpu.memory_space<vmem>>, vector<2x32xf32>,
    %c0_201 = arith.constant 0 : index
    %c0_202 = arith.constant 0 : index
    %509 = vector.load %arg17[%c0_201, %c0_202] : memref<32x128xf32, #tpu.memory_space<vmem>>, vector<32x128xf32>
    %c0_203 = arith.constant 0 : index
    %c0_204 = arith.constant 0 : index
    %510 = vector.load %arg24[%c0_203, %c0_204] : memref<16x32xf32, #tpu.memory_space<vmem>>, vector<16x32xf32>
    %c0_205 = arith.constant 0 : index
    %c0_206 = arith.constant 0 : index
    %511 = vector.load %arg16[%c0_205, %c0_206] : memref<32x128xf32, #tpu.memory_space<vmem>>, vector<32x128xf32>
    %cst_207 = arith.constant dense<0.000000e+00> : vector<16x128xf32>
    %512 = tpu.matmul %510, %511, %cst_207 {dimension_numbers = #tpu.dot_dimension_numbers<[1], [0], [0], [1], [0, 0, 1, 1], [], []>} : vector<16x32xf32>, vector<32x128xf32>, vector<16x128xf32> -> vector<16x128xf32>
    %c0_208 = arith.constant 0 : index
    %c0_209 = arith.constant 0 : index
    %513 = vector.load %arg18[%c0_208, %c0_209] : memref<1x128xf32, #tpu.memory_space<vmem>>, vector<1x128xf32>
    %514 = vector.broadcast %513 : vector<1x128xf32> to vector<16x128xf32>
    %515 = arith.addf %512, %514 : vector<16x128xf32>
    %c0_210 = arith.constant 0 : index
    %c0_211 = arith.constant 0 : index
    %516 = vector.load %arg25[%c0_210, %c0_211] : memref<16x128xf32, #tpu.memory_space<vmem>>, vector<16x128xf32>
    tpu.vector_store %arg25[%c0_210, %c0_211], %515 {strides = array<i32>} : memref<16x128xf32, #tpu.memory_space<vmem>>, vector<16x128xf32>,
    %cst_212 = arith.constant 0.000000e+00 : f32
    %517 = vector.broadcast %cst_212 : f32 to vector<2x32xf32>
    %cst_213 = arith.constant 0.000000e+00 : f32
    %518 = vector.broadcast %cst_213 : f32 to vector<2x32xf32>
    %c0_214 = arith.constant 0 : index
    %c0_215 = arith.constant 0 : index
    %519 = vector.load %arg25[%c0_214, %c0_215] : memref<16x128xf32, #tpu.memory_space<vmem>>, vector<2x128xf32>
    %cst_216 = arith.constant dense<0.000000e+00> : vector<2x128xf32>
    %520 = tpu.matmul %517, %509, %cst_216 {dimension_numbers = #tpu.dot_dimension_numbers<[1], [0], [0], [1], [0, 0, 1, 1], [], []>} : vector<2x32xf32>, vector<32x128xf32>, vector<2x128xf32> -> vector<2x128xf32>
    %521 = arith.addf %519, %520 : vector<2x128xf32>
    %522 = arith.negf %521 : vector<2x128xf32>
    %523 = math.exp %522 : vector<2x128xf32>
    %cst_217 = arith.constant 1.000000e+00 : f32
    %524 = vector.broadcast %cst_217 : f32 to vector<2x128xf32>
    %525 = arith.addf %524, %523 : vector<2x128xf32>
    %526 = arith.divf %524, %525 : vector<2x128xf32>
    %527 = math.tanh %521 : vector<2x128xf32>
    %528 = vector.extract_strided_slice %526 {offsets = [0, 32], sizes = [2, 32], strides = [1, 1]} : vector<2x128xf32> to vector<2x32xf32>
    %529 = arith.mulf %528, %518 : vector<2x32xf32>
    %530 = vector.extract_strided_slice %526 {offsets = [0, 0], sizes = [2, 32], strides = [1, 1]} : vector<2x128xf32> to vector<2x32xf32>
    %531 = vector.extract_strided_slice %527 {offsets = [0, 64], sizes = [2, 32], strides = [1, 1]} : vector<2x128xf32> to vector<2x32xf32>
    %532 = arith.mulf %530, %531 : vector<2x32xf32>
    %533 = arith.addf %529, %532 : vector<2x32xf32>
    %534 = vector.extract_strided_slice %526 {offsets = [0, 96], sizes = [2, 32], strides = [1, 1]} : vector<2x128xf32> to vector<2x32xf32>
    %535 = math.tanh %533 : vector<2x32xf32>
    %536 = arith.mulf %534, %535 : vector<2x32xf32>
    %c0_218 = arith.constant 0 : index
    %c0_219 = arith.constant 0 : index
    %537 = vector.load %arg24[%c0_218, %c0_219] : memref<16x32xf32, #tpu.memory_space<vmem>>, vector<2x32xf32>
    tpu.vector_store %arg24[%c0_218, %c0_219], %536 {strides = array<i32>} : memref<16x32xf32, #tpu.memory_space<vmem>>, vector<2x32xf32>,
    %c2_220 = arith.constant 2 : index
    %c0_221 = arith.constant 0 : index
    %538 = vector.load %arg25[%c2_220, %c0_221] : memref<16x128xf32, #tpu.memory_space<vmem>>, vector<2x128xf32>
    %cst_222 = arith.constant dense<0.000000e+00> : vector<2x128xf32>
    %539 = tpu.matmul %536, %509, %cst_222 {dimension_numbers = #tpu.dot_dimension_numbers<[1], [0], [0], [1], [0, 0, 1, 1], [], []>} : vector<2x32xf32>, vector<32x128xf32>, vector<2x128xf32> -> vector<2x128xf32>
    %540 = arith.addf %538, %539 : vector<2x128xf32>
    %541 = arith.negf %540 : vector<2x128xf32>
    %542 = math.exp %541 : vector<2x128xf32>
    %cst_223 = arith.constant 1.000000e+00 : f32
    %543 = vector.broadcast %cst_223 : f32 to vector<2x128xf32>
    %544 = arith.addf %543, %542 : vector<2x128xf32>
    %545 = arith.divf %543, %544 : vector<2x128xf32>
    %546 = math.tanh %540 : vector<2x128xf32>
    %547 = vector.extract_strided_slice %545 {offsets = [0, 32], sizes = [2, 32], strides = [1, 1]} : vector<2x128xf32> to vector<2x32xf32>
    %548 = arith.mulf %547, %533 : vector<2x32xf32>
    %549 = vector.extract_strided_slice %545 {offsets = [0, 0], sizes = [2, 32], strides = [1, 1]} : vector<2x128xf32> to vector<2x32xf32>
    %550 = vector.extract_strided_slice %546 {offsets = [0, 64], sizes = [2, 32], strides = [1, 1]} : vector<2x128xf32> to vector<2x32xf32>
    %551 = arith.mulf %549, %550 : vector<2x32xf32>
    %552 = arith.addf %548, %551 : vector<2x32xf32>
    %553 = vector.extract_strided_slice %545 {offsets = [0, 96], sizes = [2, 32], strides = [1, 1]} : vector<2x128xf32> to vector<2x32xf32>
    %554 = math.tanh %552 : vector<2x32xf32>
    %555 = arith.mulf %553, %554 : vector<2x32xf32>
    %c2_224 = arith.constant 2 : index
    %c0_225 = arith.constant 0 : index
    %556 = vector.load %arg24[%c2_224, %c0_225] : memref<16x32xf32, #tpu.memory_space<vmem>>, vector<2x32xf32>
    tpu.vector_store %arg24[%c2_224, %c0_225], %555 {strides = array<i32>} : memref<16x32xf32, #tpu.memory_space<vmem>>, vector<2x32xf32>,
    %c4_226 = arith.constant 4 : index
    %c0_227 = arith.constant 0 : index
    %557 = vector.load %arg25[%c4_226, %c0_227] : memref<16x128xf32, #tpu.memory_space<vmem>>, vector<2x128xf32>
    %cst_228 = arith.constant dense<0.000000e+00> : vector<2x128xf32>
    %558 = tpu.matmul %555, %509, %cst_228 {dimension_numbers = #tpu.dot_dimension_numbers<[1], [0], [0], [1], [0, 0, 1, 1], [], []>} : vector<2x32xf32>, vector<32x128xf32>, vector<2x128xf32> -> vector<2x128xf32>
    %559 = arith.addf %557, %558 : vector<2x128xf32>
    %560 = arith.negf %559 : vector<2x128xf32>
    %561 = math.exp %560 : vector<2x128xf32>
    %cst_229 = arith.constant 1.000000e+00 : f32
    %562 = vector.broadcast %cst_229 : f32 to vector<2x128xf32>
    %563 = arith.addf %562, %561 : vector<2x128xf32>
    %564 = arith.divf %562, %563 : vector<2x128xf32>
    %565 = math.tanh %559 : vector<2x128xf32>
    %566 = vector.extract_strided_slice %564 {offsets = [0, 32], sizes = [2, 32], strides = [1, 1]} : vector<2x128xf32> to vector<2x32xf32>
    %567 = arith.mulf %566, %552 : vector<2x32xf32>
    %568 = vector.extract_strided_slice %564 {offsets = [0, 0], sizes = [2, 32], strides = [1, 1]} : vector<2x128xf32> to vector<2x32xf32>
    %569 = vector.extract_strided_slice %565 {offsets = [0, 64], sizes = [2, 32], strides = [1, 1]} : vector<2x128xf32> to vector<2x32xf32>
    %570 = arith.mulf %568, %569 : vector<2x32xf32>
    %571 = arith.addf %567, %570 : vector<2x32xf32>
    %572 = vector.extract_strided_slice %564 {offsets = [0, 96], sizes = [2, 32], strides = [1, 1]} : vector<2x128xf32> to vector<2x32xf32>
    %573 = math.tanh %571 : vector<2x32xf32>
    %574 = arith.mulf %572, %573 : vector<2x32xf32>
    %c4_230 = arith.constant 4 : index
    %c0_231 = arith.constant 0 : index
    %575 = vector.load %arg24[%c4_230, %c0_231] : memref<16x32xf32, #tpu.memory_space<vmem>>, vector<2x32xf32>
    tpu.vector_store %arg24[%c4_230, %c0_231], %574 {strides = array<i32>} : memref<16x32xf32, #tpu.memory_space<vmem>>, vector<2x32xf32>,
    %c6_232 = arith.constant 6 : index
    %c0_233 = arith.constant 0 : index
    %576 = vector.load %arg25[%c6_232, %c0_233] : memref<16x128xf32, #tpu.memory_space<vmem>>, vector<2x128xf32>
    %cst_234 = arith.constant dense<0.000000e+00> : vector<2x128xf32>
    %577 = tpu.matmul %574, %509, %cst_234 {dimension_numbers = #tpu.dot_dimension_numbers<[1], [0], [0], [1], [0, 0, 1, 1], [], []>} : vector<2x32xf32>, vector<32x128xf32>, vector<2x128xf32> -> vector<2x128xf32>
    %578 = arith.addf %576, %577 : vector<2x128xf32>
    %579 = arith.negf %578 : vector<2x128xf32>
    %580 = math.exp %579 : vector<2x128xf32>
    %cst_235 = arith.constant 1.000000e+00 : f32
    %581 = vector.broadcast %cst_235 : f32 to vector<2x128xf32>
    %582 = arith.addf %581, %580 : vector<2x128xf32>
    %583 = arith.divf %581, %582 : vector<2x128xf32>
    %584 = math.tanh %578 : vector<2x128xf32>
    %585 = vector.extract_strided_slice %583 {offsets = [0, 32], sizes = [2, 32], strides = [1, 1]} : vector<2x128xf32> to vector<2x32xf32>
    %586 = arith.mulf %585, %571 : vector<2x32xf32>
    %587 = vector.extract_strided_slice %583 {offsets = [0, 0], sizes = [2, 32], strides = [1, 1]} : vector<2x128xf32> to vector<2x32xf32>
    %588 = vector.extract_strided_slice %584 {offsets = [0, 64], sizes = [2, 32], strides = [1, 1]} : vector<2x128xf32> to vector<2x32xf32>
    %589 = arith.mulf %587, %588 : vector<2x32xf32>
    %590 = arith.addf %586, %589 : vector<2x32xf32>
    %591 = vector.extract_strided_slice %583 {offsets = [0, 96], sizes = [2, 32], strides = [1, 1]} : vector<2x128xf32> to vector<2x32xf32>
    %592 = math.tanh %590 : vector<2x32xf32>
    %593 = arith.mulf %591, %592 : vector<2x32xf32>
    %c6_236 = arith.constant 6 : index
    %c0_237 = arith.constant 0 : index
    %594 = vector.load %arg24[%c6_236, %c0_237] : memref<16x32xf32, #tpu.memory_space<vmem>>, vector<2x32xf32>
    tpu.vector_store %arg24[%c6_236, %c0_237], %593 {strides = array<i32>} : memref<16x32xf32, #tpu.memory_space<vmem>>, vector<2x32xf32>,
    %c8_238 = arith.constant 8 : index
    %c0_239 = arith.constant 0 : index
    %595 = vector.load %arg25[%c8_238, %c0_239] : memref<16x128xf32, #tpu.memory_space<vmem>>, vector<2x128xf32>
    %cst_240 = arith.constant dense<0.000000e+00> : vector<2x128xf32>
    %596 = tpu.matmul %593, %509, %cst_240 {dimension_numbers = #tpu.dot_dimension_numbers<[1], [0], [0], [1], [0, 0, 1, 1], [], []>} : vector<2x32xf32>, vector<32x128xf32>, vector<2x128xf32> -> vector<2x128xf32>
    %597 = arith.addf %595, %596 : vector<2x128xf32>
    %598 = arith.negf %597 : vector<2x128xf32>
    %599 = math.exp %598 : vector<2x128xf32>
    %cst_241 = arith.constant 1.000000e+00 : f32
    %600 = vector.broadcast %cst_241 : f32 to vector<2x128xf32>
    %601 = arith.addf %600, %599 : vector<2x128xf32>
    %602 = arith.divf %600, %601 : vector<2x128xf32>
    %603 = math.tanh %597 : vector<2x128xf32>
    %604 = vector.extract_strided_slice %602 {offsets = [0, 32], sizes = [2, 32], strides = [1, 1]} : vector<2x128xf32> to vector<2x32xf32>
    %605 = arith.mulf %604, %590 : vector<2x32xf32>
    %606 = vector.extract_strided_slice %602 {offsets = [0, 0], sizes = [2, 32], strides = [1, 1]} : vector<2x128xf32> to vector<2x32xf32>
    %607 = vector.extract_strided_slice %603 {offsets = [0, 64], sizes = [2, 32], strides = [1, 1]} : vector<2x128xf32> to vector<2x32xf32>
    %608 = arith.mulf %606, %607 : vector<2x32xf32>
    %609 = arith.addf %605, %608 : vector<2x32xf32>
    %610 = vector.extract_strided_slice %602 {offsets = [0, 96], sizes = [2, 32], strides = [1, 1]} : vector<2x128xf32> to vector<2x32xf32>
    %611 = math.tanh %609 : vector<2x32xf32>
    %612 = arith.mulf %610, %611 : vector<2x32xf32>
    %c8_242 = arith.constant 8 : index
    %c0_243 = arith.constant 0 : index
    %613 = vector.load %arg24[%c8_242, %c0_243] : memref<16x32xf32, #tpu.memory_space<vmem>>, vector<2x32xf32>
    tpu.vector_store %arg24[%c8_242, %c0_243], %612 {strides = array<i32>} : memref<16x32xf32, #tpu.memory_space<vmem>>, vector<2x32xf32>,
    %c10_244 = arith.constant 10 : index
    %c0_245 = arith.constant 0 : index
    %614 = vector.load %arg25[%c10_244, %c0_245] : memref<16x128xf32, #tpu.memory_space<vmem>>, vector<2x128xf32>
    %cst_246 = arith.constant dense<0.000000e+00> : vector<2x128xf32>
    %615 = tpu.matmul %612, %509, %cst_246 {dimension_numbers = #tpu.dot_dimension_numbers<[1], [0], [0], [1], [0, 0, 1, 1], [], []>} : vector<2x32xf32>, vector<32x128xf32>, vector<2x128xf32> -> vector<2x128xf32>
    %616 = arith.addf %614, %615 : vector<2x128xf32>
    %617 = arith.negf %616 : vector<2x128xf32>
    %618 = math.exp %617 : vector<2x128xf32>
    %cst_247 = arith.constant 1.000000e+00 : f32
    %619 = vector.broadcast %cst_247 : f32 to vector<2x128xf32>
    %620 = arith.addf %619, %618 : vector<2x128xf32>
    %621 = arith.divf %619, %620 : vector<2x128xf32>
    %622 = math.tanh %616 : vector<2x128xf32>
    %623 = vector.extract_strided_slice %621 {offsets = [0, 32], sizes = [2, 32], strides = [1, 1]} : vector<2x128xf32> to vector<2x32xf32>
    %624 = arith.mulf %623, %609 : vector<2x32xf32>
    %625 = vector.extract_strided_slice %621 {offsets = [0, 0], sizes = [2, 32], strides = [1, 1]} : vector<2x128xf32> to vector<2x32xf32>
    %626 = vector.extract_strided_slice %622 {offsets = [0, 64], sizes = [2, 32], strides = [1, 1]} : vector<2x128xf32> to vector<2x32xf32>
    %627 = arith.mulf %625, %626 : vector<2x32xf32>
    %628 = arith.addf %624, %627 : vector<2x32xf32>
    %629 = vector.extract_strided_slice %621 {offsets = [0, 96], sizes = [2, 32], strides = [1, 1]} : vector<2x128xf32> to vector<2x32xf32>
    %630 = math.tanh %628 : vector<2x32xf32>
    %631 = arith.mulf %629, %630 : vector<2x32xf32>
    %c10_248 = arith.constant 10 : index
    %c0_249 = arith.constant 0 : index
    %632 = vector.load %arg24[%c10_248, %c0_249] : memref<16x32xf32, #tpu.memory_space<vmem>>, vector<2x32xf32>
    tpu.vector_store %arg24[%c10_248, %c0_249], %631 {strides = array<i32>} : memref<16x32xf32, #tpu.memory_space<vmem>>, vector<2x32xf32>,
    %c12_250 = arith.constant 12 : index
    %c0_251 = arith.constant 0 : index
    %633 = vector.load %arg25[%c12_250, %c0_251] : memref<16x128xf32, #tpu.memory_space<vmem>>, vector<2x128xf32>
    %cst_252 = arith.constant dense<0.000000e+00> : vector<2x128xf32>
    %634 = tpu.matmul %631, %509, %cst_252 {dimension_numbers = #tpu.dot_dimension_numbers<[1], [0], [0], [1], [0, 0, 1, 1], [], []>} : vector<2x32xf32>, vector<32x128xf32>, vector<2x128xf32> -> vector<2x128xf32>
    %635 = arith.addf %633, %634 : vector<2x128xf32>
    %636 = arith.negf %635 : vector<2x128xf32>
    %637 = math.exp %636 : vector<2x128xf32>
    %cst_253 = arith.constant 1.000000e+00 : f32
    %638 = vector.broadcast %cst_253 : f32 to vector<2x128xf32>
    %639 = arith.addf %638, %637 : vector<2x128xf32>
    %640 = arith.divf %638, %639 : vector<2x128xf32>
    %641 = math.tanh %635 : vector<2x128xf32>
    %642 = vector.extract_strided_slice %640 {offsets = [0, 32], sizes = [2, 32], strides = [1, 1]} : vector<2x128xf32> to vector<2x32xf32>
    %643 = arith.mulf %642, %628 : vector<2x32xf32>
    %644 = vector.extract_strided_slice %640 {offsets = [0, 0], sizes = [2, 32], strides = [1, 1]} : vector<2x128xf32> to vector<2x32xf32>
    %645 = vector.extract_strided_slice %641 {offsets = [0, 64], sizes = [2, 32], strides = [1, 1]} : vector<2x128xf32> to vector<2x32xf32>
    %646 = arith.mulf %644, %645 : vector<2x32xf32>
    %647 = arith.addf %643, %646 : vector<2x32xf32>
    %648 = vector.extract_strided_slice %640 {offsets = [0, 96], sizes = [2, 32], strides = [1, 1]} : vector<2x128xf32> to vector<2x32xf32>
    %649 = math.tanh %647 : vector<2x32xf32>
    %650 = arith.mulf %648, %649 : vector<2x32xf32>
    %c12_254 = arith.constant 12 : index
    %c0_255 = arith.constant 0 : index
    %651 = vector.load %arg24[%c12_254, %c0_255] : memref<16x32xf32, #tpu.memory_space<vmem>>, vector<2x32xf32>
    tpu.vector_store %arg24[%c12_254, %c0_255], %650 {strides = array<i32>} : memref<16x32xf32, #tpu.memory_space<vmem>>, vector<2x32xf32>,
    %c14_256 = arith.constant 14 : index
    %c0_257 = arith.constant 0 : index
    %652 = vector.load %arg25[%c14_256, %c0_257] : memref<16x128xf32, #tpu.memory_space<vmem>>, vector<2x128xf32>
    %cst_258 = arith.constant dense<0.000000e+00> : vector<2x128xf32>
    %653 = tpu.matmul %650, %509, %cst_258 {dimension_numbers = #tpu.dot_dimension_numbers<[1], [0], [0], [1], [0, 0, 1, 1], [], []>} : vector<2x32xf32>, vector<32x128xf32>, vector<2x128xf32> -> vector<2x128xf32>
    %654 = arith.addf %652, %653 : vector<2x128xf32>
    %655 = arith.negf %654 : vector<2x128xf32>
    %656 = math.exp %655 : vector<2x128xf32>
    %cst_259 = arith.constant 1.000000e+00 : f32
    %657 = vector.broadcast %cst_259 : f32 to vector<2x128xf32>
    %658 = arith.addf %657, %656 : vector<2x128xf32>
    %659 = arith.divf %657, %658 : vector<2x128xf32>
    %660 = math.tanh %654 : vector<2x128xf32>
    %661 = vector.extract_strided_slice %659 {offsets = [0, 32], sizes = [2, 32], strides = [1, 1]} : vector<2x128xf32> to vector<2x32xf32>
    %662 = arith.mulf %661, %647 : vector<2x32xf32>
    %663 = vector.extract_strided_slice %659 {offsets = [0, 0], sizes = [2, 32], strides = [1, 1]} : vector<2x128xf32> to vector<2x32xf32>
    %664 = vector.extract_strided_slice %660 {offsets = [0, 64], sizes = [2, 32], strides = [1, 1]} : vector<2x128xf32> to vector<2x32xf32>
    %665 = arith.mulf %663, %664 : vector<2x32xf32>
    %666 = arith.addf %662, %665 : vector<2x32xf32>
    %667 = vector.extract_strided_slice %659 {offsets = [0, 96], sizes = [2, 32], strides = [1, 1]} : vector<2x128xf32> to vector<2x32xf32>
    %668 = math.tanh %666 : vector<2x32xf32>
    %669 = arith.mulf %667, %668 : vector<2x32xf32>
    %c14_260 = arith.constant 14 : index
    %c0_261 = arith.constant 0 : index
    %670 = vector.load %arg24[%c14_260, %c0_261] : memref<16x32xf32, #tpu.memory_space<vmem>>, vector<2x32xf32>
    tpu.vector_store %arg24[%c14_260, %c0_261], %669 {strides = array<i32>} : memref<16x32xf32, #tpu.memory_space<vmem>>, vector<2x32xf32>,
    %c0_262 = arith.constant 0 : index
    %c0_263 = arith.constant 0 : index
    %671 = vector.load %arg24[%c0_262, %c0_263] : memref<16x32xf32, #tpu.memory_space<vmem>>, vector<16x32xf32>
    %c0_264 = arith.constant 0 : index
    %c0_265 = arith.constant 0 : index
    %672 = vector.load %arg19[%c0_264, %c0_265] : memref<32x16xf32, #tpu.memory_space<vmem>>, vector<32x16xf32>
    %cst_266 = arith.constant dense<0.000000e+00> : vector<16x16xf32>
    %673 = tpu.matmul %671, %672, %cst_266 {dimension_numbers = #tpu.dot_dimension_numbers<[1], [0], [0], [1], [0, 0, 1, 1], [], []>} : vector<16x32xf32>, vector<32x16xf32>, vector<16x16xf32> -> vector<16x16xf32>
    %c0_267 = arith.constant 0 : index
    %c0_268 = arith.constant 0 : index
    %674 = vector.load %arg20[%c0_267, %c0_268] : memref<1x16xf32, #tpu.memory_space<vmem>>, vector<1x16xf32>
    %675 = vector.broadcast %674 : vector<1x16xf32> to vector<16x16xf32>
    %676 = arith.addf %673, %675 : vector<16x16xf32>
    %c0_269 = arith.constant 0 : index
    %c0_270 = arith.constant 0 : index
    %677 = vector.load %arg21[%c0_269, %c0_270] : memref<16x16xf32, #tpu.memory_space<vmem>>, vector<16x16xf32>
    tpu.vector_store %arg21[%c0_269, %c0_270], %676 {strides = array<i32>} : memref<16x16xf32, #tpu.memory_space<vmem>>, vector<16x16xf32>,
    return
  }
}

</mosaic_0001>

<llo_original>
// kernel: rnn_autoencoder_forward.1
$region0: #{rnn_autoencoder_forward.1}
  #allocation0 [shape = 'u32[]', space=smem, size = 0x4, offset = 0x4, fixed_abs, tag = 'smem constant byte address 0x4 - core index']
  #allocation1 [shape = 'u32[144,128]{1,0:T(1,128)}', space=vmem, size = 0x12000, scoped, tag = 'internal scratch']
  #allocation2 [shape = 'f32[16,32]{1,0:T(8,128)}', space=vmem, size = 0x2000, scoped, tag = 'scratch operand']
  #allocation3 [shape = 'f32[16,32]{1,0:T(8,128)}', space=vmem, size = 0x2000, scoped, tag = 'scratch operand']
  #allocation4 [shape = 'f32[16,128]{1,0:T(8,128)}', space=vmem, size = 0x2000, scoped, tag = 'scratch operand']
  %s0 = inlined_call_operand.vmem [shape: f32[16,16], index: 0, kind: input, shape index: {}]
  %s1 = inlined_call_operand.vmem [shape: f32[16,32], index: 1, kind: input, shape index: {}]
  %s2 = inlined_call_operand.hbm [shape: f32[1,32], index: 2, kind: input, shape index: {}]
  %s3 = inlined_call_operand.vmem [shape: f32[32,128], index: 3, kind: input, shape index: {}]
  %s4 = inlined_call_operand.vmem [shape: f32[32,128], index: 4, kind: input, shape index: {}]
  %s5 = inlined_call_operand.hbm [shape: f32[1,128], index: 5, kind: input, shape index: {}]
  %s6 = inlined_call_operand.vmem [shape: f32[32,128], index: 6, kind: input, shape index: {}]
  %s7 = inlined_call_operand.vmem [shape: f32[32,128], index: 7, kind: input, shape index: {}]
  %s8 = inlined_call_operand.vmem [shape: f32[1,128], index: 8, kind: input, shape index: {}]
  %s9 = inlined_call_operand.vmem [shape: f32[32,8], index: 9, kind: input, shape index: {}]
  %s10 = inlined_call_operand.hbm [shape: f32[1,8], index: 10, kind: input, shape index: {}]
  %s11 = inlined_call_operand.hbm [shape: f32[8,32], index: 11, kind: input, shape index: {}]
  %s12 = inlined_call_operand.hbm [shape: f32[1,32], index: 12, kind: input, shape index: {}]
  %s13 = inlined_call_operand.hbm [shape: f32[32,128], index: 13, kind: input, shape index: {}]
  %s14 = inlined_call_operand.hbm [shape: f32[32,128], index: 14, kind: input, shape index: {}]
  %s15 = inlined_call_operand.hbm [shape: f32[1,128], index: 15, kind: input, shape index: {}]
  %s16 = inlined_call_operand.hbm [shape: f32[32,128], index: 16, kind: input, shape index: {}]
  %s17 = inlined_call_operand.hbm [shape: f32[32,128], index: 17, kind: input, shape index: {}]
  %s18 = inlined_call_operand.hbm [shape: f32[1,128], index: 18, kind: input, shape index: {}]
  %s19 = inlined_call_operand.vmem [shape: f32[32,16], index: 19, kind: input, shape index: {}]
  %s20 = inlined_call_operand.hbm [shape: f32[1,16], index: 20, kind: input, shape index: {}]
  %s21 = inlined_call_operand.vmem [shape: f32[16,16], index: 21, kind: output, shape index: {0}]
  %s22 = inlined_call_operand.vmem [shape: f32[16,8], index: 22, kind: output, shape index: {1}]
  %23 = xla_tuple %s21, %s22
  %s24 = sld [smem:[#allocation0]]
  $region150: #{rnn_autoencoder_forward.1} parent=0
    _
  %s26 = ssub.s32 1, %s24
  %s27 = scalar_select 0, %s26, %s24
  $region1: #{rnn_autoencoder_forward.1} parent=0
    #allocation5 [shape = 'u8[512]{0}', space=vmem, size = 0x400, scoped, tag = 'input window, operand 2, single buffered']
    #allocation6 [shape = 's32[1]{0}', space=sflag, size = 0x4, scoped, tag = 'scoped memory for rnn_autoencoder_forward.1']
    #allocation7 [shape = 'u8[512]{0}', space=vmem, size = 0x400, scoped, tag = 'input window, operand 5, single buffered']
    #allocation8 [shape = 's32[1]{0}', space=sflag, size = 0x4, scoped, tag = 'scoped memory for rnn_autoencoder_forward.1']
    #allocation9 [shape = 'u8[512]{0}', space=vmem, size = 0x400, scoped, tag = 'input window, operand 10, single buffered']
    #allocation10 [shape = 'u8[4096]{0}', space=vmem, size = 0x1000, scoped, tag = 'input window, operand 11, single buffered']
    #allocation11 [shape = 's32[1]{0}', space=sflag, size = 0x4, scoped, tag = 'scoped memory for rnn_autoencoder_forward.1']
    #allocation12 [shape = 'u8[512]{0}', space=vmem, size = 0x400, scoped, tag = 'input window, operand 12, single buffered']
    #allocation13 [shape = 'u8[16384]{0}', space=vmem, size = 0x4000, scoped, tag = 'input window, operand 13, single buffered']
    #allocation14 [shape = 's32[1]{0}', space=sflag, size = 0x4, scoped, tag = 'scoped memory for rnn_autoencoder_forward.1']
    #allocation15 [shape = 'u8[16384]{0}', space=vmem, size = 0x4000, scoped, tag = 'input window, operand 14, single buffered']
    #allocation16 [shape = 'u8[512]{0}', space=vmem, size = 0x400, scoped, tag = 'input window, operand 15, single buffered']
    #allocation17 [shape = 's32[1]{0}', space=sflag, size = 0x4, scoped, tag = 'scoped memory for rnn_autoencoder_forward.1']
    #allocation18 [shape = 'u8[16384]{0}', space=vmem, size = 0x4000, scoped, tag = 'input window, operand 16, single buffered']
    #allocation19 [shape = 'u8[16384]{0}', space=vmem, size = 0x4000, scoped, tag = 'input window, operand 17, single buffered']
    #allocation20 [shape = 's32[1]{0}', space=sflag, size = 0x4, scoped, tag = 'scoped memory for rnn_autoencoder_forward.1']
    #allocation21 [shape = 'u8[512]{0}', space=vmem, size = 0x400, scoped, tag = 'input window, operand 18, single buffered']
    #allocation22 [shape = 'u8[512]{0}', space=vmem, size = 0x400, scoped, tag = 'input window, operand 20, single buffered']
    #allocation23 [shape = 's32[1]{0}', space=sflag, size = 0x4, scoped, tag = 'scoped memory for rnn_autoencoder_forward.1']
    %28 = vsyncpa [#allocation6], 0
    %29 = vsyncpa [#allocation8], 0
    %30 = vsyncpa [#allocation11], 0
    %31 = vsyncpa [#allocation14], 0
    %32 = vsyncpa [#allocation17], 0
    %33 = vsyncpa [#allocation20], 0
    %34 = vsyncpa [#allocation23], 0
    // Predicated region
    $region2: #{rnn_autoencoder_forward.1} parent=1 // pred_check
      _
    $region3: #{rnn_autoencoder_forward.1} parent=1 // pred_check_branch
      %36 = sbr.rel (0) target = $region5
    $region4: #{rnn_autoencoder_forward.1} parent=1 // pred_region
      _
    $region5: #{rnn_autoencoder_forward.1} parent=1 // pred_fallthru
      _
    // Predicated region
    $region6: #{rnn_autoencoder_forward.1} parent=1 // pred_check
      _
    $region7: #{rnn_autoencoder_forward.1} parent=1 // pred_check_branch
      %38 = sbr.rel (0) target = $region9
    $region8: #{rnn_autoencoder_forward.1} parent=1 // pred_region
      _
    $region9: #{rnn_autoencoder_forward.1} parent=1 // pred_fallthru
      _
    // Predicated region
    $region10: #{rnn_autoencoder_forward.1} parent=1 // pred_check
      _
    $region11: #{rnn_autoencoder_forward.1} parent=1 // pred_check_branch
      %40 = sbr.rel (0) target = $region13
    $region12: #{rnn_autoencoder_forward.1} parent=1 // pred_region
      %s42 = ssub.s32 16, 16
      %43 = vsyncadd [#allocation6], %s42
      %s45 = sshll.u32 [#allocation5], 4
      %s46 = int_to_ptr.vmem [resolvable:$true] %s45
      %48 = dma.hbm_to_vmem [thread:$0]  %s2, 16, %s46, [#allocation6]
    $region13: #{rnn_autoencoder_forward.1} parent=1 // pred_fallthru
      _
    // Predicated region
    $region14: #{rnn_autoencoder_forward.1} parent=1 // pred_check
      _
    $region15: #{rnn_autoencoder_forward.1} parent=1 // pred_check_branch
      %50 = sbr.rel (0) target = $region17
    $region16: #{rnn_autoencoder_forward.1} parent=1 // pred_region
      _
    $region17: #{rnn_autoencoder_forward.1} parent=1 // pred_fallthru
      _
    // Predicated region
    $region18: #{rnn_autoencoder_forward.1} parent=1 // pred_check
      _
    $region19: #{rnn_autoencoder_forward.1} parent=1 // pred_check_branch
      %52 = sbr.rel (0) target = $region21
    $region20: #{rnn_autoencoder_forward.1} parent=1 // pred_region
      _
    $region21: #{rnn_autoencoder_forward.1} parent=1 // pred_fallthru
      _
    // Predicated region
    $region22: #{rnn_autoencoder_forward.1} parent=1 // pred_check
      _
    $region23: #{rnn_autoencoder_forward.1} parent=1 // pred_check_branch
      %54 = sbr.rel (0) target = $region25
    $region24: #{rnn_autoencoder_forward.1} parent=1 // pred_region
      %s56 = ssub.s32 16, 16
      %57 = vsyncadd [#allocation8], %s56
      %s59 = sshll.u32 [#allocation7], 4
      %s60 = int_to_ptr.vmem [resolvable:$true] %s59
      %62 = dma.hbm_to_vmem [thread:$0]  %s5, 16, %s60, [#allocation8]
    $region25: #{rnn_autoencoder_forward.1} parent=1 // pred_fallthru
      _
    // Predicated region
    $region26: #{rnn_autoencoder_forward.1} parent=1 // pred_check
      _
    $region27: #{rnn_autoencoder_forward.1} parent=1 // pred_check_branch
      %64 = sbr.rel (0) target = $region29
    $region28: #{rnn_autoencoder_forward.1} parent=1 // pred_region
      _
    $region29: #{rnn_autoencoder_forward.1} parent=1 // pred_fallthru
      _
    // Predicated region
    $region30: #{rnn_autoencoder_forward.1} parent=1 // pred_check
      _
    $region31: #{rnn_autoencoder_forward.1} parent=1 // pred_check_branch
      %66 = sbr.rel (0) target = $region33
    $region32: #{rnn_autoencoder_forward.1} parent=1 // pred_region
      _
    $region33: #{rnn_autoencoder_forward.1} parent=1 // pred_fallthru
      _
    // Predicated region
    $region34: #{rnn_autoencoder_forward.1} parent=1 // pred_check
      _
    $region35: #{rnn_autoencoder_forward.1} parent=1 // pred_check_branch
      %68 = sbr.rel (0) target = $region37
    $region36: #{rnn_autoencoder_forward.1} parent=1 // pred_region
      _
    $region37: #{rnn_autoencoder_forward.1} parent=1 // pred_fallthru
      _
    // Predicated region
    $region38: #{rnn_autoencoder_forward.1} parent=1 // pred_check
      _
    $region39: #{rnn_autoencoder_forward.1} parent=1 // pred_check_branch
      %70 = sbr.rel (0) target = $region41
    $region40: #{rnn_autoencoder_forward.1} parent=1 // pred_region
      _
    $region41: #{rnn_autoencoder_forward.1} parent=1 // pred_fallthru
      _
    // Predicated region
    $region42: #{rnn_autoencoder_forward.1} parent=1 // pred_check
      _
    $region43: #{rnn_autoencoder_forward.1} parent=1 // pred_check_branch
      %72 = sbr.rel (0) target = $region45
    $region44: #{rnn_autoencoder_forward.1} parent=1 // pred_region
      %s74 = ssub.s32 16, 16
      %75 = vsyncadd [#allocation8], %s74
      %s77 = sshll.u32 [#allocation9], 4
      %s78 = int_to_ptr.vmem [resolvable:$true] %s77
      %80 = dma.hbm_to_vmem [thread:$0]  %s10, 16, %s78, [#allocation8]
    $region45: #{rnn_autoencoder_forward.1} parent=1 // pred_fallthru
      _
    // Predicated region
    $region46: #{rnn_autoencoder_forward.1} parent=1 // pred_check
      _
    $region47: #{rnn_autoencoder_forward.1} parent=1 // pred_check_branch
      %82 = sbr.rel (0) target = $region49
    $region48: #{rnn_autoencoder_forward.1} parent=1 // pred_region
      %s84 = ssub.s32 128, 128
      %85 = vsyncadd [#allocation11], %s84
      %s87 = sshll.u32 [#allocation10], 4
      %s88 = int_to_ptr.vmem [resolvable:$true] %s87
      %90 = dma.hbm_to_vmem [thread:$0]  %s11, 128, %s88, [#allocation11]
    $region49: #{rnn_autoencoder_forward.1} parent=1 // pred_fallthru
      _
    // Predicated region
    $region50: #{rnn_autoencoder_forward.1} parent=1 // pred_check
      _
    $region51: #{rnn_autoencoder_forward.1} parent=1 // pred_check_branch
      %92 = sbr.rel (0) target = $region53
    $region52: #{rnn_autoencoder_forward.1} parent=1 // pred_region
      %s94 = ssub.s32 16, 16
      %95 = vsyncadd [#allocation11], %s94
      %s97 = sshll.u32 [#allocation12], 4
      %s98 = int_to_ptr.vmem [resolvable:$true] %s97
      %100 = dma.hbm_to_vmem [thread:$0]  %s12, 16, %s98, [#allocation11]
    $region53: #{rnn_autoencoder_forward.1} parent=1 // pred_fallthru
      _
    // Predicated region
    $region54: #{rnn_autoencoder_forward.1} parent=1 // pred_check
      _
    $region55: #{rnn_autoencoder_forward.1} parent=1 // pred_check_branch
      %102 = sbr.rel (0) target = $region57
    $region56: #{rnn_autoencoder_forward.1} parent=1 // pred_region
      %s104 = ssub.s32 512, 512
      %105 = vsyncadd [#allocation14], %s104
      %s106 = sshll.u32 [#allocation13], 4
      %s107 = int_to_ptr.vmem [resolvable:$true] %s106
      %112 = dma.hbm_to_vmem [thread:$0]  %s13, 512, %s107, [#allocation14], 128, 128, 8
    $region57: #{rnn_autoencoder_forward.1} parent=1 // pred_fallthru
      _
    // Predicated region
    $region58: #{rnn_autoencoder_forward.1} parent=1 // pred_check
      _
    $region59: #{rnn_autoencoder_forward.1} parent=1 // pred_check_branch
      %114 = sbr.rel (0) target = $region61
    $region60: #{rnn_autoencoder_forward.1} parent=1 // pred_region
      %s116 = ssub.s32 512, 512
      %117 = vsyncadd [#allocation14], %s116
      %s118 = sshll.u32 [#allocation15], 4
      %s119 = int_to_ptr.vmem [resolvable:$true] %s118
      %124 = dma.hbm_to_vmem [thread:$0]  %s14, 512, %s119, [#allocation14], 128, 128, 8
    $region61: #{rnn_autoencoder_forward.1} parent=1 // pred_fallthru
      _
    // Predicated region
    $region62: #{rnn_autoencoder_forward.1} parent=1 // pred_check
      _
    $region63: #{rnn_autoencoder_forward.1} parent=1 // pred_check_branch
      %126 = sbr.rel (0) target = $region65
    $region64: #{rnn_autoencoder_forward.1} parent=1 // pred_region
      %s128 = ssub.s32 16, 16
      %129 = vsyncadd [#allocation17], %s128
      %s131 = sshll.u32 [#allocation16], 4
      %s132 = int_to_ptr.vmem [resolvable:$true] %s131
      %134 = dma.hbm_to_vmem [thread:$0]  %s15, 16, %s132, [#allocation17]
    $region65: #{rnn_autoencoder_forward.1} parent=1 // pred_fallthru
      _
    // Predicated region
    $region66: #{rnn_autoencoder_forward.1} parent=1 // pred_check
      _
    $region67: #{rnn_autoencoder_forward.1} parent=1 // pred_check_branch
      %136 = sbr.rel (0) target = $region69
    $region68: #{rnn_autoencoder_forward.1} parent=1 // pred_region
      %s138 = ssub.s32 512, 512
      %139 = vsyncadd [#allocation17], %s138
      %s140 = sshll.u32 [#allocation18], 4
      %s141 = int_to_ptr.vmem [resolvable:$true] %s140
      %146 = dma.hbm_to_vmem [thread:$0]  %s16, 512, %s141, [#allocation17], 128, 128, 8
    $region69: #{rnn_autoencoder_forward.1} parent=1 // pred_fallthru
      _
    // Predicated region
    $region70: #{rnn_autoencoder_forward.1} parent=1 // pred_check
      _
    $region71: #{rnn_autoencoder_forward.1} parent=1 // pred_check_branch
      %148 = sbr.rel (0) target = $region73
    $region72: #{rnn_autoencoder_forward.1} parent=1 // pred_region
      %s150 = ssub.s32 512, 512
      %151 = vsyncadd [#allocation20], %s150
      %s152 = sshll.u32 [#allocation19], 4
      %s153 = int_to_ptr.vmem [resolvable:$true] %s152
      %158 = dma.hbm_to_vmem [thread:$0]  %s17, 512, %s153, [#allocation20], 128, 128, 8
    $region73: #{rnn_autoencoder_forward.1} parent=1 // pred_fallthru
      _
    // Predicated region
    $region74: #{rnn_autoencoder_forward.1} parent=1 // pred_check
      _
    $region75: #{rnn_autoencoder_forward.1} parent=1 // pred_check_branch
      %160 = sbr.rel (0) target = $region77
    $region76: #{rnn_autoencoder_forward.1} parent=1 // pred_region
      %s162 = ssub.s32 16, 16
      %163 = vsyncadd [#allocation20], %s162
      %s165 = sshll.u32 [#allocation21], 4
      %s166 = int_to_ptr.vmem [resolvable:$true] %s165
      %168 = dma.hbm_to_vmem [thread:$0]  %s18, 16, %s166, [#allocation20]
    $region77: #{rnn_autoencoder_forward.1} parent=1 // pred_fallthru
      _
    // Predicated region
    $region78: #{rnn_autoencoder_forward.1} parent=1 // pred_check
      _
    $region79: #{rnn_autoencoder_forward.1} parent=1 // pred_check_branch
      %170 = sbr.rel (0) target = $region81
    $region80: #{rnn_autoencoder_forward.1} parent=1 // pred_region
      _
    $region81: #{rnn_autoencoder_forward.1} parent=1 // pred_fallthru
      _
    // Predicated region
    $region82: #{rnn_autoencoder_forward.1} parent=1 // pred_check
      _
    $region83: #{rnn_autoencoder_forward.1} parent=1 // pred_check_branch
      %172 = sbr.rel (0) target = $region85
    $region84: #{rnn_autoencoder_forward.1} parent=1 // pred_region
      %s174 = ssub.s32 16, 16
      %175 = vsyncadd [#allocation23], %s174
      %s177 = sshll.u32 [#allocation22], 4
      %s178 = int_to_ptr.vmem [resolvable:$true] %s177
      %180 = dma.hbm_to_vmem [thread:$0]  %s20, 16, %s178, [#allocation23]
    $region85: #{rnn_autoencoder_forward.1} parent=1 // pred_fallthru
      _
    // Predicated region
    $region86: #{rnn_autoencoder_forward.1} parent=1 // pred_check
      _
    $region87: #{rnn_autoencoder_forward.1} parent=1 // pred_check_branch
      %182 = sbr.rel (0) target = $region89
    $region88: #{rnn_autoencoder_forward.1} parent=1 // pred_region
      %183 = dma.done [#allocation6], 16
    $region89: #{rnn_autoencoder_forward.1} parent=1 // pred_fallthru
      _
    // Predicated region
    $region90: #{rnn_autoencoder_forward.1} parent=1 // pred_check
      _
    $region91: #{rnn_autoencoder_forward.1} parent=1 // pred_check_branch
      %185 = sbr.rel (0) target = $region93
    $region92: #{rnn_autoencoder_forward.1} parent=1 // pred_region
      %186 = dma.done [#allocation8], 16
    $region93: #{rnn_autoencoder_forward.1} parent=1 // pred_fallthru
      _
    // Predicated region
    $region94: #{rnn_autoencoder_forward.1} parent=1 // pred_check
      _
    $region95: #{rnn_autoencoder_forward.1} parent=1 // pred_check_branch
      %188 = sbr.rel (0) target = $region97
    $region96: #{rnn_autoencoder_forward.1} parent=1 // pred_region
      %189 = dma.done [#allocation8], 16
    $region97: #{rnn_autoencoder_forward.1} parent=1 // pred_fallthru
      _
    // Predicated region
    $region98: #{rnn_autoencoder_forward.1} parent=1 // pred_check
      _
    $region99: #{rnn_autoencoder_forward.1} parent=1 // pred_check_branch
      %191 = sbr.rel (0) target = $region101
    $region100: #{rnn_autoencoder_forward.1} parent=1 // pred_region
      %192 = dma.done [#allocation11], 128
    $region101: #{rnn_autoencoder_forward.1} parent=1 // pred_fallthru
      _
    // Predicated region
    $region102: #{rnn_autoencoder_forward.1} parent=1 // pred_check
      _
    $region103: #{rnn_autoencoder_forward.1} parent=1 // pred_check_branch
      %194 = sbr.rel (0) target = $region105
    $region104: #{rnn_autoencoder_forward.1} parent=1 // pred_region
      %195 = dma.done [#allocation11], 16
    $region105: #{rnn_autoencoder_forward.1} parent=1 // pred_fallthru
      _
    // Predicated region
    $region106: #{rnn_autoencoder_forward.1} parent=1 // pred_check
      _
    $region107: #{rnn_autoencoder_forward.1} parent=1 // pred_check_branch
      %197 = sbr.rel (0) target = $region109
    $region108: #{rnn_autoencoder_forward.1} parent=1 // pred_region
      %198 = dma.done [#allocation14], 512
    $region109: #{rnn_autoencoder_forward.1} parent=1 // pred_fallthru
      _
    // Predicated region
    $region110: #{rnn_autoencoder_forward.1} parent=1 // pred_check
      _
    $region111: #{rnn_autoencoder_forward.1} parent=1 // pred_check_branch
      %200 = sbr.rel (0) target = $region113
    $region112: #{rnn_autoencoder_forward.1} parent=1 // pred_region
      %201 = dma.done [#allocation14], 512
    $region113: #{rnn_autoencoder_forward.1} parent=1 // pred_fallthru
      _
    // Predicated region
    $region114: #{rnn_autoencoder_forward.1} parent=1 // pred_check
      _
    $region115: #{rnn_autoencoder_forward.1} parent=1 // pred_check_branch
      %203 = sbr.rel (0) target = $region117
    $region116: #{rnn_autoencoder_forward.1} parent=1 // pred_region
      %204 = dma.done [#allocation17], 16
    $region117: #{rnn_autoencoder_forward.1} parent=1 // pred_fallthru
      _
    // Predicated region
    $region118: #{rnn_autoencoder_forward.1} parent=1 // pred_check
      _
    $region119: #{rnn_autoencoder_forward.1} parent=1 // pred_check_branch
      %206 = sbr.rel (0) target = $region121
    $region120: #{rnn_autoencoder_forward.1} parent=1 // pred_region
      %207 = dma.done [#allocation17], 512
    $region121: #{rnn_autoencoder_forward.1} parent=1 // pred_fallthru
      _
    // Predicated region
    $region122: #{rnn_autoencoder_forward.1} parent=1 // pred_check
      _
    $region123: #{rnn_autoencoder_forward.1} parent=1 // pred_check_branch
      %209 = sbr.rel (0) target = $region125
    $region124: #{rnn_autoencoder_forward.1} parent=1 // pred_region
      %210 = dma.done [#allocation20], 512
    $region125: #{rnn_autoencoder_forward.1} parent=1 // pred_fallthru
      _
    // Predicated region
    $region126: #{rnn_autoencoder_forward.1} parent=1 // pred_check
      _
    $region127: #{rnn_autoencoder_forward.1} parent=1 // pred_check_branch
      %212 = sbr.rel (0) target = $region129
    $region128: #{rnn_autoencoder_forward.1} parent=1 // pred_region
      %213 = dma.done [#allocation20], 16
    $region129: #{rnn_autoencoder_forward.1} parent=1 // pred_fallthru
      _
    // Predicated region
    $region130: #{rnn_autoencoder_forward.1} parent=1 // pred_check
      _
    $region131: #{rnn_autoencoder_forward.1} parent=1 // pred_check_branch
      %215 = sbr.rel (0) target = $region133
    $region132: #{rnn_autoencoder_forward.1} parent=1 // pred_region
      %216 = dma.done [#allocation23], 16
    $region133: #{rnn_autoencoder_forward.1} parent=1 // pred_fallthru
      _
    %v217 = vld [vmem:[%s0] sm:$0xff]
    %v218 = vld [vmem:[%s0 + $0x8] sm:$0xff]
    %v219 = vld [vmem:[%s1] sm:$0xff]
    %v220 = vld [vmem:[%s1 + $0x8] sm:$0xff]
    %v221 = vld [vmem:[#allocation5] sm:$0x1]
    %v223 = vlaneseq
    %v224 = vshrl.u32 %v223, 7
    %v225 = vsub.s32 0, %v224
    %v226 = vrot.slane %v221, %v225
    %vm228 = vcmask 130048
    %v230 = vsel %vm228, %v217, 0
    %v233 = vsel %vm228, %v218, 0
    %235 = vmatprep.subr.mxu0 0.0
    %236 = vmatpush1.msra.mxu0 0.0
    %237 = vmatprep.subr.mxu0 0.0
    %238 = vmatpush1.msra.mxu0 0.0
    %239 = vmatprep.subr.mxu0 0.0
    %240 = vmatpush1.msra.mxu0 0.0
    %241 = vmatprep.subr.mxu0 0.0
    %242 = vmatpush1.msra.mxu0 0.0
    %243 = vmatprep.subr.mxu0 0.0
    %244 = vmatpush1.msra.mxu0 0.0
    %245 = vmatprep.subr.mxu0 0.0
    %246 = vmatpush1.msra.mxu0 0.0
    %247 = vmatprep.subr.mxu0 0.0
    %248 = vmatpush1.msra.mxu0 0.0
    %249 = vmatprep.subr.mxu0 0.0
    %250 = vmatpush1.msra.mxu0 0.0
    %251 = vmatprep.subr.mxu0 0.0
    %252 = vmatpush1.msra.mxu0 0.0
    %253 = vmatprep.subr.mxu0 0.0
    %254 = vmatpush1.msra.mxu0 0.0
    %255 = vmatprep.subr.mxu0 0.0
    %256 = vmatpush1.msra.mxu0 0.0
    %257 = vmatprep.subr.mxu0 0.0
    %258 = vmatpush1.msra.mxu0 0.0
    %259 = vmatprep.subr.mxu0 0.0
    %260 = vmatpush1.msra.mxu0 0.0
    %261 = vmatprep.subr.mxu0 0.0
    %262 = vmatpush1.msra.mxu0 0.0
    %263 = vmatprep.subr.mxu0 0.0
    %264 = vmatpush1.msra.mxu0 %v220
    %265 = vmatprep.subr.mxu0 0.0
    %266 = vmatpush1.msra.mxu0 %v219
    %267 = vmatprep.subr.mxu0 0.0
    %268 = vmatpush2.msra.mxu0 0.0
    %269 = vmatprep.subr.mxu0 0.0
    %270 = vmatpush2.msra.mxu0 0.0
    %271 = vmatprep.subr.mxu0 0.0
    %272 = vmatpush2.msra.mxu0 0.0
    %273 = vmatprep.subr.mxu0 0.0
    %274 = vmatpush2.msra.mxu0 0.0
    %275 = vmatprep.subr.mxu0 0.0
    %276 = vmatpush2.msra.mxu0 0.0
    %277 = vmatprep.subr.mxu0 0.0
    %278 = vmatpush2.msra.mxu0 0.0
    %279 = vmatprep.subr.mxu0 0.0
    %280 = vmatpush2.msra.mxu0 0.0
    %281 = vmatprep.subr.mxu0 0.0
    %282 = vmatpush2.msra.mxu0 0.0
    %283 = vmatprep.subr.mxu0 0.0
    %284 = vmatpush2.msra.mxu0 0.0
    %285 = vmatprep.subr.mxu0 0.0
    %286 = vmatpush2.msra.mxu0 0.0
    %287 = vmatprep.subr.mxu0 0.0
    %288 = vmatpush2.msra.mxu0 0.0
    %289 = vmatprep.subr.mxu0 0.0
    %290 = vmatpush2.msra.mxu0 0.0
    %291 = vmatprep.subr.mxu0 0.0
    %292 = vmatpush2.msra.mxu0 0.0
    %293 = vmatprep.subr.mxu0 0.0
    %294 = vmatpush2.msra.mxu0 0.0
    %295 = vmatprep.subr.mxu0 0.0
    %296 = vmatpush2.msra.mxu0 0.0
    %297 = vmatprep.subr.mxu0 0.0
    %298 = vmatpush2.msra.mxu0 0.0
    %299 = vmatprep.mubr.f32.mxu0 0.0
    %300 = vmatmul.mubr.f32.gmra.mxu0 %v230
    %v301 = vpop.f32.mrf.mxu0
    %v302 = vadd.f32 %v226, %v301
    %v303 = vpop.f32.mrf.mxu0
    %304 = vmatprep.mubr.f32.mxu0 0.0
    %305 = vmatmul.mubr.f32.gmra.mxu0 %v233
    %v306 = vpop.f32.mrf.mxu0
    %v307 = vadd.f32 %v226, %v306
    %v308 = vpop.f32.mrf.mxu0
    %309 = vdwg.mxu0
    %v310 = vtanh.pop %v302
    %v311 = vtanh.pop %v307
    %vm312 = vcmask 261120
    %313 = vst.msk [vmem:[#allocation2] sm:$0xff] %vm312, %v310
    %314 = vst.msk [vmem:[#allocation2 + $0x8] sm:$0xff] %vm312, %v311
    %v315 = vld [vmem:[%s4] sm:$0xff]
    %v316 = vld [vmem:[%s4 + $0x8] sm:$0xff]
    %v317 = vld [vmem:[%s4 + $0x10] sm:$0xff]
    %v318 = vld [vmem:[%s4 + $0x18] sm:$0xff]
    %v319 = vld [vmem:[#allocation2] sm:$0xff]
    %v320 = vld [vmem:[#allocation2 + $0x8] sm:$0xff]
    %v321 = vld [vmem:[%s3] sm:$0xff]
    %v322 = vld [vmem:[%s3 + $0x8] sm:$0xff]
    %v323 = vld [vmem:[%s3 + $0x10] sm:$0xff]
    %v324 = vld [vmem:[%s3 + $0x18] sm:$0xff]
    %v325 = vld [vmem:[#allocation7] sm:$0x1]
    %v327 = vlaneseq
    %v328 = vshrl.u32 %v327, 7
    %v329 = vsub.s32 0, %v328
    %v330 = vrot.slane %v325, %v329
    %v333 = vsel %vm312, %v319, 0
    %v336 = vsel %vm312, %v320, 0
    %338 = vmatprep.subr.mxu0 0.0
    %339 = vmatpush1.msra.mxu0 0.0
    %340 = vmatprep.subr.mxu0 0.0
    %341 = vmatpush1.msra.mxu0 0.0
    %342 = vmatprep.subr.mxu0 0.0
    %343 = vmatpush1.msra.mxu0 0.0
    %344 = vmatprep.subr.mxu0 0.0
    %345 = vmatpush1.msra.mxu0 0.0
    %346 = vmatprep.subr.mxu0 0.0
    %347 = vmatpush1.msra.mxu0 0.0
    %348 = vmatprep.subr.mxu0 0.0
    %349 = vmatpush1.msra.mxu0 0.0
    %350 = vmatprep.subr.mxu0 0.0
    %351 = vmatpush1.msra.mxu0 0.0
    %352 = vmatprep.subr.mxu0 0.0
    %353 = vmatpush1.msra.mxu0 0.0
    %354 = vmatprep.subr.mxu0 0.0
    %355 = vmatpush1.msra.mxu0 0.0
    %356 = vmatprep.subr.mxu0 0.0
    %357 = vmatpush1.msra.mxu0 0.0
    %358 = vmatprep.subr.mxu0 0.0
    %359 = vmatpush1.msra.mxu0 0.0
    %360 = vmatprep.subr.mxu0 0.0
    %361 = vmatpush1.msra.mxu0 0.0
    %362 = vmatprep.subr.mxu0 0.0
    %363 = vmatpush1.msra.mxu0 %v324
    %364 = vmatprep.subr.mxu0 0.0
    %365 = vmatpush1.msra.mxu0 %v323
    %366 = vmatprep.subr.mxu0 0.0
    %367 = vmatpush1.msra.mxu0 %v322
    %368 = vmatprep.subr.mxu0 0.0
    %369 = vmatpush1.msra.mxu0 %v321
    %370 = vmatprep.subr.mxu0 0.0
    %371 = vmatpush2.msra.mxu0 0.0
    %372 = vmatprep.subr.mxu0 0.0
    %373 = vmatpush2.msra.mxu0 0.0
    %374 = vmatprep.subr.mxu0 0.0
    %375 = vmatpush2.msra.mxu0 0.0
    %376 = vmatprep.subr.mxu0 0.0
    %377 = vmatpush2.msra.mxu0 0.0
    %378 = vmatprep.subr.mxu0 0.0
    %379 = vmatpush2.msra.mxu0 0.0
    %380 = vmatprep.subr.mxu0 0.0
    %381 = vmatpush2.msra.mxu0 0.0
    %382 = vmatprep.subr.mxu0 0.0
    %383 = vmatpush2.msra.mxu0 0.0
    %384 = vmatprep.subr.mxu0 0.0
    %385 = vmatpush2.msra.mxu0 0.0
    %386 = vmatprep.subr.mxu0 0.0
    %387 = vmatpush2.msra.mxu0 0.0
    %388 = vmatprep.subr.mxu0 0.0
    %389 = vmatpush2.msra.mxu0 0.0
    %390 = vmatprep.subr.mxu0 0.0
    %391 = vmatpush2.msra.mxu0 0.0
    %392 = vmatprep.subr.mxu0 0.0
    %393 = vmatpush2.msra.mxu0 0.0
    %394 = vmatprep.subr.mxu0 0.0
    %395 = vmatpush2.msra.mxu0 0.0
    %396 = vmatprep.subr.mxu0 0.0
    %397 = vmatpush2.msra.mxu0 0.0
    %398 = vmatprep.subr.mxu0 0.0
    %399 = vmatpush2.msra.mxu0 0.0
    %400 = vmatprep.subr.mxu0 0.0
    %401 = vmatpush2.msra.mxu0 0.0
    %402 = vmatprep.mubr.f32.mxu0 0.0
    %403 = vmatmul.mubr.f32.gmra.mxu0 %v333
    %v404 = vpop.f32.mrf.mxu0
    %v405 = vadd.f32 %v330, %v404
    %v406 = vpop.f32.mrf.mxu0
    %407 = vmatprep.mubr.f32.mxu0 0.0
    %408 = vmatmul.mubr.f32.gmra.mxu0 %v336
    %v409 = vpop.f32.mrf.mxu0
    %v410 = vadd.f32 %v330, %v409
    %v411 = vpop.f32.mrf.mxu0
    %412 = vdwg.mxu0
    %413 = vst [vmem:[#allocation4] sm:$0xff] %v405
    %414 = vst [vmem:[#allocation4 + $0x8] sm:$0xff] %v410
    %v415 = vld [vmem:[#allocation4] sm:$0x3]
    %v417 = vsel %vm312, 0.0, 0
    %419 = vmatprep.subr.mxu0 0.0
    %420 = vmatpush1.msra.mxu0 0.0
    %421 = vmatprep.subr.mxu0 0.0
    %422 = vmatpush1.msra.mxu0 0.0
    %423 = vmatprep.subr.mxu0 0.0
    %424 = vmatpush1.msra.mxu0 0.0
    %425 = vmatprep.subr.mxu0 0.0
    %426 = vmatpush1.msra.mxu0 0.0
    %427 = vmatprep.subr.mxu0 0.0
    %428 = vmatpush1.msra.mxu0 0.0
    %429 = vmatprep.subr.mxu0 0.0
    %430 = vmatpush1.msra.mxu0 0.0
    %431 = vmatprep.subr.mxu0 0.0
    %432 = vmatpush1.msra.mxu0 0.0
    %433 = vmatprep.subr.mxu0 0.0
    %434 = vmatpush1.msra.mxu0 0.0
    %435 = vmatprep.subr.mxu0 0.0
    %436 = vmatpush1.msra.mxu0 0.0
    %437 = vmatprep.subr.mxu0 0.0
    %438 = vmatpush1.msra.mxu0 0.0
    %439 = vmatprep.subr.mxu0 0.0
    %440 = vmatpush1.msra.mxu0 0.0
    %441 = vmatprep.subr.mxu0 0.0
    %442 = vmatpush1.msra.mxu0 0.0
    %443 = vmatprep.subr.mxu0 0.0
    %444 = vmatpush1.msra.mxu0 %v318
    %445 = vmatprep.subr.mxu0 0.0
    %446 = vmatpush1.msra.mxu0 %v317
    %447 = vmatprep.subr.mxu0 0.0
    %448 = vmatpush1.msra.mxu0 %v316
    %449 = vmatprep.subr.mxu0 0.0
    %450 = vmatpush1.msra.mxu0 %v315
    %451 = vmatprep.subr.mxu0 0.0
    %452 = vmatpush2.msra.mxu0 0.0
    %453 = vmatprep.subr.mxu0 0.0
    %454 = vmatpush2.msra.mxu0 0.0
    %455 = vmatprep.subr.mxu0 0.0
    %456 = vmatpush2.msra.mxu0 0.0
    %457 = vmatprep.subr.mxu0 0.0
    %458 = vmatpush2.msra.mxu0 0.0
    %459 = vmatprep.subr.mxu0 0.0
    %460 = vmatpush2.msra.mxu0 0.0
    %461 = vmatprep.subr.mxu0 0.0
    %462 = vmatpush2.msra.mxu0 0.0
    %463 = vmatprep.subr.mxu0 0.0
    %464 = vmatpush2.msra.mxu0 0.0
    %465 = vmatprep.subr.mxu0 0.0
    %466 = vmatpush2.msra.mxu0 0.0
    %467 = vmatprep.subr.mxu0 0.0
    %468 = vmatpush2.msra.mxu0 0.0
    %469 = vmatprep.subr.mxu0 0.0
    %470 = vmatpush2.msra.mxu0 0.0
    %471 = vmatprep.subr.mxu0 0.0
    %472 = vmatpush2.msra.mxu0 0.0
    %473 = vmatprep.subr.mxu0 0.0
    %474 = vmatpush2.msra.mxu0 0.0
    %475 = vmatprep.subr.mxu0 0.0
    %476 = vmatpush2.msra.mxu0 0.0
    %477 = vmatprep.subr.mxu0 0.0
    %478 = vmatpush2.msra.mxu0 0.0
    %479 = vmatprep.subr.mxu0 0.0
    %480 = vmatpush2.msra.mxu0 0.0
    %481 = vmatprep.subr.mxu0 0.0
    %482 = vmatpush2.msra.mxu0 0.0
    %483 = vmatprep.mubr.f32.mxu0 0.0
    %484 = vmatmul.mubr.f32.gmra.mxu0 %v417
    %v485 = vpop.f32.mrf.mxu0
    %v486 = vadd.f32 0.0, %v485
    %v487 = vpop.f32.mrf.mxu0
    %488 = vdwg.mxu0
    %v489 = vadd.f32 %v415, %v486
    %v490 = vxor.u32 %v489, 2147483648
    %v491 = vmul.f32 %v490, 1.442695
    %v492 = vpow.pop %v491
    %v493 = vadd.f32 %v492, 1.0
    %v494 = vrcp.pop %v493
    %v495 = vmul.f32 1.0, %v494
    %v496 = vtanh.pop %v489
    %v497 = vmul.f32 %v495, 0.0
    %499 = vrot.lane.b32.xlu0 %v496, 64
    %v500 = vpop.permute.xlu0 %499
    %v502 = vmul.f32 %v495, %v500
    %504 = vrot.lane.b32.xlu0 %v502, 32
    %v505 = vpop.permute.xlu0 %504
    %v507 = vadd.f32 %v497, %v505
    %v508 = vtanh.pop %v507
    %510 = vrot.lane.b32.xlu0 %v508, 64
    %v511 = vpop.permute.xlu0 %510
    %v513 = vmul.f32 %v495, %v511
    %515 = vrot.lane.b32.xlu0 %v513, 32
    %v516 = vpop.permute.xlu0 %515
    %vm518 = vcmask 254976
    %519 = vst.msk [vmem:[#allocation3] sm:$0x3] %vm518, %v516
    %v520 = vld [vmem:[#allocation4 + $0x2] sm:$0x3]
    %v521 = vsel %vm312, %v516, 0
    %523 = vmatprep.subr.mxu0 0.0
    %524 = vmatpush1.msra.mxu0 0.0
    %525 = vmatprep.subr.mxu0 0.0
    %526 = vmatpush1.msra.mxu0 0.0
    %527 = vmatprep.subr.mxu0 0.0
    %528 = vmatpush1.msra.mxu0 0.0
    %529 = vmatprep.subr.mxu0 0.0
    %530 = vmatpush1.msra.mxu0 0.0
    %531 = vmatprep.subr.mxu0 0.0
    %532 = vmatpush1.msra.mxu0 0.0
    %533 = vmatprep.subr.mxu0 0.0
    %534 = vmatpush1.msra.mxu0 0.0
    %535 = vmatprep.subr.mxu0 0.0
    %536 = vmatpush1.msra.mxu0 0.0
    %537 = vmatprep.subr.mxu0 0.0
    %538 = vmatpush1.msra.mxu0 0.0
    %539 = vmatprep.subr.mxu0 0.0
    %540 = vmatpush1.msra.mxu0 0.0
    %541 = vmatprep.subr.mxu0 0.0
    %542 = vmatpush1.msra.mxu0 0.0
    %543 = vmatprep.subr.mxu0 0.0
    %544 = vmatpush1.msra.mxu0 0.0
    %545 = vmatprep.subr.mxu0 0.0
    %546 = vmatpush1.msra.mxu0 0.0
    %547 = vmatprep.subr.mxu0 0.0
    %548 = vmatpush1.msra.mxu0 %v318
    %549 = vmatprep.subr.mxu0 0.0
    %550 = vmatpush1.msra.mxu0 %v317
    %551 = vmatprep.subr.mxu0 0.0
    %552 = vmatpush1.msra.mxu0 %v316
    %553 = vmatprep.subr.mxu0 0.0
    %554 = vmatpush1.msra.mxu0 %v315
    %555 = vmatprep.subr.mxu0 0.0
    %556 = vmatpush2.msra.mxu0 0.0
    %557 = vmatprep.subr.mxu0 0.0
    %558 = vmatpush2.msra.mxu0 0.0
    %559 = vmatprep.subr.mxu0 0.0
    %560 = vmatpush2.msra.mxu0 0.0
    %561 = vmatprep.subr.mxu0 0.0
    %562 = vmatpush2.msra.mxu0 0.0
    %563 = vmatprep.subr.mxu0 0.0
    %564 = vmatpush2.msra.mxu0 0.0
    %565 = vmatprep.subr.mxu0 0.0
    %566 = vmatpush2.msra.mxu0 0.0
    %567 = vmatprep.subr.mxu0 0.0
    %568 = vmatpush2.msra.mxu0 0.0
    %569 = vmatprep.subr.mxu0 0.0
    %570 = vmatpush2.msra.mxu0 0.0
    %571 = vmatprep.subr.mxu0 0.0
    %572 = vmatpush2.msra.mxu0 0.0
    %573 = vmatprep.subr.mxu0 0.0
    %574 = vmatpush2.msra.mxu0 0.0
    %575 = vmatprep.subr.mxu0 0.0
    %576 = vmatpush2.msra.mxu0 0.0
    %577 = vmatprep.subr.mxu0 0.0
    %578 = vmatpush2.msra.mxu0 0.0
    %579 = vmatprep.subr.mxu0 0.0
    %580 = vmatpush2.msra.mxu0 0.0
    %581 = vmatprep.subr.mxu0 0.0
    %582 = vmatpush2.msra.mxu0 0.0
    %583 = vmatprep.subr.mxu0 0.0
    %584 = vmatpush2.msra.mxu0 0.0
    %585 = vmatprep.subr.mxu0 0.0
    %586 = vmatpush2.msra.mxu0 0.0
    %587 = vmatprep.mubr.f32.mxu0 0.0
    %588 = vmatmul.mubr.f32.gmra.mxu0 %v521
    %v589 = vpop.f32.mrf.mxu0
    %v590 = vadd.f32 0.0, %v589
    %v591 = vpop.f32.mrf.mxu0
    %592 = vdwg.mxu0
    %v593 = vadd.f32 %v520, %v590
    %v594 = vxor.u32 %v593, 2147483648
    %v595 = vmul.f32 %v594, 1.442695
    %v596 = vpow.pop %v595
    %v597 = vadd.f32 %v596, 1.0
    %v598 = vrcp.pop %v597
    %v599 = vmul.f32 1.0, %v598
    %v600 = vtanh.pop %v593
    %v601 = vmul.f32 %v599, %v507
    %603 = vrot.lane.b32.xlu0 %v600, 64
    %v604 = vpop.permute.xlu0 %603
    %v606 = vmul.f32 %v599, %v604
    %608 = vrot.lane.b32.xlu0 %v606, 32
    %v609 = vpop.permute.xlu0 %608
    %v611 = vadd.f32 %v601, %v609
    %v612 = vtanh.pop %v611
    %614 = vrot.lane.b32.xlu0 %v612, 64
    %v615 = vpop.permute.xlu0 %614
    %v617 = vmul.f32 %v599, %v615
    %619 = vrot.lane.b32.xlu0 %v617, 32
    %v620 = vpop.permute.xlu0 %619
    %622 = vst.msk [vmem:[#allocation3 + $0x2] sm:$0x3] %vm518, %v620
    %v623 = vld [vmem:[#allocation4 + $0x4] sm:$0x3]
    %v624 = vsel %vm312, %v620, 0
    %626 = vmatprep.subr.mxu0 0.0
    %627 = vmatpush1.msra.mxu0 0.0
    %628 = vmatprep.subr.mxu0 0.0
    %629 = vmatpush1.msra.mxu0 0.0
    %630 = vmatprep.subr.mxu0 0.0
    %631 = vmatpush1.msra.mxu0 0.0
    %632 = vmatprep.subr.mxu0 0.0
    %633 = vmatpush1.msra.mxu0 0.0
    %634 = vmatprep.subr.mxu0 0.0
    %635 = vmatpush1.msra.mxu0 0.0
    %636 = vmatprep.subr.mxu0 0.0
    %637 = vmatpush1.msra.mxu0 0.0
    %638 = vmatprep.subr.mxu0 0.0
    %639 = vmatpush1.msra.mxu0 0.0
    %640 = vmatprep.subr.mxu0 0.0
    %641 = vmatpush1.msra.mxu0 0.0
    %642 = vmatprep.subr.mxu0 0.0
    %643 = vmatpush1.msra.mxu0 0.0
    %644 = vmatprep.subr.mxu0 0.0
    %645 = vmatpush1.msra.mxu0 0.0
    %646 = vmatprep.subr.mxu0 0.0
    %647 = vmatpush1.msra.mxu0 0.0
    %648 = vmatprep.subr.mxu0 0.0
    %649 = vmatpush1.msra.mxu0 0.0
    %650 = vmatprep.subr.mxu0 0.0
    %651 = vmatpush1.msra.mxu0 %v318
    %652 = vmatprep.subr.mxu0 0.0
    %653 = vmatpush1.msra.mxu0 %v317
    %654 = vmatprep.subr.mxu0 0.0
    %655 = vmatpush1.msra.mxu0 %v316
    %656 = vmatprep.subr.mxu0 0.0
    %657 = vmatpush1.msra.mxu0 %v315
    %658 = vmatprep.subr.mxu0 0.0
    %659 = vmatpush2.msra.mxu0 0.0
    %660 = vmatprep.subr.mxu0 0.0
    %661 = vmatpush2.msra.mxu0 0.0
    %662 = vmatprep.subr.mxu0 0.0
    %663 = vmatpush2.msra.mxu0 0.0
    %664 = vmatprep.subr.mxu0 0.0
    %665 = vmatpush2.msra.mxu0 0.0
    %666 = vmatprep.subr.mxu0 0.0
    %667 = vmatpush2.msra.mxu0 0.0
    %668 = vmatprep.subr.mxu0 0.0
    %669 = vmatpush2.msra.mxu0 0.0
    %670 = vmatprep.subr.mxu0 0.0
    %671 = vmatpush2.msra.mxu0 0.0
    %672 = vmatprep.subr.mxu0 0.0
    %673 = vmatpush2.msra.mxu0 0.0
    %674 = vmatprep.subr.mxu0 0.0
    %675 = vmatpush2.msra.mxu0 0.0
    %676 = vmatprep.subr.mxu0 0.0
    %677 = vmatpush2.msra.mxu0 0.0
    %678 = vmatprep.subr.mxu0 0.0
    %679 = vmatpush2.msra.mxu0 0.0
    %680 = vmatprep.subr.mxu0 0.0
    %681 = vmatpush2.msra.mxu0 0.0
    %682 = vmatprep.subr.mxu0 0.0
    %683 = vmatpush2.msra.mxu0 0.0
    %684 = vmatprep.subr.mxu0 0.0
    %685 = vmatpush2.msra.mxu0 0.0
    %686 = vmatprep.subr.mxu0 0.0
    %687 = vmatpush2.msra.mxu0 0.0
    %688 = vmatprep.subr.mxu0 0.0
    %689 = vmatpush2.msra.mxu0 0.0
    %690 = vmatprep.mubr.f32.mxu0 0.0
    %691 = vmatmul.mubr.f32.gmra.mxu0 %v624
    %v692 = vpop.f32.mrf.mxu0
    %v693 = vadd.f32 0.0, %v692
    %v694 = vpop.f32.mrf.mxu0
    %695 = vdwg.mxu0
    %v696 = vadd.f32 %v623, %v693
    %v697 = vxor.u32 %v696, 2147483648
    %v698 = vmul.f32 %v697, 1.442695
    %v699 = vpow.pop %v698
    %v700 = vadd.f32 %v699, 1.0
    %v701 = vrcp.pop %v700
    %v702 = vmul.f32 1.0, %v701
    %v703 = vtanh.pop %v696
    %v704 = vmul.f32 %v702, %v611
    %706 = vrot.lane.b32.xlu0 %v703, 64
    %v707 = vpop.permute.xlu0 %706
    %v709 = vmul.f32 %v702, %v707
    %711 = vrot.lane.b32.xlu0 %v709, 32
    %v712 = vpop.permute.xlu0 %711
    %v714 = vadd.f32 %v704, %v712
    %v715 = vtanh.pop %v714
    %717 = vrot.lane.b32.xlu0 %v715, 64
    %v718 = vpop.permute.xlu0 %717
    %v720 = vmul.f32 %v702, %v718
    %722 = vrot.lane.b32.xlu0 %v720, 32
    %v723 = vpop.permute.xlu0 %722
    %725 = vst.msk [vmem:[#allocation3 + $0x4] sm:$0x3] %vm518, %v723
    %v726 = vld [vmem:[#allocation4 + $0x6] sm:$0x3]
    %v727 = vsel %vm312, %v723, 0
    %729 = vmatprep.subr.mxu0 0.0
    %730 = vmatpush1.msra.mxu0 0.0
    %731 = vmatprep.subr.mxu0 0.0
    %732 = vmatpush1.msra.mxu0 0.0
    %733 = vmatprep.subr.mxu0 0.0
    %734 = vmatpush1.msra.mxu0 0.0
    %735 = vmatprep.subr.mxu0 0.0
    %736 = vmatpush1.msra.mxu0 0.0
    %737 = vmatprep.subr.mxu0 0.0
    %738 = vmatpush1.msra.mxu0 0.0
    %739 = vmatprep.subr.mxu0 0.0
    %740 = vmatpush1.msra.mxu0 0.0
    %741 = vmatprep.subr.mxu0 0.0
    %742 = vmatpush1.msra.mxu0 0.0
    %743 = vmatprep.subr.mxu0 0.0
    %744 = vmatpush1.msra.mxu0 0.0
    %745 = vmatprep.subr.mxu0 0.0
    %746 = vmatpush1.msra.mxu0 0.0
    %747 = vmatprep.subr.mxu0 0.0
    %748 = vmatpush1.msra.mxu0 0.0
    %749 = vmatprep.subr.mxu0 0.0
    %750 = vmatpush1.msra.mxu0 0.0
    %751 = vmatprep.subr.mxu0 0.0
    %752 = vmatpush1.msra.mxu0 0.0
    %753 = vmatprep.subr.mxu0 0.0
    %754 = vmatpush1.msra.mxu0 %v318
    %755 = vmatprep.subr.mxu0 0.0
    %756 = vmatpush1.msra.mxu0 %v317
    %757 = vmatprep.subr.mxu0 0.0
    %758 = vmatpush1.msra.mxu0 %v316
    %759 = vmatprep.subr.mxu0 0.0
    %760 = vmatpush1.msra.mxu0 %v315
    %761 = vmatprep.subr.mxu0 0.0
    %762 = vmatpush2.msra.mxu0 0.0
    %763 = vmatprep.subr.mxu0 0.0
    %764 = vmatpush2.msra.mxu0 0.0
    %765 = vmatprep.subr.mxu0 0.0
    %766 = vmatpush2.msra.mxu0 0.0
    %767 = vmatprep.subr.mxu0 0.0
    %768 = vmatpush2.msra.mxu0 0.0
    %769 = vmatprep.subr.mxu0 0.0
    %770 = vmatpush2.msra.mxu0 0.0
    %771 = vmatprep.subr.mxu0 0.0
    %772 = vmatpush2.msra.mxu0 0.0
    %773 = vmatprep.subr.mxu0 0.0
    %774 = vmatpush2.msra.mxu0 0.0
    %775 = vmatprep.subr.mxu0 0.0
    %776 = vmatpush2.msra.mxu0 0.0
    %777 = vmatprep.subr.mxu0 0.0
    %778 = vmatpush2.msra.mxu0 0.0
    %779 = vmatprep.subr.mxu0 0.0
    %780 = vmatpush2.msra.mxu0 0.0
    %781 = vmatprep.subr.mxu0 0.0
    %782 = vmatpush2.msra.mxu0 0.0
    %783 = vmatprep.subr.mxu0 0.0
    %784 = vmatpush2.msra.mxu0 0.0
    %785 = vmatprep.subr.mxu0 0.0
    %786 = vmatpush2.msra.mxu0 0.0
    %787 = vmatprep.subr.mxu0 0.0
    %788 = vmatpush2.msra.mxu0 0.0
    %789 = vmatprep.subr.mxu0 0.0
    %790 = vmatpush2.msra.mxu0 0.0
    %791 = vmatprep.subr.mxu0 0.0
    %792 = vmatpush2.msra.mxu0 0.0
    %793 = vmatprep.mubr.f32.mxu0 0.0
    %794 = vmatmul.mubr.f32.gmra.mxu0 %v727
    %v795 = vpop.f32.mrf.mxu0
    %v796 = vadd.f32 0.0, %v795
    %v797 = vpop.f32.mrf.mxu0
    %798 = vdwg.mxu0
    %v799 = vadd.f32 %v726, %v796
    %v800 = vxor.u32 %v799, 2147483648
    %v801 = vmul.f32 %v800, 1.442695
    %v802 = vpow.pop %v801
    %v803 = vadd.f32 %v802, 1.0
    %v804 = vrcp.pop %v803
    %v805 = vmul.f32 1.0, %v804
    %v806 = vtanh.pop %v799
    %v807 = vmul.f32 %v805, %v714
    %809 = vrot.lane.b32.xlu0 %v806, 64
    %v810 = vpop.permute.xlu0 %809
    %v812 = vmul.f32 %v805, %v810
    %814 = vrot.lane.b32.xlu0 %v812, 32
    %v815 = vpop.permute.xlu0 %814
    %v817 = vadd.f32 %v807, %v815
    %v818 = vtanh.pop %v817
    %820 = vrot.lane.b32.xlu0 %v818, 64
    %v821 = vpop.permute.xlu0 %820
    %v823 = vmul.f32 %v805, %v821
    %825 = vrot.lane.b32.xlu0 %v823, 32
    %v826 = vpop.permute.xlu0 %825
    %828 = vst.msk [vmem:[#allocation3 + $0x6] sm:$0x3] %vm518, %v826
    %v829 = vld [vmem:[#allocation4 + $0x8] sm:$0x3]
    %v830 = vsel %vm312, %v826, 0
    %832 = vmatprep.subr.mxu0 0.0
    %833 = vmatpush1.msra.mxu0 0.0
    %834 = vmatprep.subr.mxu0 0.0
    %835 = vmatpush1.msra.mxu0 0.0
    %836 = vmatprep.subr.mxu0 0.0
    %837 = vmatpush1.msra.mxu0 0.0
    %838 = vmatprep.subr.mxu0 0.0
    %839 = vmatpush1.msra.mxu0 0.0
    %840 = vmatprep.subr.mxu0 0.0
    %841 = vmatpush1.msra.mxu0 0.0
    %842 = vmatprep.subr.mxu0 0.0
    %843 = vmatpush1.msra.mxu0 0.0
    %844 = vmatprep.subr.mxu0 0.0
    %845 = vmatpush1.msra.mxu0 0.0
    %846 = vmatprep.subr.mxu0 0.0
    %847 = vmatpush1.msra.mxu0 0.0
    %848 = vmatprep.subr.mxu0 0.0
    %849 = vmatpush1.msra.mxu0 0.0
    %850 = vmatprep.subr.mxu0 0.0
    %851 = vmatpush1.msra.mxu0 0.0
    %852 = vmatprep.subr.mxu0 0.0
    %853 = vmatpush1.msra.mxu0 0.0
    %854 = vmatprep.subr.mxu0 0.0
    %855 = vmatpush1.msra.mxu0 0.0
    %856 = vmatprep.subr.mxu0 0.0
    %857 = vmatpush1.msra.mxu0 %v318
    %858 = vmatprep.subr.mxu0 0.0
    %859 = vmatpush1.msra.mxu0 %v317
    %860 = vmatprep.subr.mxu0 0.0
    %861 = vmatpush1.msra.mxu0 %v316
    %862 = vmatprep.subr.mxu0 0.0
    %863 = vmatpush1.msra.mxu0 %v315
    %864 = vmatprep.subr.mxu0 0.0
    %865 = vmatpush2.msra.mxu0 0.0
    %866 = vmatprep.subr.mxu0 0.0
    %867 = vmatpush2.msra.mxu0 0.0
    %868 = vmatprep.subr.mxu0 0.0
    %869 = vmatpush2.msra.mxu0 0.0
    %870 = vmatprep.subr.mxu0 0.0
    %871 = vmatpush2.msra.mxu0 0.0
    %872 = vmatprep.subr.mxu0 0.0
    %873 = vmatpush2.msra.mxu0 0.0
    %874 = vmatprep.subr.mxu0 0.0
    %875 = vmatpush2.msra.mxu0 0.0
    %876 = vmatprep.subr.mxu0 0.0
    %877 = vmatpush2.msra.mxu0 0.0
    %878 = vmatprep.subr.mxu0 0.0
    %879 = vmatpush2.msra.mxu0 0.0
    %880 = vmatprep.subr.mxu0 0.0
    %881 = vmatpush2.msra.mxu0 0.0
    %882 = vmatprep.subr.mxu0 0.0
    %883 = vmatpush2.msra.mxu0 0.0
    %884 = vmatprep.subr.mxu0 0.0
    %885 = vmatpush2.msra.mxu0 0.0
    %886 = vmatprep.subr.mxu0 0.0
    %887 = vmatpush2.msra.mxu0 0.0
    %888 = vmatprep.subr.mxu0 0.0
    %889 = vmatpush2.msra.mxu0 0.0
    %890 = vmatprep.subr.mxu0 0.0
    %891 = vmatpush2.msra.mxu0 0.0
    %892 = vmatprep.subr.mxu0 0.0
    %893 = vmatpush2.msra.mxu0 0.0
    %894 = vmatprep.subr.mxu0 0.0
    %895 = vmatpush2.msra.mxu0 0.0
    %896 = vmatprep.mubr.f32.mxu0 0.0
    %897 = vmatmul.mubr.f32.gmra.mxu0 %v830
    %v898 = vpop.f32.mrf.mxu0
    %v899 = vadd.f32 0.0, %v898
    %v900 = vpop.f32.mrf.mxu0
    %901 = vdwg.mxu0
    %v902 = vadd.f32 %v829, %v899
    %v903 = vxor.u32 %v902, 2147483648
    %v904 = vmul.f32 %v903, 1.442695
    %v905 = vpow.pop %v904
    %v906 = vadd.f32 %v905, 1.0
    %v907 = vrcp.pop %v906
    %v908 = vmul.f32 1.0, %v907
    %v909 = vtanh.pop %v902
    %v910 = vmul.f32 %v908, %v817
    %912 = vrot.lane.b32.xlu0 %v909, 64
    %v913 = vpop.permute.xlu0 %912
    %v915 = vmul.f32 %v908, %v913
    %917 = vrot.lane.b32.xlu0 %v915, 32
    %v918 = vpop.permute.xlu0 %917
    %v920 = vadd.f32 %v910, %v918
    %v921 = vtanh.pop %v920
    %923 = vrot.lane.b32.xlu0 %v921, 64
    %v924 = vpop.permute.xlu0 %923
    %v926 = vmul.f32 %v908, %v924
    %928 = vrot.lane.b32.xlu0 %v926, 32
    %v929 = vpop.permute.xlu0 %928
    %931 = vst.msk [vmem:[#allocation3 + $0x8] sm:$0x3] %vm518, %v929
    %v932 = vld [vmem:[#allocation4 + $0xa] sm:$0x3]
    %v933 = vsel %vm312, %v929, 0
    %935 = vmatprep.subr.mxu0 0.0
    %936 = vmatpush1.msra.mxu0 0.0
    %937 = vmatprep.subr.mxu0 0.0
    %938 = vmatpush1.msra.mxu0 0.0
    %939 = vmatprep.subr.mxu0 0.0
    %940 = vmatpush1.msra.mxu0 0.0
    %941 = vmatprep.subr.mxu0 0.0
    %942 = vmatpush1.msra.mxu0 0.0
    %943 = vmatprep.subr.mxu0 0.0
    %944 = vmatpush1.msra.mxu0 0.0
    %945 = vmatprep.subr.mxu0 0.0
    %946 = vmatpush1.msra.mxu0 0.0
    %947 = vmatprep.subr.mxu0 0.0
    %948 = vmatpush1.msra.mxu0 0.0
    %949 = vmatprep.subr.mxu0 0.0
    %950 = vmatpush1.msra.mxu0 0.0
    %951 = vmatprep.subr.mxu0 0.0
    %952 = vmatpush1.msra.mxu0 0.0
    %953 = vmatprep.subr.mxu0 0.0
    %954 = vmatpush1.msra.mxu0 0.0
    %955 = vmatprep.subr.mxu0 0.0
    %956 = vmatpush1.msra.mxu0 0.0
    %957 = vmatprep.subr.mxu0 0.0
    %958 = vmatpush1.msra.mxu0 0.0
    %959 = vmatprep.subr.mxu0 0.0
    %960 = vmatpush1.msra.mxu0 %v318
    %961 = vmatprep.subr.mxu0 0.0
    %962 = vmatpush1.msra.mxu0 %v317
    %963 = vmatprep.subr.mxu0 0.0
    %964 = vmatpush1.msra.mxu0 %v316
    %965 = vmatprep.subr.mxu0 0.0
    %966 = vmatpush1.msra.mxu0 %v315
    %967 = vmatprep.subr.mxu0 0.0
    %968 = vmatpush2.msra.mxu0 0.0
    %969 = vmatprep.subr.mxu0 0.0
    %970 = vmatpush2.msra.mxu0 0.0
    %971 = vmatprep.subr.mxu0 0.0
    %972 = vmatpush2.msra.mxu0 0.0
    %973 = vmatprep.subr.mxu0 0.0
    %974 = vmatpush2.msra.mxu0 0.0
    %975 = vmatprep.subr.mxu0 0.0
    %976 = vmatpush2.msra.mxu0 0.0
    %977 = vmatprep.subr.mxu0 0.0
    %978 = vmatpush2.msra.mxu0 0.0
    %979 = vmatprep.subr.mxu0 0.0
    %980 = vmatpush2.msra.mxu0 0.0
    %981 = vmatprep.subr.mxu0 0.0
    %982 = vmatpush2.msra.mxu0 0.0
    %983 = vmatprep.subr.mxu0 0.0
    %984 = vmatpush2.msra.mxu0 0.0
    %985 = vmatprep.subr.mxu0 0.0
    %986 = vmatpush2.msra.mxu0 0.0
    %987 = vmatprep.subr.mxu0 0.0
    %988 = vmatpush2.msra.mxu0 0.0
    %989 = vmatprep.subr.mxu0 0.0
    %990 = vmatpush2.msra.mxu0 0.0
    %991 = vmatprep.subr.mxu0 0.0
    %992 = vmatpush2.msra.mxu0 0.0
    %993 = vmatprep.subr.mxu0 0.0
    %994 = vmatpush2.msra.mxu0 0.0
    %995 = vmatprep.subr.mxu0 0.0
    %996 = vmatpush2.msra.mxu0 0.0
    %997 = vmatprep.subr.mxu0 0.0
    %998 = vmatpush2.msra.mxu0 0.0
    %999 = vmatprep.mubr.f32.mxu0 0.0
    %1000 = vmatmul.mubr.f32.gmra.mxu0 %v933
    %v1001 = vpop.f32.mrf.mxu0
    %v1002 = vadd.f32 0.0, %v1001
    %v1003 = vpop.f32.mrf.mxu0
    %1004 = vdwg.mxu0
    %v1005 = vadd.f32 %v932, %v1002
    %v1006 = vxor.u32 %v1005, 2147483648
    %v1007 = vmul.f32 %v1006, 1.442695
    %v1008 = vpow.pop %v1007
    %v1009 = vadd.f32 %v1008, 1.0
    %v1010 = vrcp.pop %v1009
    %v1011 = vmul.f32 1.0, %v1010
    %v1012 = vtanh.pop %v1005
    %v1013 = vmul.f32 %v1011, %v920
    %1015 = vrot.lane.b32.xlu0 %v1012, 64
    %v1016 = vpop.permute.xlu0 %1015
    %v1018 = vmul.f32 %v1011, %v1016
    %1020 = vrot.lane.b32.xlu0 %v1018, 32
    %v1021 = vpop.permute.xlu0 %1020
    %v1023 = vadd.f32 %v1013, %v1021
    %v1024 = vtanh.pop %v1023
    %1026 = vrot.lane.b32.xlu0 %v1024, 64
    %v1027 = vpop.permute.xlu0 %1026
    %v1029 = vmul.f32 %v1011, %v1027
    %1031 = vrot.lane.b32.xlu0 %v1029, 32
    %v1032 = vpop.permute.xlu0 %1031
    %1034 = vst.msk [vmem:[#allocation3 + $0xa] sm:$0x3] %vm518, %v1032
    %v1035 = vld [vmem:[#allocation4 + $0xc] sm:$0x3]
    %v1036 = vsel %vm312, %v1032, 0
    %1038 = vmatprep.subr.mxu0 0.0
    %1039 = vmatpush1.msra.mxu0 0.0
    %1040 = vmatprep.subr.mxu0 0.0
    %1041 = vmatpush1.msra.mxu0 0.0
    %1042 = vmatprep.subr.mxu0 0.0
    %1043 = vmatpush1.msra.mxu0 0.0
    %1044 = vmatprep.subr.mxu0 0.0
    %1045 = vmatpush1.msra.mxu0 0.0
    %1046 = vmatprep.subr.mxu0 0.0
    %1047 = vmatpush1.msra.mxu0 0.0
    %1048 = vmatprep.subr.mxu0 0.0
    %1049 = vmatpush1.msra.mxu0 0.0
    %1050 = vmatprep.subr.mxu0 0.0
    %1051 = vmatpush1.msra.mxu0 0.0
    %1052 = vmatprep.subr.mxu0 0.0
    %1053 = vmatpush1.msra.mxu0 0.0
    %1054 = vmatprep.subr.mxu0 0.0
    %1055 = vmatpush1.msra.mxu0 0.0
    %1056 = vmatprep.subr.mxu0 0.0
    %1057 = vmatpush1.msra.mxu0 0.0
    %1058 = vmatprep.subr.mxu0 0.0
    %1059 = vmatpush1.msra.mxu0 0.0
    %1060 = vmatprep.subr.mxu0 0.0
    %1061 = vmatpush1.msra.mxu0 0.0
    %1062 = vmatprep.subr.mxu0 0.0
    %1063 = vmatpush1.msra.mxu0 %v318
    %1064 = vmatprep.subr.mxu0 0.0
    %1065 = vmatpush1.msra.mxu0 %v317
    %1066 = vmatprep.subr.mxu0 0.0
    %1067 = vmatpush1.msra.mxu0 %v316
    %1068 = vmatprep.subr.mxu0 0.0
    %1069 = vmatpush1.msra.mxu0 %v315
    %1070 = vmatprep.subr.mxu0 0.0
    %1071 = vmatpush2.msra.mxu0 0.0
    %1072 = vmatprep.subr.mxu0 0.0
    %1073 = vmatpush2.msra.mxu0 0.0
    %1074 = vmatprep.subr.mxu0 0.0
    %1075 = vmatpush2.msra.mxu0 0.0
    %1076 = vmatprep.subr.mxu0 0.0
    %1077 = vmatpush2.msra.mxu0 0.0
    %1078 = vmatprep.subr.mxu0 0.0
    %1079 = vmatpush2.msra.mxu0 0.0
    %1080 = vmatprep.subr.mxu0 0.0
    %1081 = vmatpush2.msra.mxu0 0.0
    %1082 = vmatprep.subr.mxu0 0.0
    %1083 = vmatpush2.msra.mxu0 0.0
    %1084 = vmatprep.subr.mxu0 0.0
    %1085 = vmatpush2.msra.mxu0 0.0
    %1086 = vmatprep.subr.mxu0 0.0
    %1087 = vmatpush2.msra.mxu0 0.0
    %1088 = vmatprep.subr.mxu0 0.0
    %1089 = vmatpush2.msra.mxu0 0.0
    %1090 = vmatprep.subr.mxu0 0.0
    %1091 = vmatpush2.msra.mxu0 0.0
    %1092 = vmatprep.subr.mxu0 0.0
    %1093 = vmatpush2.msra.mxu0 0.0
    %1094 = vmatprep.subr.mxu0 0.0
    %1095 = vmatpush2.msra.mxu0 0.0
    %1096 = vmatprep.subr.mxu0 0.0
    %1097 = vmatpush2.msra.mxu0 0.0
    %1098 = vmatprep.subr.mxu0 0.0
    %1099 = vmatpush2.msra.mxu0 0.0
    %1100 = vmatprep.subr.mxu0 0.0
    %1101 = vmatpush2.msra.mxu0 0.0
    %1102 = vmatprep.mubr.f32.mxu0 0.0
    %1103 = vmatmul.mubr.f32.gmra.mxu0 %v1036
    %v1104 = vpop.f32.mrf.mxu0
    %v1105 = vadd.f32 0.0, %v1104
    %v1106 = vpop.f32.mrf.mxu0
    %1107 = vdwg.mxu0
    %v1108 = vadd.f32 %v1035, %v1105
    %v1109 = vxor.u32 %v1108, 2147483648
    %v1110 = vmul.f32 %v1109, 1.442695
    %v1111 = vpow.pop %v1110
    %v1112 = vadd.f32 %v1111, 1.0
    %v1113 = vrcp.pop %v1112
    %v1114 = vmul.f32 1.0, %v1113
    %v1115 = vtanh.pop %v1108
    %v1116 = vmul.f32 %v1114, %v1023
    %1118 = vrot.lane.b32.xlu0 %v1115, 64
    %v1119 = vpop.permute.xlu0 %1118
    %v1121 = vmul.f32 %v1114, %v1119
    %1123 = vrot.lane.b32.xlu0 %v1121, 32
    %v1124 = vpop.permute.xlu0 %1123
    %v1126 = vadd.f32 %v1116, %v1124
    %v1127 = vtanh.pop %v1126
    %1129 = vrot.lane.b32.xlu0 %v1127, 64
    %v1130 = vpop.permute.xlu0 %1129
    %v1132 = vmul.f32 %v1114, %v1130
    %1134 = vrot.lane.b32.xlu0 %v1132, 32
    %v1135 = vpop.permute.xlu0 %1134
    %1137 = vst.msk [vmem:[#allocation3 + $0xc] sm:$0x3] %vm518, %v1135
    %v1138 = vld [vmem:[#allocation4 + $0xe] sm:$0x3]
    %v1139 = vsel %vm312, %v1135, 0
    %1141 = vmatprep.subr.mxu0 0.0
    %1142 = vmatpush1.msra.mxu0 0.0
    %1143 = vmatprep.subr.mxu0 0.0
    %1144 = vmatpush1.msra.mxu0 0.0
    %1145 = vmatprep.subr.mxu0 0.0
    %1146 = vmatpush1.msra.mxu0 0.0
    %1147 = vmatprep.subr.mxu0 0.0
    %1148 = vmatpush1.msra.mxu0 0.0
    %1149 = vmatprep.subr.mxu0 0.0
    %1150 = vmatpush1.msra.mxu0 0.0
    %1151 = vmatprep.subr.mxu0 0.0
    %1152 = vmatpush1.msra.mxu0 0.0
    %1153 = vmatprep.subr.mxu0 0.0
    %1154 = vmatpush1.msra.mxu0 0.0
    %1155 = vmatprep.subr.mxu0 0.0
    %1156 = vmatpush1.msra.mxu0 0.0
    %1157 = vmatprep.subr.mxu0 0.0
    %1158 = vmatpush1.msra.mxu0 0.0
    %1159 = vmatprep.subr.mxu0 0.0
    %1160 = vmatpush1.msra.mxu0 0.0
    %1161 = vmatprep.subr.mxu0 0.0
    %1162 = vmatpush1.msra.mxu0 0.0
    %1163 = vmatprep.subr.mxu0 0.0
    %1164 = vmatpush1.msra.mxu0 0.0
    %1165 = vmatprep.subr.mxu0 0.0
    %1166 = vmatpush1.msra.mxu0 %v318
    %1167 = vmatprep.subr.mxu0 0.0
    %1168 = vmatpush1.msra.mxu0 %v317
    %1169 = vmatprep.subr.mxu0 0.0
    %1170 = vmatpush1.msra.mxu0 %v316
    %1171 = vmatprep.subr.mxu0 0.0
    %1172 = vmatpush1.msra.mxu0 %v315
    %1173 = vmatprep.subr.mxu0 0.0
    %1174 = vmatpush2.msra.mxu0 0.0
    %1175 = vmatprep.subr.mxu0 0.0
    %1176 = vmatpush2.msra.mxu0 0.0
    %1177 = vmatprep.subr.mxu0 0.0
    %1178 = vmatpush2.msra.mxu0 0.0
    %1179 = vmatprep.subr.mxu0 0.0
    %1180 = vmatpush2.msra.mxu0 0.0
    %1181 = vmatprep.subr.mxu0 0.0
    %1182 = vmatpush2.msra.mxu0 0.0
    %1183 = vmatprep.subr.mxu0 0.0
    %1184 = vmatpush2.msra.mxu0 0.0
    %1185 = vmatprep.subr.mxu0 0.0
    %1186 = vmatpush2.msra.mxu0 0.0
    %1187 = vmatprep.subr.mxu0 0.0
    %1188 = vmatpush2.msra.mxu0 0.0
    %1189 = vmatprep.subr.mxu0 0.0
    %1190 = vmatpush2.msra.mxu0 0.0
    %1191 = vmatprep.subr.mxu0 0.0
    %1192 = vmatpush2.msra.mxu0 0.0
    %1193 = vmatprep.subr.mxu0 0.0
    %1194 = vmatpush2.msra.mxu0 0.0
    %1195 = vmatprep.subr.mxu0 0.0
    %1196 = vmatpush2.msra.mxu0 0.0
    %1197 = vmatprep.subr.mxu0 0.0
    %1198 = vmatpush2.msra.mxu0 0.0
    %1199 = vmatprep.subr.mxu0 0.0
    %1200 = vmatpush2.msra.mxu0 0.0
    %1201 = vmatprep.subr.mxu0 0.0
    %1202 = vmatpush2.msra.mxu0 0.0
    %1203 = vmatprep.subr.mxu0 0.0
    %1204 = vmatpush2.msra.mxu0 0.0
    %1205 = vmatprep.mubr.f32.mxu0 0.0
    %1206 = vmatmul.mubr.f32.gmra.mxu0 %v1139
    %v1207 = vpop.f32.mrf.mxu0
    %v1208 = vadd.f32 0.0, %v1207
    %v1209 = vpop.f32.mrf.mxu0
    %1210 = vdwg.mxu0
    %v1211 = vadd.f32 %v1138, %v1208
    %v1212 = vxor.u32 %v1211, 2147483648
    %v1213 = vmul.f32 %v1212, 1.442695
    %v1214 = vpow.pop %v1213
    %v1215 = vadd.f32 %v1214, 1.0
    %v1216 = vrcp.pop %v1215
    %v1217 = vmul.f32 1.0, %v1216
    %v1218 = vtanh.pop %v1211
    %v1219 = vmul.f32 %v1217, %v1126
    %1221 = vrot.lane.b32.xlu0 %v1218, 64
    %v1222 = vpop.permute.xlu0 %1221
    %v1224 = vmul.f32 %v1217, %v1222
    %1226 = vrot.lane.b32.xlu0 %v1224, 32
    %v1227 = vpop.permute.xlu0 %1226
    %v1229 = vadd.f32 %v1219, %v1227
    %v1230 = vtanh.pop %v1229
    %1232 = vrot.lane.b32.xlu0 %v1230, 64
    %v1233 = vpop.permute.xlu0 %1232
    %v1235 = vmul.f32 %v1217, %v1233
    %1237 = vrot.lane.b32.xlu0 %v1235, 32
    %v1238 = vpop.permute.xlu0 %1237
    %1240 = vst.msk [vmem:[#allocation3 + $0xe] sm:$0x3] %vm518, %v1238
    %v1241 = vld [vmem:[%s7] sm:$0xff]
    %v1242 = vld [vmem:[%s7 + $0x8] sm:$0xff]
    %v1243 = vld [vmem:[%s7 + $0x10] sm:$0xff]
    %v1244 = vld [vmem:[%s7 + $0x18] sm:$0xff]
    %v1245 = vld [vmem:[#allocation3] sm:$0xff]
    %v1246 = vld [vmem:[#allocation3 + $0x8] sm:$0xff]
    %v1247 = vld [vmem:[%s6] sm:$0xff]
    %v1248 = vld [vmem:[%s6 + $0x8] sm:$0xff]
    %v1249 = vld [vmem:[%s6 + $0x10] sm:$0xff]
    %v1250 = vld [vmem:[%s6 + $0x18] sm:$0xff]
    %v1251 = vld [vmem:[%s8] sm:$0x1]
    %v1253 = vlaneseq
    %v1254 = vshrl.u32 %v1253, 7
    %v1255 = vsub.s32 0, %v1254
    %v1256 = vrot.slane %v1251, %v1255
    %v1259 = vsel %vm312, %v1245, 0
    %v1262 = vsel %vm312, %v1246, 0
    %1264 = vmatprep.subr.mxu0 0.0
    %1265 = vmatpush1.msra.mxu0 0.0
    %1266 = vmatprep.subr.mxu0 0.0
    %1267 = vmatpush1.msra.mxu0 0.0
    %1268 = vmatprep.subr.mxu0 0.0
    %1269 = vmatpush1.msra.mxu0 0.0
    %1270 = vmatprep.subr.mxu0 0.0
    %1271 = vmatpush1.msra.mxu0 0.0
    %1272 = vmatprep.subr.mxu0 0.0
    %1273 = vmatpush1.msra.mxu0 0.0
    %1274 = vmatprep.subr.mxu0 0.0
    %1275 = vmatpush1.msra.mxu0 0.0
    %1276 = vmatprep.subr.mxu0 0.0
    %1277 = vmatpush1.msra.mxu0 0.0
    %1278 = vmatprep.subr.mxu0 0.0
    %1279 = vmatpush1.msra.mxu0 0.0
    %1280 = vmatprep.subr.mxu0 0.0
    %1281 = vmatpush1.msra.mxu0 0.0
    %1282 = vmatprep.subr.mxu0 0.0
    %1283 = vmatpush1.msra.mxu0 0.0
    %1284 = vmatprep.subr.mxu0 0.0
    %1285 = vmatpush1.msra.mxu0 0.0
    %1286 = vmatprep.subr.mxu0 0.0
    %1287 = vmatpush1.msra.mxu0 0.0
    %1288 = vmatprep.subr.mxu0 0.0
    %1289 = vmatpush1.msra.mxu0 %v1250
    %1290 = vmatprep.subr.mxu0 0.0
    %1291 = vmatpush1.msra.mxu0 %v1249
    %1292 = vmatprep.subr.mxu0 0.0
    %1293 = vmatpush1.msra.mxu0 %v1248
    %1294 = vmatprep.subr.mxu0 0.0
    %1295 = vmatpush1.msra.mxu0 %v1247
    %1296 = vmatprep.subr.mxu0 0.0
    %1297 = vmatpush2.msra.mxu0 0.0
    %1298 = vmatprep.subr.mxu0 0.0
    %1299 = vmatpush2.msra.mxu0 0.0
    %1300 = vmatprep.subr.mxu0 0.0
    %1301 = vmatpush2.msra.mxu0 0.0
    %1302 = vmatprep.subr.mxu0 0.0
    %1303 = vmatpush2.msra.mxu0 0.0
    %1304 = vmatprep.subr.mxu0 0.0
    %1305 = vmatpush2.msra.mxu0 0.0
    %1306 = vmatprep.subr.mxu0 0.0
    %1307 = vmatpush2.msra.mxu0 0.0
    %1308 = vmatprep.subr.mxu0 0.0
    %1309 = vmatpush2.msra.mxu0 0.0
    %1310 = vmatprep.subr.mxu0 0.0
    %1311 = vmatpush2.msra.mxu0 0.0
    %1312 = vmatprep.subr.mxu0 0.0
    %1313 = vmatpush2.msra.mxu0 0.0
    %1314 = vmatprep.subr.mxu0 0.0
    %1315 = vmatpush2.msra.mxu0 0.0
    %1316 = vmatprep.subr.mxu0 0.0
    %1317 = vmatpush2.msra.mxu0 0.0
    %1318 = vmatprep.subr.mxu0 0.0
    %1319 = vmatpush2.msra.mxu0 0.0
    %1320 = vmatprep.subr.mxu0 0.0
    %1321 = vmatpush2.msra.mxu0 0.0
    %1322 = vmatprep.subr.mxu0 0.0
    %1323 = vmatpush2.msra.mxu0 0.0
    %1324 = vmatprep.subr.mxu0 0.0
    %1325 = vmatpush2.msra.mxu0 0.0
    %1326 = vmatprep.subr.mxu0 0.0
    %1327 = vmatpush2.msra.mxu0 0.0
    %1328 = vmatprep.mubr.f32.mxu0 0.0
    %1329 = vmatmul.mubr.f32.gmra.mxu0 %v1259
    %v1330 = vpop.f32.mrf.mxu0
    %v1331 = vadd.f32 %v1256, %v1330
    %v1332 = vpop.f32.mrf.mxu0
    %1333 = vmatprep.mubr.f32.mxu0 0.0
    %1334 = vmatmul.mubr.f32.gmra.mxu0 %v1262
    %v1335 = vpop.f32.mrf.mxu0
    %v1336 = vadd.f32 %v1256, %v1335
    %v1337 = vpop.f32.mrf.mxu0
    %1338 = vdwg.mxu0
    %1339 = vst [vmem:[#allocation4] sm:$0xff] %v1331
    %1340 = vst [vmem:[#allocation4 + $0x8] sm:$0xff] %v1336
    %v1341 = vld [vmem:[#allocation4] sm:$0x3]
    %1342 = vmatprep.subr.mxu0 0.0
    %1343 = vmatpush1.msra.mxu0 0.0
    %1344 = vmatprep.subr.mxu0 0.0
    %1345 = vmatpush1.msra.mxu0 0.0
    %1346 = vmatprep.subr.mxu0 0.0
    %1347 = vmatpush1.msra.mxu0 0.0
    %1348 = vmatprep.subr.mxu0 0.0
    %1349 = vmatpush1.msra.mxu0 0.0
    %1350 = vmatprep.subr.mxu0 0.0
    %1351 = vmatpush1.msra.mxu0 0.0
    %1352 = vmatprep.subr.mxu0 0.0
    %1353 = vmatpush1.msra.mxu0 0.0
    %1354 = vmatprep.subr.mxu0 0.0
    %1355 = vmatpush1.msra.mxu0 0.0
    %1356 = vmatprep.subr.mxu0 0.0
    %1357 = vmatpush1.msra.mxu0 0.0
    %1358 = vmatprep.subr.mxu0 0.0
    %1359 = vmatpush1.msra.mxu0 0.0
    %1360 = vmatprep.subr.mxu0 0.0
    %1361 = vmatpush1.msra.mxu0 0.0
    %1362 = vmatprep.subr.mxu0 0.0
    %1363 = vmatpush1.msra.mxu0 0.0
    %1364 = vmatprep.subr.mxu0 0.0
    %1365 = vmatpush1.msra.mxu0 0.0
    %1366 = vmatprep.subr.mxu0 0.0
    %1367 = vmatpush1.msra.mxu0 %v1244
    %1368 = vmatprep.subr.mxu0 0.0
    %1369 = vmatpush1.msra.mxu0 %v1243
    %1370 = vmatprep.subr.mxu0 0.0
    %1371 = vmatpush1.msra.mxu0 %v1242
    %1372 = vmatprep.subr.mxu0 0.0
    %1373 = vmatpush1.msra.mxu0 %v1241
    %1374 = vmatprep.subr.mxu0 0.0
    %1375 = vmatpush2.msra.mxu0 0.0
    %1376 = vmatprep.subr.mxu0 0.0
    %1377 = vmatpush2.msra.mxu0 0.0
    %1378 = vmatprep.subr.mxu0 0.0
    %1379 = vmatpush2.msra.mxu0 0.0
    %1380 = vmatprep.subr.mxu0 0.0
    %1381 = vmatpush2.msra.mxu0 0.0
    %1382 = vmatprep.subr.mxu0 0.0
    %1383 = vmatpush2.msra.mxu0 0.0
    %1384 = vmatprep.subr.mxu0 0.0
    %1385 = vmatpush2.msra.mxu0 0.0
    %1386 = vmatprep.subr.mxu0 0.0
    %1387 = vmatpush2.msra.mxu0 0.0
    %1388 = vmatprep.subr.mxu0 0.0
    %1389 = vmatpush2.msra.mxu0 0.0
    %1390 = vmatprep.subr.mxu0 0.0
    %1391 = vmatpush2.msra.mxu0 0.0
    %1392 = vmatprep.subr.mxu0 0.0
    %1393 = vmatpush2.msra.mxu0 0.0
    %1394 = vmatprep.subr.mxu0 0.0
    %1395 = vmatpush2.msra.mxu0 0.0
    %1396 = vmatprep.subr.mxu0 0.0
    %1397 = vmatpush2.msra.mxu0 0.0
    %1398 = vmatprep.subr.mxu0 0.0
    %1399 = vmatpush2.msra.mxu0 0.0
    %1400 = vmatprep.subr.mxu0 0.0
    %1401 = vmatpush2.msra.mxu0 0.0
    %1402 = vmatprep.subr.mxu0 0.0
    %1403 = vmatpush2.msra.mxu0 0.0
    %1404 = vmatprep.subr.mxu0 0.0
    %1405 = vmatpush2.msra.mxu0 0.0
    %1406 = vmatprep.mubr.f32.mxu0 0.0
    %1407 = vmatmul.mubr.f32.gmra.mxu0 %v417
    %v1408 = vpop.f32.mrf.mxu0
    %v1409 = vadd.f32 0.0, %v1408
    %v1410 = vpop.f32.mrf.mxu0
    %1411 = vdwg.mxu0
    %v1412 = vadd.f32 %v1341, %v1409
    %v1413 = vxor.u32 %v1412, 2147483648
    %v1414 = vmul.f32 %v1413, 1.442695
    %v1415 = vpow.pop %v1414
    %v1416 = vadd.f32 %v1415, 1.0
    %v1417 = vrcp.pop %v1416
    %v1418 = vmul.f32 1.0, %v1417
    %v1419 = vtanh.pop %v1412
    %v1420 = vmul.f32 %v1418, 0.0
    %1422 = vrot.lane.b32.xlu0 %v1419, 64
    %v1423 = vpop.permute.xlu0 %1422
    %v1425 = vmul.f32 %v1418, %v1423
    %1427 = vrot.lane.b32.xlu0 %v1425, 32
    %v1428 = vpop.permute.xlu0 %1427
    %v1430 = vadd.f32 %v1420, %v1428
    %v1431 = vtanh.pop %v1430
    %1433 = vrot.lane.b32.xlu0 %v1431, 64
    %v1434 = vpop.permute.xlu0 %1433
    %v1436 = vmul.f32 %v1418, %v1434
    %1438 = vrot.lane.b32.xlu0 %v1436, 32
    %v1439 = vpop.permute.xlu0 %1438
    %1441 = vst.msk [vmem:[#allocation3] sm:$0x3] %vm518, %v1439
    %v1442 = vld [vmem:[#allocation4 + $0x2] sm:$0x3]
    %v1443 = vsel %vm312, %v1439, 0
    %1445 = vmatprep.subr.mxu0 0.0
    %1446 = vmatpush1.msra.mxu0 0.0
    %1447 = vmatprep.subr.mxu0 0.0
    %1448 = vmatpush1.msra.mxu0 0.0
    %1449 = vmatprep.subr.mxu0 0.0
    %1450 = vmatpush1.msra.mxu0 0.0
    %1451 = vmatprep.subr.mxu0 0.0
    %1452 = vmatpush1.msra.mxu0 0.0
    %1453 = vmatprep.subr.mxu0 0.0
    %1454 = vmatpush1.msra.mxu0 0.0
    %1455 = vmatprep.subr.mxu0 0.0
    %1456 = vmatpush1.msra.mxu0 0.0
    %1457 = vmatprep.subr.mxu0 0.0
    %1458 = vmatpush1.msra.mxu0 0.0
    %1459 = vmatprep.subr.mxu0 0.0
    %1460 = vmatpush1.msra.mxu0 0.0
    %1461 = vmatprep.subr.mxu0 0.0
    %1462 = vmatpush1.msra.mxu0 0.0
    %1463 = vmatprep.subr.mxu0 0.0
    %1464 = vmatpush1.msra.mxu0 0.0
    %1465 = vmatprep.subr.mxu0 0.0
    %1466 = vmatpush1.msra.mxu0 0.0
    %1467 = vmatprep.subr.mxu0 0.0
    %1468 = vmatpush1.msra.mxu0 0.0
    %1469 = vmatprep.subr.mxu0 0.0
    %1470 = vmatpush1.msra.mxu0 %v1244
    %1471 = vmatprep.subr.mxu0 0.0
    %1472 = vmatpush1.msra.mxu0 %v1243
    %1473 = vmatprep.subr.mxu0 0.0
    %1474 = vmatpush1.msra.mxu0 %v1242
    %1475 = vmatprep.subr.mxu0 0.0
    %1476 = vmatpush1.msra.mxu0 %v1241
    %1477 = vmatprep.subr.mxu0 0.0
    %1478 = vmatpush2.msra.mxu0 0.0
    %1479 = vmatprep.subr.mxu0 0.0
    %1480 = vmatpush2.msra.mxu0 0.0
    %1481 = vmatprep.subr.mxu0 0.0
    %1482 = vmatpush2.msra.mxu0 0.0
    %1483 = vmatprep.subr.mxu0 0.0
    %1484 = vmatpush2.msra.mxu0 0.0
    %1485 = vmatprep.subr.mxu0 0.0
    %1486 = vmatpush2.msra.mxu0 0.0
    %1487 = vmatprep.subr.mxu0 0.0
    %1488 = vmatpush2.msra.mxu0 0.0
    %1489 = vmatprep.subr.mxu0 0.0
    %1490 = vmatpush2.msra.mxu0 0.0
    %1491 = vmatprep.subr.mxu0 0.0
    %1492 = vmatpush2.msra.mxu0 0.0
    %1493 = vmatprep.subr.mxu0 0.0
    %1494 = vmatpush2.msra.mxu0 0.0
    %1495 = vmatprep.subr.mxu0 0.0
    %1496 = vmatpush2.msra.mxu0 0.0
    %1497 = vmatprep.subr.mxu0 0.0
    %1498 = vmatpush2.msra.mxu0 0.0
    %1499 = vmatprep.subr.mxu0 0.0
    %1500 = vmatpush2.msra.mxu0 0.0
    %1501 = vmatprep.subr.mxu0 0.0
    %1502 = vmatpush2.msra.mxu0 0.0
    %1503 = vmatprep.subr.mxu0 0.0
    %1504 = vmatpush2.msra.mxu0 0.0
    %1505 = vmatprep.subr.mxu0 0.0
    %1506 = vmatpush2.msra.mxu0 0.0
    %1507 = vmatprep.subr.mxu0 0.0
    %1508 = vmatpush2.msra.mxu0 0.0
    %1509 = vmatprep.mubr.f32.mxu0 0.0
    %1510 = vmatmul.mubr.f32.gmra.mxu0 %v1443
    %v1511 = vpop.f32.mrf.mxu0
    %v1512 = vadd.f32 0.0, %v1511
    %v1513 = vpop.f32.mrf.mxu0
    %1514 = vdwg.mxu0
    %v1515 = vadd.f32 %v1442, %v1512
    %v1516 = vxor.u32 %v1515, 2147483648
    %v1517 = vmul.f32 %v1516, 1.442695
    %v1518 = vpow.pop %v1517
    %v1519 = vadd.f32 %v1518, 1.0
    %v1520 = vrcp.pop %v1519
    %v1521 = vmul.f32 1.0, %v1520
    %v1522 = vtanh.pop %v1515
    %v1523 = vmul.f32 %v1521, %v1430
    %1525 = vrot.lane.b32.xlu0 %v1522, 64
    %v1526 = vpop.permute.xlu0 %1525
    %v1528 = vmul.f32 %v1521, %v1526
    %1530 = vrot.lane.b32.xlu0 %v1528, 32
    %v1531 = vpop.permute.xlu0 %1530
    %v1533 = vadd.f32 %v1523, %v1531
    %v1534 = vtanh.pop %v1533
    %1536 = vrot.lane.b32.xlu0 %v1534, 64
    %v1537 = vpop.permute.xlu0 %1536
    %v1539 = vmul.f32 %v1521, %v1537
    %1541 = vrot.lane.b32.xlu0 %v1539, 32
    %v1542 = vpop.permute.xlu0 %1541
    %1544 = vst.msk [vmem:[#allocation3 + $0x2] sm:$0x3] %vm518, %v1542
    %v1545 = vld [vmem:[#allocation4 + $0x4] sm:$0x3]
    %v1546 = vsel %vm312, %v1542, 0
    %1548 = vmatprep.subr.mxu0 0.0
    %1549 = vmatpush1.msra.mxu0 0.0
    %1550 = vmatprep.subr.mxu0 0.0
    %1551 = vmatpush1.msra.mxu0 0.0
    %1552 = vmatprep.subr.mxu0 0.0
    %1553 = vmatpush1.msra.mxu0 0.0
    %1554 = vmatprep.subr.mxu0 0.0
    %1555 = vmatpush1.msra.mxu0 0.0
    %1556 = vmatprep.subr.mxu0 0.0
    %1557 = vmatpush1.msra.mxu0 0.0
    %1558 = vmatprep.subr.mxu0 0.0
    %1559 = vmatpush1.msra.mxu0 0.0
    %1560 = vmatprep.subr.mxu0 0.0
    %1561 = vmatpush1.msra.mxu0 0.0
    %1562 = vmatprep.subr.mxu0 0.0
    %1563 = vmatpush1.msra.mxu0 0.0
    %1564 = vmatprep.subr.mxu0 0.0
    %1565 = vmatpush1.msra.mxu0 0.0
    %1566 = vmatprep.subr.mxu0 0.0
    %1567 = vmatpush1.msra.mxu0 0.0
    %1568 = vmatprep.subr.mxu0 0.0
    %1569 = vmatpush1.msra.mxu0 0.0
    %1570 = vmatprep.subr.mxu0 0.0
    %1571 = vmatpush1.msra.mxu0 0.0
    %1572 = vmatprep.subr.mxu0 0.0
    %1573 = vmatpush1.msra.mxu0 %v1244
    %1574 = vmatprep.subr.mxu0 0.0
    %1575 = vmatpush1.msra.mxu0 %v1243
    %1576 = vmatprep.subr.mxu0 0.0
    %1577 = vmatpush1.msra.mxu0 %v1242
    %1578 = vmatprep.subr.mxu0 0.0
    %1579 = vmatpush1.msra.mxu0 %v1241
    %1580 = vmatprep.subr.mxu0 0.0
    %1581 = vmatpush2.msra.mxu0 0.0
    %1582 = vmatprep.subr.mxu0 0.0
    %1583 = vmatpush2.msra.mxu0 0.0
    %1584 = vmatprep.subr.mxu0 0.0
    %1585 = vmatpush2.msra.mxu0 0.0
    %1586 = vmatprep.subr.mxu0 0.0
    %1587 = vmatpush2.msra.mxu0 0.0
    %1588 = vmatprep.subr.mxu0 0.0
    %1589 = vmatpush2.msra.mxu0 0.0
    %1590 = vmatprep.subr.mxu0 0.0
    %1591 = vmatpush2.msra.mxu0 0.0
    %1592 = vmatprep.subr.mxu0 0.0
    %1593 = vmatpush2.msra.mxu0 0.0
    %1594 = vmatprep.subr.mxu0 0.0
    %1595 = vmatpush2.msra.mxu0 0.0
    %1596 = vmatprep.subr.mxu0 0.0
    %1597 = vmatpush2.msra.mxu0 0.0
    %1598 = vmatprep.subr.mxu0 0.0
    %1599 = vmatpush2.msra.mxu0 0.0
    %1600 = vmatprep.subr.mxu0 0.0
    %1601 = vmatpush2.msra.mxu0 0.0
    %1602 = vmatprep.subr.mxu0 0.0
    %1603 = vmatpush2.msra.mxu0 0.0
    %1604 = vmatprep.subr.mxu0 0.0
    %1605 = vmatpush2.msra.mxu0 0.0
    %1606 = vmatprep.subr.mxu0 0.0
    %1607 = vmatpush2.msra.mxu0 0.0
    %1608 = vmatprep.subr.mxu0 0.0
    %1609 = vmatpush2.msra.mxu0 0.0
    %1610 = vmatprep.subr.mxu0 0.0
    %1611 = vmatpush2.msra.mxu0 0.0
    %1612 = vmatprep.mubr.f32.mxu0 0.0
    %1613 = vmatmul.mubr.f32.gmra.mxu0 %v1546
    %v1614 = vpop.f32.mrf.mxu0
    %v1615 = vadd.f32 0.0, %v1614
    %v1616 = vpop.f32.mrf.mxu0
    %1617 = vdwg.mxu0
    %v1618 = vadd.f32 %v1545, %v1615
    %v1619 = vxor.u32 %v1618, 2147483648
    %v1620 = vmul.f32 %v1619, 1.442695
    %v1621 = vpow.pop %v1620
    %v1622 = vadd.f32 %v1621, 1.0
    %v1623 = vrcp.pop %v1622
    %v1624 = vmul.f32 1.0, %v1623
    %v1625 = vtanh.pop %v1618
    %v1626 = vmul.f32 %v1624, %v1533
    %1628 = vrot.lane.b32.xlu0 %v1625, 64
    %v1629 = vpop.permute.xlu0 %1628
    %v1631 = vmul.f32 %v1624, %v1629
    %1633 = vrot.lane.b32.xlu0 %v1631, 32
    %v1634 = vpop.permute.xlu0 %1633
    %v1636 = vadd.f32 %v1626, %v1634
    %v1637 = vtanh.pop %v1636
    %1639 = vrot.lane.b32.xlu0 %v1637, 64
    %v1640 = vpop.permute.xlu0 %1639
    %v1642 = vmul.f32 %v1624, %v1640
    %1644 = vrot.lane.b32.xlu0 %v1642, 32
    %v1645 = vpop.permute.xlu0 %1644
    %1647 = vst.msk [vmem:[#allocation3 + $0x4] sm:$0x3] %vm518, %v1645
    %v1648 = vld [vmem:[#allocation4 + $0x6] sm:$0x3]
    %v1649 = vsel %vm312, %v1645, 0
    %1651 = vmatprep.subr.mxu0 0.0
    %1652 = vmatpush1.msra.mxu0 0.0
    %1653 = vmatprep.subr.mxu0 0.0
    %1654 = vmatpush1.msra.mxu0 0.0
    %1655 = vmatprep.subr.mxu0 0.0
    %1656 = vmatpush1.msra.mxu0 0.0
    %1657 = vmatprep.subr.mxu0 0.0
    %1658 = vmatpush1.msra.mxu0 0.0
    %1659 = vmatprep.subr.mxu0 0.0
    %1660 = vmatpush1.msra.mxu0 0.0
    %1661 = vmatprep.subr.mxu0 0.0
    %1662 = vmatpush1.msra.mxu0 0.0
    %1663 = vmatprep.subr.mxu0 0.0
    %1664 = vmatpush1.msra.mxu0 0.0
    %1665 = vmatprep.subr.mxu0 0.0
    %1666 = vmatpush1.msra.mxu0 0.0
    %1667 = vmatprep.subr.mxu0 0.0
    %1668 = vmatpush1.msra.mxu0 0.0
    %1669 = vmatprep.subr.mxu0 0.0
    %1670 = vmatpush1.msra.mxu0 0.0
    %1671 = vmatprep.subr.mxu0 0.0
    %1672 = vmatpush1.msra.mxu0 0.0
    %1673 = vmatprep.subr.mxu0 0.0
    %1674 = vmatpush1.msra.mxu0 0.0
    %1675 = vmatprep.subr.mxu0 0.0
    %1676 = vmatpush1.msra.mxu0 %v1244
    %1677 = vmatprep.subr.mxu0 0.0
    %1678 = vmatpush1.msra.mxu0 %v1243
    %1679 = vmatprep.subr.mxu0 0.0
    %1680 = vmatpush1.msra.mxu0 %v1242
    %1681 = vmatprep.subr.mxu0 0.0
    %1682 = vmatpush1.msra.mxu0 %v1241
    %1683 = vmatprep.subr.mxu0 0.0
    %1684 = vmatpush2.msra.mxu0 0.0
    %1685 = vmatprep.subr.mxu0 0.0
    %1686 = vmatpush2.msra.mxu0 0.0
    %1687 = vmatprep.subr.mxu0 0.0
    %1688 = vmatpush2.msra.mxu0 0.0
    %1689 = vmatprep.subr.mxu0 0.0
    %1690 = vmatpush2.msra.mxu0 0.0
    %1691 = vmatprep.subr.mxu0 0.0
    %1692 = vmatpush2.msra.mxu0 0.0
    %1693 = vmatprep.subr.mxu0 0.0
    %1694 = vmatpush2.msra.mxu0 0.0
    %1695 = vmatprep.subr.mxu0 0.0
    %1696 = vmatpush2.msra.mxu0 0.0
    %1697 = vmatprep.subr.mxu0 0.0
    %1698 = vmatpush2.msra.mxu0 0.0
    %1699 = vmatprep.subr.mxu0 0.0
    %1700 = vmatpush2.msra.mxu0 0.0
    %1701 = vmatprep.subr.mxu0 0.0
    %1702 = vmatpush2.msra.mxu0 0.0
    %1703 = vmatprep.subr.mxu0 0.0
    %1704 = vmatpush2.msra.mxu0 0.0
    %1705 = vmatprep.subr.mxu0 0.0
    %1706 = vmatpush2.msra.mxu0 0.0
    %1707 = vmatprep.subr.mxu0 0.0
    %1708 = vmatpush2.msra.mxu0 0.0
    %1709 = vmatprep.subr.mxu0 0.0
    %1710 = vmatpush2.msra.mxu0 0.0
    %1711 = vmatprep.subr.mxu0 0.0
    %1712 = vmatpush2.msra.mxu0 0.0
    %1713 = vmatprep.subr.mxu0 0.0
    %1714 = vmatpush2.msra.mxu0 0.0
    %1715 = vmatprep.mubr.f32.mxu0 0.0
    %1716 = vmatmul.mubr.f32.gmra.mxu0 %v1649
    %v1717 = vpop.f32.mrf.mxu0
    %v1718 = vadd.f32 0.0, %v1717
    %v1719 = vpop.f32.mrf.mxu0
    %1720 = vdwg.mxu0
    %v1721 = vadd.f32 %v1648, %v1718
    %v1722 = vxor.u32 %v1721, 2147483648
    %v1723 = vmul.f32 %v1722, 1.442695
    %v1724 = vpow.pop %v1723
    %v1725 = vadd.f32 %v1724, 1.0
    %v1726 = vrcp.pop %v1725
    %v1727 = vmul.f32 1.0, %v1726
    %v1728 = vtanh.pop %v1721
    %v1729 = vmul.f32 %v1727, %v1636
    %1731 = vrot.lane.b32.xlu0 %v1728, 64
    %v1732 = vpop.permute.xlu0 %1731
    %v1734 = vmul.f32 %v1727, %v1732
    %1736 = vrot.lane.b32.xlu0 %v1734, 32
    %v1737 = vpop.permute.xlu0 %1736
    %v1739 = vadd.f32 %v1729, %v1737
    %v1740 = vtanh.pop %v1739
    %1742 = vrot.lane.b32.xlu0 %v1740, 64
    %v1743 = vpop.permute.xlu0 %1742
    %v1745 = vmul.f32 %v1727, %v1743
    %1747 = vrot.lane.b32.xlu0 %v1745, 32
    %v1748 = vpop.permute.xlu0 %1747
    %1750 = vst.msk [vmem:[#allocation3 + $0x6] sm:$0x3] %vm518, %v1748
    %v1751 = vld [vmem:[#allocation4 + $0x8] sm:$0x3]
    %v1752 = vsel %vm312, %v1748, 0
    %1754 = vmatprep.subr.mxu0 0.0
    %1755 = vmatpush1.msra.mxu0 0.0
    %1756 = vmatprep.subr.mxu0 0.0
    %1757 = vmatpush1.msra.mxu0 0.0
    %1758 = vmatprep.subr.mxu0 0.0
    %1759 = vmatpush1.msra.mxu0 0.0
    %1760 = vmatprep.subr.mxu0 0.0
    %1761 = vmatpush1.msra.mxu0 0.0
    %1762 = vmatprep.subr.mxu0 0.0
    %1763 = vmatpush1.msra.mxu0 0.0
    %1764 = vmatprep.subr.mxu0 0.0
    %1765 = vmatpush1.msra.mxu0 0.0
    %1766 = vmatprep.subr.mxu0 0.0
    %1767 = vmatpush1.msra.mxu0 0.0
    %1768 = vmatprep.subr.mxu0 0.0
    %1769 = vmatpush1.msra.mxu0 0.0
    %1770 = vmatprep.subr.mxu0 0.0
    %1771 = vmatpush1.msra.mxu0 0.0
    %1772 = vmatprep.subr.mxu0 0.0
    %1773 = vmatpush1.msra.mxu0 0.0
    %1774 = vmatprep.subr.mxu0 0.0
    %1775 = vmatpush1.msra.mxu0 0.0
    %1776 = vmatprep.subr.mxu0 0.0
    %1777 = vmatpush1.msra.mxu0 0.0
    %1778 = vmatprep.subr.mxu0 0.0
    %1779 = vmatpush1.msra.mxu0 %v1244
    %1780 = vmatprep.subr.mxu0 0.0
    %1781 = vmatpush1.msra.mxu0 %v1243
    %1782 = vmatprep.subr.mxu0 0.0
    %1783 = vmatpush1.msra.mxu0 %v1242
    %1784 = vmatprep.subr.mxu0 0.0
    %1785 = vmatpush1.msra.mxu0 %v1241
    %1786 = vmatprep.subr.mxu0 0.0
    %1787 = vmatpush2.msra.mxu0 0.0
    %1788 = vmatprep.subr.mxu0 0.0
    %1789 = vmatpush2.msra.mxu0 0.0
    %1790 = vmatprep.subr.mxu0 0.0
    %1791 = vmatpush2.msra.mxu0 0.0
    %1792 = vmatprep.subr.mxu0 0.0
    %1793 = vmatpush2.msra.mxu0 0.0
    %1794 = vmatprep.subr.mxu0 0.0
    %1795 = vmatpush2.msra.mxu0 0.0
    %1796 = vmatprep.subr.mxu0 0.0
    %1797 = vmatpush2.msra.mxu0 0.0
    %1798 = vmatprep.subr.mxu0 0.0
    %1799 = vmatpush2.msra.mxu0 0.0
    %1800 = vmatprep.subr.mxu0 0.0
    %1801 = vmatpush2.msra.mxu0 0.0
    %1802 = vmatprep.subr.mxu0 0.0
    %1803 = vmatpush2.msra.mxu0 0.0
    %1804 = vmatprep.subr.mxu0 0.0
    %1805 = vmatpush2.msra.mxu0 0.0
    %1806 = vmatprep.subr.mxu0 0.0
    %1807 = vmatpush2.msra.mxu0 0.0
    %1808 = vmatprep.subr.mxu0 0.0
    %1809 = vmatpush2.msra.mxu0 0.0
    %1810 = vmatprep.subr.mxu0 0.0
    %1811 = vmatpush2.msra.mxu0 0.0
    %1812 = vmatprep.subr.mxu0 0.0
    %1813 = vmatpush2.msra.mxu0 0.0
    %1814 = vmatprep.subr.mxu0 0.0
    %1815 = vmatpush2.msra.mxu0 0.0
    %1816 = vmatprep.subr.mxu0 0.0
    %1817 = vmatpush2.msra.mxu0 0.0
    %1818 = vmatprep.mubr.f32.mxu0 0.0
    %1819 = vmatmul.mubr.f32.gmra.mxu0 %v1752
    %v1820 = vpop.f32.mrf.mxu0
    %v1821 = vadd.f32 0.0, %v1820
    %v1822 = vpop.f32.mrf.mxu0
    %1823 = vdwg.mxu0
    %v1824 = vadd.f32 %v1751, %v1821
    %v1825 = vxor.u32 %v1824, 2147483648
    %v1826 = vmul.f32 %v1825, 1.442695
    %v1827 = vpow.pop %v1826
    %v1828 = vadd.f32 %v1827, 1.0
    %v1829 = vrcp.pop %v1828
    %v1830 = vmul.f32 1.0, %v1829
    %v1831 = vtanh.pop %v1824
    %v1832 = vmul.f32 %v1830, %v1739
    %1834 = vrot.lane.b32.xlu0 %v1831, 64
    %v1835 = vpop.permute.xlu0 %1834
    %v1837 = vmul.f32 %v1830, %v1835
    %1839 = vrot.lane.b32.xlu0 %v1837, 32
    %v1840 = vpop.permute.xlu0 %1839
    %v1842 = vadd.f32 %v1832, %v1840
    %v1843 = vtanh.pop %v1842
    %1845 = vrot.lane.b32.xlu0 %v1843, 64
    %v1846 = vpop.permute.xlu0 %1845
    %v1848 = vmul.f32 %v1830, %v1846
    %1850 = vrot.lane.b32.xlu0 %v1848, 32
    %v1851 = vpop.permute.xlu0 %1850
    %1853 = vst.msk [vmem:[#allocation3 + $0x8] sm:$0x3] %vm518, %v1851
    %v1854 = vld [vmem:[#allocation4 + $0xa] sm:$0x3]
    %v1855 = vsel %vm312, %v1851, 0
    %1857 = vmatprep.subr.mxu0 0.0
    %1858 = vmatpush1.msra.mxu0 0.0
    %1859 = vmatprep.subr.mxu0 0.0
    %1860 = vmatpush1.msra.mxu0 0.0
    %1861 = vmatprep.subr.mxu0 0.0
    %1862 = vmatpush1.msra.mxu0 0.0
    %1863 = vmatprep.subr.mxu0 0.0
    %1864 = vmatpush1.msra.mxu0 0.0
    %1865 = vmatprep.subr.mxu0 0.0
    %1866 = vmatpush1.msra.mxu0 0.0
    %1867 = vmatprep.subr.mxu0 0.0
    %1868 = vmatpush1.msra.mxu0 0.0
    %1869 = vmatprep.subr.mxu0 0.0
    %1870 = vmatpush1.msra.mxu0 0.0
    %1871 = vmatprep.subr.mxu0 0.0
    %1872 = vmatpush1.msra.mxu0 0.0
    %1873 = vmatprep.subr.mxu0 0.0
    %1874 = vmatpush1.msra.mxu0 0.0
    %1875 = vmatprep.subr.mxu0 0.0
    %1876 = vmatpush1.msra.mxu0 0.0
    %1877 = vmatprep.subr.mxu0 0.0
    %1878 = vmatpush1.msra.mxu0 0.0
    %1879 = vmatprep.subr.mxu0 0.0
    %1880 = vmatpush1.msra.mxu0 0.0
    %1881 = vmatprep.subr.mxu0 0.0
    %1882 = vmatpush1.msra.mxu0 %v1244
    %1883 = vmatprep.subr.mxu0 0.0
    %1884 = vmatpush1.msra.mxu0 %v1243
    %1885 = vmatprep.subr.mxu0 0.0
    %1886 = vmatpush1.msra.mxu0 %v1242
    %1887 = vmatprep.subr.mxu0 0.0
    %1888 = vmatpush1.msra.mxu0 %v1241
    %1889 = vmatprep.subr.mxu0 0.0
    %1890 = vmatpush2.msra.mxu0 0.0
    %1891 = vmatprep.subr.mxu0 0.0
    %1892 = vmatpush2.msra.mxu0 0.0
    %1893 = vmatprep.subr.mxu0 0.0
    %1894 = vmatpush2.msra.mxu0 0.0
    %1895 = vmatprep.subr.mxu0 0.0
    %1896 = vmatpush2.msra.mxu0 0.0
    %1897 = vmatprep.subr.mxu0 0.0
    %1898 = vmatpush2.msra.mxu0 0.0
    %1899 = vmatprep.subr.mxu0 0.0
    %1900 = vmatpush2.msra.mxu0 0.0
    %1901 = vmatprep.subr.mxu0 0.0
    %1902 = vmatpush2.msra.mxu0 0.0
    %1903 = vmatprep.subr.mxu0 0.0
    %1904 = vmatpush2.msra.mxu0 0.0
    %1905 = vmatprep.subr.mxu0 0.0
    %1906 = vmatpush2.msra.mxu0 0.0
    %1907 = vmatprep.subr.mxu0 0.0
    %1908 = vmatpush2.msra.mxu0 0.0
    %1909 = vmatprep.subr.mxu0 0.0
    %1910 = vmatpush2.msra.mxu0 0.0
    %1911 = vmatprep.subr.mxu0 0.0
    %1912 = vmatpush2.msra.mxu0 0.0
    %1913 = vmatprep.subr.mxu0 0.0
    %1914 = vmatpush2.msra.mxu0 0.0
    %1915 = vmatprep.subr.mxu0 0.0
    %1916 = vmatpush2.msra.mxu0 0.0
    %1917 = vmatprep.subr.mxu0 0.0
    %1918 = vmatpush2.msra.mxu0 0.0
    %1919 = vmatprep.subr.mxu0 0.0
    %1920 = vmatpush2.msra.mxu0 0.0
    %1921 = vmatprep.mubr.f32.mxu0 0.0
    %1922 = vmatmul.mubr.f32.gmra.mxu0 %v1855
    %v1923 = vpop.f32.mrf.mxu0
    %v1924 = vadd.f32 0.0, %v1923
    %v1925 = vpop.f32.mrf.mxu0
    %1926 = vdwg.mxu0
    %v1927 = vadd.f32 %v1854, %v1924
    %v1928 = vxor.u32 %v1927, 2147483648
    %v1929 = vmul.f32 %v1928, 1.442695
    %v1930 = vpow.pop %v1929
    %v1931 = vadd.f32 %v1930, 1.0
    %v1932 = vrcp.pop %v1931
    %v1933 = vmul.f32 1.0, %v1932
    %v1934 = vtanh.pop %v1927
    %v1935 = vmul.f32 %v1933, %v1842
    %1937 = vrot.lane.b32.xlu0 %v1934, 64
    %v1938 = vpop.permute.xlu0 %1937
    %v1940 = vmul.f32 %v1933, %v1938
    %1942 = vrot.lane.b32.xlu0 %v1940, 32
    %v1943 = vpop.permute.xlu0 %1942
    %v1945 = vadd.f32 %v1935, %v1943
    %v1946 = vtanh.pop %v1945
    %1948 = vrot.lane.b32.xlu0 %v1946, 64
    %v1949 = vpop.permute.xlu0 %1948
    %v1951 = vmul.f32 %v1933, %v1949
    %1953 = vrot.lane.b32.xlu0 %v1951, 32
    %v1954 = vpop.permute.xlu0 %1953
    %1956 = vst.msk [vmem:[#allocation3 + $0xa] sm:$0x3] %vm518, %v1954
    %v1957 = vld [vmem:[#allocation4 + $0xc] sm:$0x3]
    %v1958 = vsel %vm312, %v1954, 0
    %1960 = vmatprep.subr.mxu0 0.0
    %1961 = vmatpush1.msra.mxu0 0.0
    %1962 = vmatprep.subr.mxu0 0.0
    %1963 = vmatpush1.msra.mxu0 0.0
    %1964 = vmatprep.subr.mxu0 0.0
    %1965 = vmatpush1.msra.mxu0 0.0
    %1966 = vmatprep.subr.mxu0 0.0
    %1967 = vmatpush1.msra.mxu0 0.0
    %1968 = vmatprep.subr.mxu0 0.0
    %1969 = vmatpush1.msra.mxu0 0.0
    %1970 = vmatprep.subr.mxu0 0.0
    %1971 = vmatpush1.msra.mxu0 0.0
    %1972 = vmatprep.subr.mxu0 0.0
    %1973 = vmatpush1.msra.mxu0 0.0
    %1974 = vmatprep.subr.mxu0 0.0
    %1975 = vmatpush1.msra.mxu0 0.0
    %1976 = vmatprep.subr.mxu0 0.0
    %1977 = vmatpush1.msra.mxu0 0.0
    %1978 = vmatprep.subr.mxu0 0.0
    %1979 = vmatpush1.msra.mxu0 0.0
    %1980 = vmatprep.subr.mxu0 0.0
    %1981 = vmatpush1.msra.mxu0 0.0
    %1982 = vmatprep.subr.mxu0 0.0
    %1983 = vmatpush1.msra.mxu0 0.0
    %1984 = vmatprep.subr.mxu0 0.0
    %1985 = vmatpush1.msra.mxu0 %v1244
    %1986 = vmatprep.subr.mxu0 0.0
    %1987 = vmatpush1.msra.mxu0 %v1243
    %1988 = vmatprep.subr.mxu0 0.0
    %1989 = vmatpush1.msra.mxu0 %v1242
    %1990 = vmatprep.subr.mxu0 0.0
    %1991 = vmatpush1.msra.mxu0 %v1241
    %1992 = vmatprep.subr.mxu0 0.0
    %1993 = vmatpush2.msra.mxu0 0.0
    %1994 = vmatprep.subr.mxu0 0.0
    %1995 = vmatpush2.msra.mxu0 0.0
    %1996 = vmatprep.subr.mxu0 0.0
    %1997 = vmatpush2.msra.mxu0 0.0
    %1998 = vmatprep.subr.mxu0 0.0
    %1999 = vmatpush2.msra.mxu0 0.0
    %2000 = vmatprep.subr.mxu0 0.0
    %2001 = vmatpush2.msra.mxu0 0.0
    %2002 = vmatprep.subr.mxu0 0.0
    %2003 = vmatpush2.msra.mxu0 0.0
    %2004 = vmatprep.subr.mxu0 0.0
    %2005 = vmatpush2.msra.mxu0 0.0
    %2006 = vmatprep.subr.mxu0 0.0
    %2007 = vmatpush2.msra.mxu0 0.0
    %2008 = vmatprep.subr.mxu0 0.0
    %2009 = vmatpush2.msra.mxu0 0.0
    %2010 = vmatprep.subr.mxu0 0.0
    %2011 = vmatpush2.msra.mxu0 0.0
    %2012 = vmatprep.subr.mxu0 0.0
    %2013 = vmatpush2.msra.mxu0 0.0
    %2014 = vmatprep.subr.mxu0 0.0
    %2015 = vmatpush2.msra.mxu0 0.0
    %2016 = vmatprep.subr.mxu0 0.0
    %2017 = vmatpush2.msra.mxu0 0.0
    %2018 = vmatprep.subr.mxu0 0.0
    %2019 = vmatpush2.msra.mxu0 0.0
    %2020 = vmatprep.subr.mxu0 0.0
    %2021 = vmatpush2.msra.mxu0 0.0
    %2022 = vmatprep.subr.mxu0 0.0
    %2023 = vmatpush2.msra.mxu0 0.0
    %2024 = vmatprep.mubr.f32.mxu0 0.0
    %2025 = vmatmul.mubr.f32.gmra.mxu0 %v1958
    %v2026 = vpop.f32.mrf.mxu0
    %v2027 = vadd.f32 0.0, %v2026
    %v2028 = vpop.f32.mrf.mxu0
    %2029 = vdwg.mxu0
    %v2030 = vadd.f32 %v1957, %v2027
    %v2031 = vxor.u32 %v2030, 2147483648
    %v2032 = vmul.f32 %v2031, 1.442695
    %v2033 = vpow.pop %v2032
    %v2034 = vadd.f32 %v2033, 1.0
    %v2035 = vrcp.pop %v2034
    %v2036 = vmul.f32 1.0, %v2035
    %v2037 = vtanh.pop %v2030
    %v2038 = vmul.f32 %v2036, %v1945
    %2040 = vrot.lane.b32.xlu0 %v2037, 64
    %v2041 = vpop.permute.xlu0 %2040
    %v2043 = vmul.f32 %v2036, %v2041
    %2045 = vrot.lane.b32.xlu0 %v2043, 32
    %v2046 = vpop.permute.xlu0 %2045
    %v2048 = vadd.f32 %v2038, %v2046
    %v2049 = vtanh.pop %v2048
    %2051 = vrot.lane.b32.xlu0 %v2049, 64
    %v2052 = vpop.permute.xlu0 %2051
    %v2054 = vmul.f32 %v2036, %v2052
    %2056 = vrot.lane.b32.xlu0 %v2054, 32
    %v2057 = vpop.permute.xlu0 %2056
    %2059 = vst.msk [vmem:[#allocation3 + $0xc] sm:$0x3] %vm518, %v2057
    %v2060 = vld [vmem:[#allocation4 + $0xe] sm:$0x3]
    %v2061 = vsel %vm312, %v2057, 0
    %2063 = vmatprep.subr.mxu0 0.0
    %2064 = vmatpush1.msra.mxu0 0.0
    %2065 = vmatprep.subr.mxu0 0.0
    %2066 = vmatpush1.msra.mxu0 0.0
    %2067 = vmatprep.subr.mxu0 0.0
    %2068 = vmatpush1.msra.mxu0 0.0
    %2069 = vmatprep.subr.mxu0 0.0
    %2070 = vmatpush1.msra.mxu0 0.0
    %2071 = vmatprep.subr.mxu0 0.0
    %2072 = vmatpush1.msra.mxu0 0.0
    %2073 = vmatprep.subr.mxu0 0.0
    %2074 = vmatpush1.msra.mxu0 0.0
    %2075 = vmatprep.subr.mxu0 0.0
    %2076 = vmatpush1.msra.mxu0 0.0
    %2077 = vmatprep.subr.mxu0 0.0
    %2078 = vmatpush1.msra.mxu0 0.0
    %2079 = vmatprep.subr.mxu0 0.0
    %2080 = vmatpush1.msra.mxu0 0.0
    %2081 = vmatprep.subr.mxu0 0.0
    %2082 = vmatpush1.msra.mxu0 0.0
    %2083 = vmatprep.subr.mxu0 0.0
    %2084 = vmatpush1.msra.mxu0 0.0
    %2085 = vmatprep.subr.mxu0 0.0
    %2086 = vmatpush1.msra.mxu0 0.0
    %2087 = vmatprep.subr.mxu0 0.0
    %2088 = vmatpush1.msra.mxu0 %v1244
    %2089 = vmatprep.subr.mxu0 0.0
    %2090 = vmatpush1.msra.mxu0 %v1243
    %2091 = vmatprep.subr.mxu0 0.0
    %2092 = vmatpush1.msra.mxu0 %v1242
    %2093 = vmatprep.subr.mxu0 0.0
    %2094 = vmatpush1.msra.mxu0 %v1241
    %2095 = vmatprep.subr.mxu0 0.0
    %2096 = vmatpush2.msra.mxu0 0.0
    %2097 = vmatprep.subr.mxu0 0.0
    %2098 = vmatpush2.msra.mxu0 0.0
    %2099 = vmatprep.subr.mxu0 0.0
    %2100 = vmatpush2.msra.mxu0 0.0
    %2101 = vmatprep.subr.mxu0 0.0
    %2102 = vmatpush2.msra.mxu0 0.0
    %2103 = vmatprep.subr.mxu0 0.0
    %2104 = vmatpush2.msra.mxu0 0.0
    %2105 = vmatprep.subr.mxu0 0.0
    %2106 = vmatpush2.msra.mxu0 0.0
    %2107 = vmatprep.subr.mxu0 0.0
    %2108 = vmatpush2.msra.mxu0 0.0
    %2109 = vmatprep.subr.mxu0 0.0
    %2110 = vmatpush2.msra.mxu0 0.0
    %2111 = vmatprep.subr.mxu0 0.0
    %2112 = vmatpush2.msra.mxu0 0.0
    %2113 = vmatprep.subr.mxu0 0.0
    %2114 = vmatpush2.msra.mxu0 0.0
    %2115 = vmatprep.subr.mxu0 0.0
    %2116 = vmatpush2.msra.mxu0 0.0
    %2117 = vmatprep.subr.mxu0 0.0
    %2118 = vmatpush2.msra.mxu0 0.0
    %2119 = vmatprep.subr.mxu0 0.0
    %2120 = vmatpush2.msra.mxu0 0.0
    %2121 = vmatprep.subr.mxu0 0.0
    %2122 = vmatpush2.msra.mxu0 0.0
    %2123 = vmatprep.subr.mxu0 0.0
    %2124 = vmatpush2.msra.mxu0 0.0
    %2125 = vmatprep.subr.mxu0 0.0
    %2126 = vmatpush2.msra.mxu0 0.0
    %2127 = vmatprep.mubr.f32.mxu0 0.0
    %2128 = vmatmul.mubr.f32.gmra.mxu0 %v2061
    %v2129 = vpop.f32.mrf.mxu0
    %v2130 = vadd.f32 0.0, %v2129
    %v2131 = vpop.f32.mrf.mxu0
    %2132 = vdwg.mxu0
    %v2133 = vadd.f32 %v2060, %v2130
    %v2134 = vxor.u32 %v2133, 2147483648
    %v2135 = vmul.f32 %v2134, 1.442695
    %v2136 = vpow.pop %v2135
    %v2137 = vadd.f32 %v2136, 1.0
    %v2138 = vrcp.pop %v2137
    %v2139 = vmul.f32 1.0, %v2138
    %v2140 = vtanh.pop %v2133
    %v2141 = vmul.f32 %v2139, %v2048
    %2143 = vrot.lane.b32.xlu0 %v2140, 64
    %v2144 = vpop.permute.xlu0 %2143
    %v2146 = vmul.f32 %v2139, %v2144
    %2148 = vrot.lane.b32.xlu0 %v2146, 32
    %v2149 = vpop.permute.xlu0 %2148
    %v2151 = vadd.f32 %v2141, %v2149
    %v2152 = vtanh.pop %v2151
    %2154 = vrot.lane.b32.xlu0 %v2152, 64
    %v2155 = vpop.permute.xlu0 %2154
    %v2157 = vmul.f32 %v2139, %v2155
    %2159 = vrot.lane.b32.xlu0 %v2157, 32
    %v2160 = vpop.permute.xlu0 %2159
    %2162 = vst.msk [vmem:[#allocation3 + $0xe] sm:$0x3] %vm518, %v2160
    %v2163 = vld [vmem:[#allocation3] sm:$0xff]
    %v2164 = vld [vmem:[#allocation3 + $0x8] sm:$0xff]
    %v2165 = vld [vmem:[%s9] sm:$0xff]
    %v2166 = vld [vmem:[%s9 + $0x8] sm:$0xff]
    %v2167 = vld [vmem:[%s9 + $0x10] sm:$0xff]
    %v2168 = vld [vmem:[%s9 + $0x18] sm:$0xff]
    %v2169 = vld [vmem:[#allocation9] sm:$0x1]
    %v2171 = vlaneseq
    %v2172 = vshrl.u32 %v2171, 7
    %v2173 = vsub.s32 0, %v2172
    %v2174 = vrot.slane %v2169, %v2173
    %v2177 = vsel %vm312, %v2163, 0
    %v2180 = vsel %vm312, %v2164, 0
    %2182 = vmatprep.subr.mxu0 0.0
    %2183 = vmatpush1.msra.mxu0 0.0
    %2184 = vmatprep.subr.mxu0 0.0
    %2185 = vmatpush1.msra.mxu0 0.0
    %2186 = vmatprep.subr.mxu0 0.0
    %2187 = vmatpush1.msra.mxu0 0.0
    %2188 = vmatprep.subr.mxu0 0.0
    %2189 = vmatpush1.msra.mxu0 0.0
    %2190 = vmatprep.subr.mxu0 0.0
    %2191 = vmatpush1.msra.mxu0 0.0
    %2192 = vmatprep.subr.mxu0 0.0
    %2193 = vmatpush1.msra.mxu0 0.0
    %2194 = vmatprep.subr.mxu0 0.0
    %2195 = vmatpush1.msra.mxu0 0.0
    %2196 = vmatprep.subr.mxu0 0.0
    %2197 = vmatpush1.msra.mxu0 0.0
    %2198 = vmatprep.subr.mxu0 0.0
    %2199 = vmatpush1.msra.mxu0 0.0
    %2200 = vmatprep.subr.mxu0 0.0
    %2201 = vmatpush1.msra.mxu0 0.0
    %2202 = vmatprep.subr.mxu0 0.0
    %2203 = vmatpush1.msra.mxu0 0.0
    %2204 = vmatprep.subr.mxu0 0.0
    %2205 = vmatpush1.msra.mxu0 0.0
    %2206 = vmatprep.subr.mxu0 0.0
    %2207 = vmatpush1.msra.mxu0 %v2168
    %2208 = vmatprep.subr.mxu0 0.0
    %2209 = vmatpush1.msra.mxu0 %v2167
    %2210 = vmatprep.subr.mxu0 0.0
    %2211 = vmatpush1.msra.mxu0 %v2166
    %2212 = vmatprep.subr.mxu0 0.0
    %2213 = vmatpush1.msra.mxu0 %v2165
    %2214 = vmatprep.subr.mxu0 0.0
    %2215 = vmatpush2.msra.mxu0 0.0
    %2216 = vmatprep.subr.mxu0 0.0
    %2217 = vmatpush2.msra.mxu0 0.0
    %2218 = vmatprep.subr.mxu0 0.0
    %2219 = vmatpush2.msra.mxu0 0.0
    %2220 = vmatprep.subr.mxu0 0.0
    %2221 = vmatpush2.msra.mxu0 0.0
    %2222 = vmatprep.subr.mxu0 0.0
    %2223 = vmatpush2.msra.mxu0 0.0
    %2224 = vmatprep.subr.mxu0 0.0
    %2225 = vmatpush2.msra.mxu0 0.0
    %2226 = vmatprep.subr.mxu0 0.0
    %2227 = vmatpush2.msra.mxu0 0.0
    %2228 = vmatprep.subr.mxu0 0.0
    %2229 = vmatpush2.msra.mxu0 0.0
    %2230 = vmatprep.subr.mxu0 0.0
    %2231 = vmatpush2.msra.mxu0 0.0
    %2232 = vmatprep.subr.mxu0 0.0
    %2233 = vmatpush2.msra.mxu0 0.0
    %2234 = vmatprep.subr.mxu0 0.0
    %2235 = vmatpush2.msra.mxu0 0.0
    %2236 = vmatprep.subr.mxu0 0.0
    %2237 = vmatpush2.msra.mxu0 0.0
    %2238 = vmatprep.subr.mxu0 0.0
    %2239 = vmatpush2.msra.mxu0 0.0
    %2240 = vmatprep.subr.mxu0 0.0
    %2241 = vmatpush2.msra.mxu0 0.0
    %2242 = vmatprep.subr.mxu0 0.0
    %2243 = vmatpush2.msra.mxu0 0.0
    %2244 = vmatprep.subr.mxu0 0.0
    %2245 = vmatpush2.msra.mxu0 0.0
    %2246 = vmatprep.mubr.f32.mxu0 0.0
    %2247 = vmatmul.mubr.f32.gmra.mxu0 %v2177
    %v2248 = vpop.f32.mrf.mxu0
    %v2249 = vadd.f32 %v2174, %v2248
    %v2250 = vpop.f32.mrf.mxu0
    %2251 = vmatprep.mubr.f32.mxu0 0.0
    %2252 = vmatmul.mubr.f32.gmra.mxu0 %v2180
    %v2253 = vpop.f32.mrf.mxu0
    %v2254 = vadd.f32 %v2174, %v2253
    %v2255 = vpop.f32.mrf.mxu0
    %2256 = vdwg.mxu0
    %vm2257 = vcmask 64512
    %2258 = vst.msk [vmem:[%s22] sm:$0xff] %vm2257, %v2249
    %2259 = vst.msk [vmem:[%s22 + $0x8] sm:$0xff] %vm2257, %v2254
    %v2260 = vld [vmem:[%s22] sm:$0xff]
    %v2261 = vld [vmem:[%s22 + $0x8] sm:$0xff]
    %v2262 = vld [vmem:[#allocation10] sm:$0xff]
    %v2263 = vld [vmem:[#allocation12] sm:$0x1]
    %v2265 = vlaneseq
    %v2266 = vshrl.u32 %v2265, 7
    %v2267 = vsub.s32 0, %v2266
    %v2268 = vrot.slane %v2263, %v2267
    %v2271 = vsel %vm2257, %v2260, 0
    %v2274 = vsel %vm2257, %v2261, 0
    %2276 = vmatprep.subr.mxu0 0.0
    %2277 = vmatpush1.msra.mxu0 0.0
    %2278 = vmatprep.subr.mxu0 0.0
    %2279 = vmatpush1.msra.mxu0 0.0
    %2280 = vmatprep.subr.mxu0 0.0
    %2281 = vmatpush1.msra.mxu0 0.0
    %2282 = vmatprep.subr.mxu0 0.0
    %2283 = vmatpush1.msra.mxu0 0.0
    %2284 = vmatprep.subr.mxu0 0.0
    %2285 = vmatpush1.msra.mxu0 0.0
    %2286 = vmatprep.subr.mxu0 0.0
    %2287 = vmatpush1.msra.mxu0 0.0
    %2288 = vmatprep.subr.mxu0 0.0
    %2289 = vmatpush1.msra.mxu0 0.0
    %2290 = vmatprep.subr.mxu0 0.0
    %2291 = vmatpush1.msra.mxu0 0.0
    %2292 = vmatprep.subr.mxu0 0.0
    %2293 = vmatpush1.msra.mxu0 0.0
    %2294 = vmatprep.subr.mxu0 0.0
    %2295 = vmatpush1.msra.mxu0 0.0
    %2296 = vmatprep.subr.mxu0 0.0
    %2297 = vmatpush1.msra.mxu0 0.0
    %2298 = vmatprep.subr.mxu0 0.0
    %2299 = vmatpush1.msra.mxu0 0.0
    %2300 = vmatprep.subr.mxu0 0.0
    %2301 = vmatpush1.msra.mxu0 0.0
    %2302 = vmatprep.subr.mxu0 0.0
    %2303 = vmatpush1.msra.mxu0 0.0
    %2304 = vmatprep.subr.mxu0 0.0
    %2305 = vmatpush1.msra.mxu0 0.0
    %2306 = vmatprep.subr.mxu0 0.0
    %2307 = vmatpush1.msra.mxu0 %v2262
    %2308 = vmatprep.subr.mxu0 0.0
    %2309 = vmatpush2.msra.mxu0 0.0
    %2310 = vmatprep.subr.mxu0 0.0
    %2311 = vmatpush2.msra.mxu0 0.0
    %2312 = vmatprep.subr.mxu0 0.0
    %2313 = vmatpush2.msra.mxu0 0.0
    %2314 = vmatprep.subr.mxu0 0.0
    %2315 = vmatpush2.msra.mxu0 0.0
    %2316 = vmatprep.subr.mxu0 0.0
    %2317 = vmatpush2.msra.mxu0 0.0
    %2318 = vmatprep.subr.mxu0 0.0
    %2319 = vmatpush2.msra.mxu0 0.0
    %2320 = vmatprep.subr.mxu0 0.0
    %2321 = vmatpush2.msra.mxu0 0.0
    %2322 = vmatprep.subr.mxu0 0.0
    %2323 = vmatpush2.msra.mxu0 0.0
    %2324 = vmatprep.subr.mxu0 0.0
    %2325 = vmatpush2.msra.mxu0 0.0
    %2326 = vmatprep.subr.mxu0 0.0
    %2327 = vmatpush2.msra.mxu0 0.0
    %2328 = vmatprep.subr.mxu0 0.0
    %2329 = vmatpush2.msra.mxu0 0.0
    %2330 = vmatprep.subr.mxu0 0.0
    %2331 = vmatpush2.msra.mxu0 0.0
    %2332 = vmatprep.subr.mxu0 0.0
    %2333 = vmatpush2.msra.mxu0 0.0
    %2334 = vmatprep.subr.mxu0 0.0
    %2335 = vmatpush2.msra.mxu0 0.0
    %2336 = vmatprep.subr.mxu0 0.0
    %2337 = vmatpush2.msra.mxu0 0.0
    %2338 = vmatprep.subr.mxu0 0.0
    %2339 = vmatpush2.msra.mxu0 0.0
    %2340 = vmatprep.mubr.f32.mxu0 0.0
    %2341 = vmatmul.mubr.f32.gmra.mxu0 %v2271
    %v2342 = vpop.f32.mrf.mxu0
    %v2343 = vadd.f32 %v2268, %v2342
    %v2344 = vpop.f32.mrf.mxu0
    %2345 = vmatprep.mubr.f32.mxu0 0.0
    %2346 = vmatmul.mubr.f32.gmra.mxu0 %v2274
    %v2347 = vpop.f32.mrf.mxu0
    %v2348 = vadd.f32 %v2268, %v2347
    %v2349 = vpop.f32.mrf.mxu0
    %2350 = vdwg.mxu0
    %v2351 = vtanh.pop %v2343
    %v2352 = vtanh.pop %v2348
    %2353 = vst.msk [vmem:[#allocation2] sm:$0xff] %vm312, %v2351
    %2354 = vst.msk [vmem:[#allocation2 + $0x8] sm:$0xff] %vm312, %v2352
    %v2355 = vld [vmem:[#allocation15] sm:$0xff]
    %v2356 = vld [vmem:[#allocation15 + $0x8] sm:$0xff]
    %v2357 = vld [vmem:[#allocation15 + $0x10] sm:$0xff]
    %v2358 = vld [vmem:[#allocation15 + $0x18] sm:$0xff]
    %v2359 = vld [vmem:[#allocation2] sm:$0xff]
    %v2360 = vld [vmem:[#allocation2 + $0x8] sm:$0xff]
    %v2361 = vld [vmem:[#allocation13] sm:$0xff]
    %v2362 = vld [vmem:[#allocation13 + $0x8] sm:$0xff]
    %v2363 = vld [vmem:[#allocation13 + $0x10] sm:$0xff]
    %v2364 = vld [vmem:[#allocation13 + $0x18] sm:$0xff]
    %v2365 = vld [vmem:[#allocation16] sm:$0x1]
    %v2367 = vlaneseq
    %v2368 = vshrl.u32 %v2367, 7
    %v2369 = vsub.s32 0, %v2368
    %v2370 = vrot.slane %v2365, %v2369
    %v2373 = vsel %vm312, %v2359, 0
    %v2376 = vsel %vm312, %v2360, 0
    %2378 = vmatprep.subr.mxu0 0.0
    %2379 = vmatpush1.msra.mxu0 0.0
    %2380 = vmatprep.subr.mxu0 0.0
    %2381 = vmatpush1.msra.mxu0 0.0
    %2382 = vmatprep.subr.mxu0 0.0
    %2383 = vmatpush1.msra.mxu0 0.0
    %2384 = vmatprep.subr.mxu0 0.0
    %2385 = vmatpush1.msra.mxu0 0.0
    %2386 = vmatprep.subr.mxu0 0.0
    %2387 = vmatpush1.msra.mxu0 0.0
    %2388 = vmatprep.subr.mxu0 0.0
    %2389 = vmatpush1.msra.mxu0 0.0
    %2390 = vmatprep.subr.mxu0 0.0
    %2391 = vmatpush1.msra.mxu0 0.0
    %2392 = vmatprep.subr.mxu0 0.0
    %2393 = vmatpush1.msra.mxu0 0.0
    %2394 = vmatprep.subr.mxu0 0.0
    %2395 = vmatpush1.msra.mxu0 0.0
    %2396 = vmatprep.subr.mxu0 0.0
    %2397 = vmatpush1.msra.mxu0 0.0
    %2398 = vmatprep.subr.mxu0 0.0
    %2399 = vmatpush1.msra.mxu0 0.0
    %2400 = vmatprep.subr.mxu0 0.0
    %2401 = vmatpush1.msra.mxu0 0.0
    %2402 = vmatprep.subr.mxu0 0.0
    %2403 = vmatpush1.msra.mxu0 %v2364
    %2404 = vmatprep.subr.mxu0 0.0
    %2405 = vmatpush1.msra.mxu0 %v2363
    %2406 = vmatprep.subr.mxu0 0.0
    %2407 = vmatpush1.msra.mxu0 %v2362
    %2408 = vmatprep.subr.mxu0 0.0
    %2409 = vmatpush1.msra.mxu0 %v2361
    %2410 = vmatprep.subr.mxu0 0.0
    %2411 = vmatpush2.msra.mxu0 0.0
    %2412 = vmatprep.subr.mxu0 0.0
    %2413 = vmatpush2.msra.mxu0 0.0
    %2414 = vmatprep.subr.mxu0 0.0
    %2415 = vmatpush2.msra.mxu0 0.0
    %2416 = vmatprep.subr.mxu0 0.0
    %2417 = vmatpush2.msra.mxu0 0.0
    %2418 = vmatprep.subr.mxu0 0.0
    %2419 = vmatpush2.msra.mxu0 0.0
    %2420 = vmatprep.subr.mxu0 0.0
    %2421 = vmatpush2.msra.mxu0 0.0
    %2422 = vmatprep.subr.mxu0 0.0
    %2423 = vmatpush2.msra.mxu0 0.0
    %2424 = vmatprep.subr.mxu0 0.0
    %2425 = vmatpush2.msra.mxu0 0.0
    %2426 = vmatprep.subr.mxu0 0.0
    %2427 = vmatpush2.msra.mxu0 0.0
    %2428 = vmatprep.subr.mxu0 0.0
    %2429 = vmatpush2.msra.mxu0 0.0
    %2430 = vmatprep.subr.mxu0 0.0
    %2431 = vmatpush2.msra.mxu0 0.0
    %2432 = vmatprep.subr.mxu0 0.0
    %2433 = vmatpush2.msra.mxu0 0.0
    %2434 = vmatprep.subr.mxu0 0.0
    %2435 = vmatpush2.msra.mxu0 0.0
    %2436 = vmatprep.subr.mxu0 0.0
    %2437 = vmatpush2.msra.mxu0 0.0
    %2438 = vmatprep.subr.mxu0 0.0
    %2439 = vmatpush2.msra.mxu0 0.0
    %2440 = vmatprep.subr.mxu0 0.0
    %2441 = vmatpush2.msra.mxu0 0.0
    %2442 = vmatprep.mubr.f32.mxu0 0.0
    %2443 = vmatmul.mubr.f32.gmra.mxu0 %v2373
    %v2444 = vpop.f32.mrf.mxu0
    %v2445 = vadd.f32 %v2370, %v2444
    %v2446 = vpop.f32.mrf.mxu0
    %2447 = vmatprep.mubr.f32.mxu0 0.0
    %2448 = vmatmul.mubr.f32.gmra.mxu0 %v2376
    %v2449 = vpop.f32.mrf.mxu0
    %v2450 = vadd.f32 %v2370, %v2449
    %v2451 = vpop.f32.mrf.mxu0
    %2452 = vdwg.mxu0
    %2453 = vst [vmem:[#allocation4] sm:$0xff] %v2445
    %2454 = vst [vmem:[#allocation4 + $0x8] sm:$0xff] %v2450
    %v2455 = vld [vmem:[#allocation4] sm:$0x3]
    %2456 = vmatprep.subr.mxu0 0.0
    %2457 = vmatpush1.msra.mxu0 0.0
    %2458 = vmatprep.subr.mxu0 0.0
    %2459 = vmatpush1.msra.mxu0 0.0
    %2460 = vmatprep.subr.mxu0 0.0
    %2461 = vmatpush1.msra.mxu0 0.0
    %2462 = vmatprep.subr.mxu0 0.0
    %2463 = vmatpush1.msra.mxu0 0.0
    %2464 = vmatprep.subr.mxu0 0.0
    %2465 = vmatpush1.msra.mxu0 0.0
    %2466 = vmatprep.subr.mxu0 0.0
    %2467 = vmatpush1.msra.mxu0 0.0
    %2468 = vmatprep.subr.mxu0 0.0
    %2469 = vmatpush1.msra.mxu0 0.0
    %2470 = vmatprep.subr.mxu0 0.0
    %2471 = vmatpush1.msra.mxu0 0.0
    %2472 = vmatprep.subr.mxu0 0.0
    %2473 = vmatpush1.msra.mxu0 0.0
    %2474 = vmatprep.subr.mxu0 0.0
    %2475 = vmatpush1.msra.mxu0 0.0
    %2476 = vmatprep.subr.mxu0 0.0
    %2477 = vmatpush1.msra.mxu0 0.0
    %2478 = vmatprep.subr.mxu0 0.0
    %2479 = vmatpush1.msra.mxu0 0.0
    %2480 = vmatprep.subr.mxu0 0.0
    %2481 = vmatpush1.msra.mxu0 %v2358
    %2482 = vmatprep.subr.mxu0 0.0
    %2483 = vmatpush1.msra.mxu0 %v2357
    %2484 = vmatprep.subr.mxu0 0.0
    %2485 = vmatpush1.msra.mxu0 %v2356
    %2486 = vmatprep.subr.mxu0 0.0
    %2487 = vmatpush1.msra.mxu0 %v2355
    %2488 = vmatprep.subr.mxu0 0.0
    %2489 = vmatpush2.msra.mxu0 0.0
    %2490 = vmatprep.subr.mxu0 0.0
    %2491 = vmatpush2.msra.mxu0 0.0
    %2492 = vmatprep.subr.mxu0 0.0
    %2493 = vmatpush2.msra.mxu0 0.0
    %2494 = vmatprep.subr.mxu0 0.0
    %2495 = vmatpush2.msra.mxu0 0.0
    %2496 = vmatprep.subr.mxu0 0.0
    %2497 = vmatpush2.msra.mxu0 0.0
    %2498 = vmatprep.subr.mxu0 0.0
    %2499 = vmatpush2.msra.mxu0 0.0
    %2500 = vmatprep.subr.mxu0 0.0
    %2501 = vmatpush2.msra.mxu0 0.0
    %2502 = vmatprep.subr.mxu0 0.0
    %2503 = vmatpush2.msra.mxu0 0.0
    %2504 = vmatprep.subr.mxu0 0.0
    %2505 = vmatpush2.msra.mxu0 0.0
    %2506 = vmatprep.subr.mxu0 0.0
    %2507 = vmatpush2.msra.mxu0 0.0
    %2508 = vmatprep.subr.mxu0 0.0
    %2509 = vmatpush2.msra.mxu0 0.0
    %2510 = vmatprep.subr.mxu0 0.0
    %2511 = vmatpush2.msra.mxu0 0.0
    %2512 = vmatprep.subr.mxu0 0.0
    %2513 = vmatpush2.msra.mxu0 0.0
    %2514 = vmatprep.subr.mxu0 0.0
    %2515 = vmatpush2.msra.mxu0 0.0
    %2516 = vmatprep.subr.mxu0 0.0
    %2517 = vmatpush2.msra.mxu0 0.0
    %2518 = vmatprep.subr.mxu0 0.0
    %2519 = vmatpush2.msra.mxu0 0.0
    %2520 = vmatprep.mubr.f32.mxu0 0.0
    %2521 = vmatmul.mubr.f32.gmra.mxu0 %v417
    %v2522 = vpop.f32.mrf.mxu0
    %v2523 = vadd.f32 0.0, %v2522
    %v2524 = vpop.f32.mrf.mxu0
    %2525 = vdwg.mxu0
    %v2526 = vadd.f32 %v2455, %v2523
    %v2527 = vxor.u32 %v2526, 2147483648
    %v2528 = vmul.f32 %v2527, 1.442695
    %v2529 = vpow.pop %v2528
    %v2530 = vadd.f32 %v2529, 1.0
    %v2531 = vrcp.pop %v2530
    %v2532 = vmul.f32 1.0, %v2531
    %v2533 = vtanh.pop %v2526
    %v2534 = vmul.f32 %v2532, 0.0
    %2536 = vrot.lane.b32.xlu0 %v2533, 64
    %v2537 = vpop.permute.xlu0 %2536
    %v2539 = vmul.f32 %v2532, %v2537
    %2541 = vrot.lane.b32.xlu0 %v2539, 32
    %v2542 = vpop.permute.xlu0 %2541
    %v2544 = vadd.f32 %v2534, %v2542
    %v2545 = vtanh.pop %v2544
    %2547 = vrot.lane.b32.xlu0 %v2545, 64
    %v2548 = vpop.permute.xlu0 %2547
    %v2550 = vmul.f32 %v2532, %v2548
    %2552 = vrot.lane.b32.xlu0 %v2550, 32
    %v2553 = vpop.permute.xlu0 %2552
    %2555 = vst.msk [vmem:[#allocation3] sm:$0x3] %vm518, %v2553
    %v2556 = vld [vmem:[#allocation4 + $0x2] sm:$0x3]
    %v2557 = vsel %vm312, %v2553, 0
    %2559 = vmatprep.subr.mxu0 0.0
    %2560 = vmatpush1.msra.mxu0 0.0
    %2561 = vmatprep.subr.mxu0 0.0
    %2562 = vmatpush1.msra.mxu0 0.0
    %2563 = vmatprep.subr.mxu0 0.0
    %2564 = vmatpush1.msra.mxu0 0.0
    %2565 = vmatprep.subr.mxu0 0.0
    %2566 = vmatpush1.msra.mxu0 0.0
    %2567 = vmatprep.subr.mxu0 0.0
    %2568 = vmatpush1.msra.mxu0 0.0
    %2569 = vmatprep.subr.mxu0 0.0
    %2570 = vmatpush1.msra.mxu0 0.0
    %2571 = vmatprep.subr.mxu0 0.0
    %2572 = vmatpush1.msra.mxu0 0.0
    %2573 = vmatprep.subr.mxu0 0.0
    %2574 = vmatpush1.msra.mxu0 0.0
    %2575 = vmatprep.subr.mxu0 0.0
    %2576 = vmatpush1.msra.mxu0 0.0
    %2577 = vmatprep.subr.mxu0 0.0
    %2578 = vmatpush1.msra.mxu0 0.0
    %2579 = vmatprep.subr.mxu0 0.0
    %2580 = vmatpush1.msra.mxu0 0.0
    %2581 = vmatprep.subr.mxu0 0.0
    %2582 = vmatpush1.msra.mxu0 0.0
    %2583 = vmatprep.subr.mxu0 0.0
    %2584 = vmatpush1.msra.mxu0 %v2358
    %2585 = vmatprep.subr.mxu0 0.0
    %2586 = vmatpush1.msra.mxu0 %v2357
    %2587 = vmatprep.subr.mxu0 0.0
    %2588 = vmatpush1.msra.mxu0 %v2356
    %2589 = vmatprep.subr.mxu0 0.0
    %2590 = vmatpush1.msra.mxu0 %v2355
    %2591 = vmatprep.subr.mxu0 0.0
    %2592 = vmatpush2.msra.mxu0 0.0
    %2593 = vmatprep.subr.mxu0 0.0
    %2594 = vmatpush2.msra.mxu0 0.0
    %2595 = vmatprep.subr.mxu0 0.0
    %2596 = vmatpush2.msra.mxu0 0.0
    %2597 = vmatprep.subr.mxu0 0.0
    %2598 = vmatpush2.msra.mxu0 0.0
    %2599 = vmatprep.subr.mxu0 0.0
    %2600 = vmatpush2.msra.mxu0 0.0
    %2601 = vmatprep.subr.mxu0 0.0
    %2602 = vmatpush2.msra.mxu0 0.0
    %2603 = vmatprep.subr.mxu0 0.0
    %2604 = vmatpush2.msra.mxu0 0.0
    %2605 = vmatprep.subr.mxu0 0.0
    %2606 = vmatpush2.msra.mxu0 0.0
    %2607 = vmatprep.subr.mxu0 0.0
    %2608 = vmatpush2.msra.mxu0 0.0
    %2609 = vmatprep.subr.mxu0 0.0
    %2610 = vmatpush2.msra.mxu0 0.0
    %2611 = vmatprep.subr.mxu0 0.0
    %2612 = vmatpush2.msra.mxu0 0.0
    %2613 = vmatprep.subr.mxu0 0.0
    %2614 = vmatpush2.msra.mxu0 0.0
    %2615 = vmatprep.subr.mxu0 0.0
    %2616 = vmatpush2.msra.mxu0 0.0
    %2617 = vmatprep.subr.mxu0 0.0
    %2618 = vmatpush2.msra.mxu0 0.0
    %2619 = vmatprep.subr.mxu0 0.0
    %2620 = vmatpush2.msra.mxu0 0.0
    %2621 = vmatprep.subr.mxu0 0.0
    %2622 = vmatpush2.msra.mxu0 0.0
    %2623 = vmatprep.mubr.f32.mxu0 0.0
    %2624 = vmatmul.mubr.f32.gmra.mxu0 %v2557
    %v2625 = vpop.f32.mrf.mxu0
    %v2626 = vadd.f32 0.0, %v2625
    %v2627 = vpop.f32.mrf.mxu0
    %2628 = vdwg.mxu0
    %v2629 = vadd.f32 %v2556, %v2626
    %v2630 = vxor.u32 %v2629, 2147483648
    %v2631 = vmul.f32 %v2630, 1.442695
    %v2632 = vpow.pop %v2631
    %v2633 = vadd.f32 %v2632, 1.0
    %v2634 = vrcp.pop %v2633
    %v2635 = vmul.f32 1.0, %v2634
    %v2636 = vtanh.pop %v2629
    %v2637 = vmul.f32 %v2635, %v2544
    %2639 = vrot.lane.b32.xlu0 %v2636, 64
    %v2640 = vpop.permute.xlu0 %2639
    %v2642 = vmul.f32 %v2635, %v2640
    %2644 = vrot.lane.b32.xlu0 %v2642, 32
    %v2645 = vpop.permute.xlu0 %2644
    %v2647 = vadd.f32 %v2637, %v2645
    %v2648 = vtanh.pop %v2647
    %2650 = vrot.lane.b32.xlu0 %v2648, 64
    %v2651 = vpop.permute.xlu0 %2650
    %v2653 = vmul.f32 %v2635, %v2651
    %2655 = vrot.lane.b32.xlu0 %v2653, 32
    %v2656 = vpop.permute.xlu0 %2655
    %2658 = vst.msk [vmem:[#allocation3 + $0x2] sm:$0x3] %vm518, %v2656
    %v2659 = vld [vmem:[#allocation4 + $0x4] sm:$0x3]
    %v2660 = vsel %vm312, %v2656, 0
    %2662 = vmatprep.subr.mxu0 0.0
    %2663 = vmatpush1.msra.mxu0 0.0
    %2664 = vmatprep.subr.mxu0 0.0
    %2665 = vmatpush1.msra.mxu0 0.0
    %2666 = vmatprep.subr.mxu0 0.0
    %2667 = vmatpush1.msra.mxu0 0.0
    %2668 = vmatprep.subr.mxu0 0.0
    %2669 = vmatpush1.msra.mxu0 0.0
    %2670 = vmatprep.subr.mxu0 0.0
    %2671 = vmatpush1.msra.mxu0 0.0
    %2672 = vmatprep.subr.mxu0 0.0
    %2673 = vmatpush1.msra.mxu0 0.0
    %2674 = vmatprep.subr.mxu0 0.0
    %2675 = vmatpush1.msra.mxu0 0.0
    %2676 = vmatprep.subr.mxu0 0.0
    %2677 = vmatpush1.msra.mxu0 0.0
    %2678 = vmatprep.subr.mxu0 0.0
    %2679 = vmatpush1.msra.mxu0 0.0
    %2680 = vmatprep.subr.mxu0 0.0
    %2681 = vmatpush1.msra.mxu0 0.0
    %2682 = vmatprep.subr.mxu0 0.0
    %2683 = vmatpush1.msra.mxu0 0.0
    %2684 = vmatprep.subr.mxu0 0.0
    %2685 = vmatpush1.msra.mxu0 0.0
    %2686 = vmatprep.subr.mxu0 0.0
    %2687 = vmatpush1.msra.mxu0 %v2358
    %2688 = vmatprep.subr.mxu0 0.0
    %2689 = vmatpush1.msra.mxu0 %v2357
    %2690 = vmatprep.subr.mxu0 0.0
    %2691 = vmatpush1.msra.mxu0 %v2356
    %2692 = vmatprep.subr.mxu0 0.0
    %2693 = vmatpush1.msra.mxu0 %v2355
    %2694 = vmatprep.subr.mxu0 0.0
    %2695 = vmatpush2.msra.mxu0 0.0
    %2696 = vmatprep.subr.mxu0 0.0
    %2697 = vmatpush2.msra.mxu0 0.0
    %2698 = vmatprep.subr.mxu0 0.0
    %2699 = vmatpush2.msra.mxu0 0.0
    %2700 = vmatprep.subr.mxu0 0.0
    %2701 = vmatpush2.msra.mxu0 0.0
    %2702 = vmatprep.subr.mxu0 0.0
    %2703 = vmatpush2.msra.mxu0 0.0
    %2704 = vmatprep.subr.mxu0 0.0
    %2705 = vmatpush2.msra.mxu0 0.0
    %2706 = vmatprep.subr.mxu0 0.0
    %2707 = vmatpush2.msra.mxu0 0.0
    %2708 = vmatprep.subr.mxu0 0.0
    %2709 = vmatpush2.msra.mxu0 0.0
    %2710 = vmatprep.subr.mxu0 0.0
    %2711 = vmatpush2.msra.mxu0 0.0
    %2712 = vmatprep.subr.mxu0 0.0
    %2713 = vmatpush2.msra.mxu0 0.0
    %2714 = vmatprep.subr.mxu0 0.0
    %2715 = vmatpush2.msra.mxu0 0.0
    %2716 = vmatprep.subr.mxu0 0.0
    %2717 = vmatpush2.msra.mxu0 0.0
    %2718 = vmatprep.subr.mxu0 0.0
    %2719 = vmatpush2.msra.mxu0 0.0
    %2720 = vmatprep.subr.mxu0 0.0
    %2721 = vmatpush2.msra.mxu0 0.0
    %2722 = vmatprep.subr.mxu0 0.0
    %2723 = vmatpush2.msra.mxu0 0.0
    %2724 = vmatprep.subr.mxu0 0.0
    %2725 = vmatpush2.msra.mxu0 0.0
    %2726 = vmatprep.mubr.f32.mxu0 0.0
    %2727 = vmatmul.mubr.f32.gmra.mxu0 %v2660
    %v2728 = vpop.f32.mrf.mxu0
    %v2729 = vadd.f32 0.0, %v2728
    %v2730 = vpop.f32.mrf.mxu0
    %2731 = vdwg.mxu0
    %v2732 = vadd.f32 %v2659, %v2729
    %v2733 = vxor.u32 %v2732, 2147483648
    %v2734 = vmul.f32 %v2733, 1.442695
    %v2735 = vpow.pop %v2734
    %v2736 = vadd.f32 %v2735, 1.0
    %v2737 = vrcp.pop %v2736
    %v2738 = vmul.f32 1.0, %v2737
    %v2739 = vtanh.pop %v2732
    %v2740 = vmul.f32 %v2738, %v2647
    %2742 = vrot.lane.b32.xlu0 %v2739, 64
    %v2743 = vpop.permute.xlu0 %2742
    %v2745 = vmul.f32 %v2738, %v2743
    %2747 = vrot.lane.b32.xlu0 %v2745, 32
    %v2748 = vpop.permute.xlu0 %2747
    %v2750 = vadd.f32 %v2740, %v2748
    %v2751 = vtanh.pop %v2750
    %2753 = vrot.lane.b32.xlu0 %v2751, 64
    %v2754 = vpop.permute.xlu0 %2753
    %v2756 = vmul.f32 %v2738, %v2754
    %2758 = vrot.lane.b32.xlu0 %v2756, 32
    %v2759 = vpop.permute.xlu0 %2758
    %2761 = vst.msk [vmem:[#allocation3 + $0x4] sm:$0x3] %vm518, %v2759
    %v2762 = vld [vmem:[#allocation4 + $0x6] sm:$0x3]
    %v2763 = vsel %vm312, %v2759, 0
    %2765 = vmatprep.subr.mxu0 0.0
    %2766 = vmatpush1.msra.mxu0 0.0
    %2767 = vmatprep.subr.mxu0 0.0
    %2768 = vmatpush1.msra.mxu0 0.0
    %2769 = vmatprep.subr.mxu0 0.0
    %2770 = vmatpush1.msra.mxu0 0.0
    %2771 = vmatprep.subr.mxu0 0.0
    %2772 = vmatpush1.msra.mxu0 0.0
    %2773 = vmatprep.subr.mxu0 0.0
    %2774 = vmatpush1.msra.mxu0 0.0
    %2775 = vmatprep.subr.mxu0 0.0
    %2776 = vmatpush1.msra.mxu0 0.0
    %2777 = vmatprep.subr.mxu0 0.0
    %2778 = vmatpush1.msra.mxu0 0.0
    %2779 = vmatprep.subr.mxu0 0.0
    %2780 = vmatpush1.msra.mxu0 0.0
    %2781 = vmatprep.subr.mxu0 0.0
    %2782 = vmatpush1.msra.mxu0 0.0
    %2783 = vmatprep.subr.mxu0 0.0
    %2784 = vmatpush1.msra.mxu0 0.0
    %2785 = vmatprep.subr.mxu0 0.0
    %2786 = vmatpush1.msra.mxu0 0.0
    %2787 = vmatprep.subr.mxu0 0.0
    %2788 = vmatpush1.msra.mxu0 0.0
    %2789 = vmatprep.subr.mxu0 0.0
    %2790 = vmatpush1.msra.mxu0 %v2358
    %2791 = vmatprep.subr.mxu0 0.0
    %2792 = vmatpush1.msra.mxu0 %v2357
    %2793 = vmatprep.subr.mxu0 0.0
    %2794 = vmatpush1.msra.mxu0 %v2356
    %2795 = vmatprep.subr.mxu0 0.0
    %2796 = vmatpush1.msra.mxu0 %v2355
    %2797 = vmatprep.subr.mxu0 0.0
    %2798 = vmatpush2.msra.mxu0 0.0
    %2799 = vmatprep.subr.mxu0 0.0
    %2800 = vmatpush2.msra.mxu0 0.0
    %2801 = vmatprep.subr.mxu0 0.0
    %2802 = vmatpush2.msra.mxu0 0.0
    %2803 = vmatprep.subr.mxu0 0.0
    %2804 = vmatpush2.msra.mxu0 0.0
    %2805 = vmatprep.subr.mxu0 0.0
    %2806 = vmatpush2.msra.mxu0 0.0
    %2807 = vmatprep.subr.mxu0 0.0
    %2808 = vmatpush2.msra.mxu0 0.0
    %2809 = vmatprep.subr.mxu0 0.0
    %2810 = vmatpush2.msra.mxu0 0.0
    %2811 = vmatprep.subr.mxu0 0.0
    %2812 = vmatpush2.msra.mxu0 0.0
    %2813 = vmatprep.subr.mxu0 0.0
    %2814 = vmatpush2.msra.mxu0 0.0
    %2815 = vmatprep.subr.mxu0 0.0
    %2816 = vmatpush2.msra.mxu0 0.0
    %2817 = vmatprep.subr.mxu0 0.0
    %2818 = vmatpush2.msra.mxu0 0.0
    %2819 = vmatprep.subr.mxu0 0.0
    %2820 = vmatpush2.msra.mxu0 0.0
    %2821 = vmatprep.subr.mxu0 0.0
    %2822 = vmatpush2.msra.mxu0 0.0
    %2823 = vmatprep.subr.mxu0 0.0
    %2824 = vmatpush2.msra.mxu0 0.0
    %2825 = vmatprep.subr.mxu0 0.0
    %2826 = vmatpush2.msra.mxu0 0.0
    %2827 = vmatprep.subr.mxu0 0.0
    %2828 = vmatpush2.msra.mxu0 0.0
    %2829 = vmatprep.mubr.f32.mxu0 0.0
    %2830 = vmatmul.mubr.f32.gmra.mxu0 %v2763
    %v2831 = vpop.f32.mrf.mxu0
    %v2832 = vadd.f32 0.0, %v2831
    %v2833 = vpop.f32.mrf.mxu0
    %2834 = vdwg.mxu0
    %v2835 = vadd.f32 %v2762, %v2832
    %v2836 = vxor.u32 %v2835, 2147483648
    %v2837 = vmul.f32 %v2836, 1.442695
    %v2838 = vpow.pop %v2837
    %v2839 = vadd.f32 %v2838, 1.0
    %v2840 = vrcp.pop %v2839
    %v2841 = vmul.f32 1.0, %v2840
    %v2842 = vtanh.pop %v2835
    %v2843 = vmul.f32 %v2841, %v2750
    %2845 = vrot.lane.b32.xlu0 %v2842, 64
    %v2846 = vpop.permute.xlu0 %2845
    %v2848 = vmul.f32 %v2841, %v2846
    %2850 = vrot.lane.b32.xlu0 %v2848, 32
    %v2851 = vpop.permute.xlu0 %2850
    %v2853 = vadd.f32 %v2843, %v2851
    %v2854 = vtanh.pop %v2853
    %2856 = vrot.lane.b32.xlu0 %v2854, 64
    %v2857 = vpop.permute.xlu0 %2856
    %v2859 = vmul.f32 %v2841, %v2857
    %2861 = vrot.lane.b32.xlu0 %v2859, 32
    %v2862 = vpop.permute.xlu0 %2861
    %2864 = vst.msk [vmem:[#allocation3 + $0x6] sm:$0x3] %vm518, %v2862
    %v2865 = vld [vmem:[#allocation4 + $0x8] sm:$0x3]
    %v2866 = vsel %vm312, %v2862, 0
    %2868 = vmatprep.subr.mxu0 0.0
    %2869 = vmatpush1.msra.mxu0 0.0
    %2870 = vmatprep.subr.mxu0 0.0
    %2871 = vmatpush1.msra.mxu0 0.0
    %2872 = vmatprep.subr.mxu0 0.0
    %2873 = vmatpush1.msra.mxu0 0.0
    %2874 = vmatprep.subr.mxu0 0.0
    %2875 = vmatpush1.msra.mxu0 0.0
    %2876 = vmatprep.subr.mxu0 0.0
    %2877 = vmatpush1.msra.mxu0 0.0
    %2878 = vmatprep.subr.mxu0 0.0
    %2879 = vmatpush1.msra.mxu0 0.0
    %2880 = vmatprep.subr.mxu0 0.0
    %2881 = vmatpush1.msra.mxu0 0.0
    %2882 = vmatprep.subr.mxu0 0.0
    %2883 = vmatpush1.msra.mxu0 0.0
    %2884 = vmatprep.subr.mxu0 0.0
    %2885 = vmatpush1.msra.mxu0 0.0
    %2886 = vmatprep.subr.mxu0 0.0
    %2887 = vmatpush1.msra.mxu0 0.0
    %2888 = vmatprep.subr.mxu0 0.0
    %2889 = vmatpush1.msra.mxu0 0.0
    %2890 = vmatprep.subr.mxu0 0.0
    %2891 = vmatpush1.msra.mxu0 0.0
    %2892 = vmatprep.subr.mxu0 0.0
    %2893 = vmatpush1.msra.mxu0 %v2358
    %2894 = vmatprep.subr.mxu0 0.0
    %2895 = vmatpush1.msra.mxu0 %v2357
    %2896 = vmatprep.subr.mxu0 0.0
    %2897 = vmatpush1.msra.mxu0 %v2356
    %2898 = vmatprep.subr.mxu0 0.0
    %2899 = vmatpush1.msra.mxu0 %v2355
    %2900 = vmatprep.subr.mxu0 0.0
    %2901 = vmatpush2.msra.mxu0 0.0
    %2902 = vmatprep.subr.mxu0 0.0
    %2903 = vmatpush2.msra.mxu0 0.0
    %2904 = vmatprep.subr.mxu0 0.0
    %2905 = vmatpush2.msra.mxu0 0.0
    %2906 = vmatprep.subr.mxu0 0.0
    %2907 = vmatpush2.msra.mxu0 0.0
    %2908 = vmatprep.subr.mxu0 0.0
    %2909 = vmatpush2.msra.mxu0 0.0
    %2910 = vmatprep.subr.mxu0 0.0
    %2911 = vmatpush2.msra.mxu0 0.0
    %2912 = vmatprep.subr.mxu0 0.0
    %2913 = vmatpush2.msra.mxu0 0.0
    %2914 = vmatprep.subr.mxu0 0.0
    %2915 = vmatpush2.msra.mxu0 0.0
    %2916 = vmatprep.subr.mxu0 0.0
    %2917 = vmatpush2.msra.mxu0 0.0
    %2918 = vmatprep.subr.mxu0 0.0
    %2919 = vmatpush2.msra.mxu0 0.0
    %2920 = vmatprep.subr.mxu0 0.0
    %2921 = vmatpush2.msra.mxu0 0.0
    %2922 = vmatprep.subr.mxu0 0.0
    %2923 = vmatpush2.msra.mxu0 0.0
    %2924 = vmatprep.subr.mxu0 0.0
    %2925 = vmatpush2.msra.mxu0 0.0
    %2926 = vmatprep.subr.mxu0 0.0
    %2927 = vmatpush2.msra.mxu0 0.0
    %2928 = vmatprep.subr.mxu0 0.0
    %2929 = vmatpush2.msra.mxu0 0.0
    %2930 = vmatprep.subr.mxu0 0.0
    %2931 = vmatpush2.msra.mxu0 0.0
    %2932 = vmatprep.mubr.f32.mxu0 0.0
    %2933 = vmatmul.mubr.f32.gmra.mxu0 %v2866
    %v2934 = vpop.f32.mrf.mxu0
    %v2935 = vadd.f32 0.0, %v2934
    %v2936 = vpop.f32.mrf.mxu0
    %2937 = vdwg.mxu0
    %v2938 = vadd.f32 %v2865, %v2935
    %v2939 = vxor.u32 %v2938, 2147483648
    %v2940 = vmul.f32 %v2939, 1.442695
    %v2941 = vpow.pop %v2940
    %v2942 = vadd.f32 %v2941, 1.0
    %v2943 = vrcp.pop %v2942
    %v2944 = vmul.f32 1.0, %v2943
    %v2945 = vtanh.pop %v2938
    %v2946 = vmul.f32 %v2944, %v2853
    %2948 = vrot.lane.b32.xlu0 %v2945, 64
    %v2949 = vpop.permute.xlu0 %2948
    %v2951 = vmul.f32 %v2944, %v2949
    %2953 = vrot.lane.b32.xlu0 %v2951, 32
    %v2954 = vpop.permute.xlu0 %2953
    %v2956 = vadd.f32 %v2946, %v2954
    %v2957 = vtanh.pop %v2956
    %2959 = vrot.lane.b32.xlu0 %v2957, 64
    %v2960 = vpop.permute.xlu0 %2959
    %v2962 = vmul.f32 %v2944, %v2960
    %2964 = vrot.lane.b32.xlu0 %v2962, 32
    %v2965 = vpop.permute.xlu0 %2964
    %2967 = vst.msk [vmem:[#allocation3 + $0x8] sm:$0x3] %vm518, %v2965
    %v2968 = vld [vmem:[#allocation4 + $0xa] sm:$0x3]
    %v2969 = vsel %vm312, %v2965, 0
    %2971 = vmatprep.subr.mxu0 0.0
    %2972 = vmatpush1.msra.mxu0 0.0
    %2973 = vmatprep.subr.mxu0 0.0
    %2974 = vmatpush1.msra.mxu0 0.0
    %2975 = vmatprep.subr.mxu0 0.0
    %2976 = vmatpush1.msra.mxu0 0.0
    %2977 = vmatprep.subr.mxu0 0.0
    %2978 = vmatpush1.msra.mxu0 0.0
    %2979 = vmatprep.subr.mxu0 0.0
    %2980 = vmatpush1.msra.mxu0 0.0
    %2981 = vmatprep.subr.mxu0 0.0
    %2982 = vmatpush1.msra.mxu0 0.0
    %2983 = vmatprep.subr.mxu0 0.0
    %2984 = vmatpush1.msra.mxu0 0.0
    %2985 = vmatprep.subr.mxu0 0.0
    %2986 = vmatpush1.msra.mxu0 0.0
    %2987 = vmatprep.subr.mxu0 0.0
    %2988 = vmatpush1.msra.mxu0 0.0
    %2989 = vmatprep.subr.mxu0 0.0
    %2990 = vmatpush1.msra.mxu0 0.0
    %2991 = vmatprep.subr.mxu0 0.0
    %2992 = vmatpush1.msra.mxu0 0.0
    %2993 = vmatprep.subr.mxu0 0.0
    %2994 = vmatpush1.msra.mxu0 0.0
    %2995 = vmatprep.subr.mxu0 0.0
    %2996 = vmatpush1.msra.mxu0 %v2358
    %2997 = vmatprep.subr.mxu0 0.0
    %2998 = vmatpush1.msra.mxu0 %v2357
    %2999 = vmatprep.subr.mxu0 0.0
    %3000 = vmatpush1.msra.mxu0 %v2356
    %3001 = vmatprep.subr.mxu0 0.0
    %3002 = vmatpush1.msra.mxu0 %v2355
    %3003 = vmatprep.subr.mxu0 0.0
    %3004 = vmatpush2.msra.mxu0 0.0
    %3005 = vmatprep.subr.mxu0 0.0
    %3006 = vmatpush2.msra.mxu0 0.0
    %3007 = vmatprep.subr.mxu0 0.0
    %3008 = vmatpush2.msra.mxu0 0.0
    %3009 = vmatprep.subr.mxu0 0.0
    %3010 = vmatpush2.msra.mxu0 0.0
    %3011 = vmatprep.subr.mxu0 0.0
    %3012 = vmatpush2.msra.mxu0 0.0
    %3013 = vmatprep.subr.mxu0 0.0
    %3014 = vmatpush2.msra.mxu0 0.0
    %3015 = vmatprep.subr.mxu0 0.0
    %3016 = vmatpush2.msra.mxu0 0.0
    %3017 = vmatprep.subr.mxu0 0.0
    %3018 = vmatpush2.msra.mxu0 0.0
    %3019 = vmatprep.subr.mxu0 0.0
    %3020 = vmatpush2.msra.mxu0 0.0
    %3021 = vmatprep.subr.mxu0 0.0
    %3022 = vmatpush2.msra.mxu0 0.0
    %3023 = vmatprep.subr.mxu0 0.0
    %3024 = vmatpush2.msra.mxu0 0.0
    %3025 = vmatprep.subr.mxu0 0.0
    %3026 = vmatpush2.msra.mxu0 0.0
    %3027 = vmatprep.subr.mxu0 0.0
    %3028 = vmatpush2.msra.mxu0 0.0
    %3029 = vmatprep.subr.mxu0 0.0
    %3030 = vmatpush2.msra.mxu0 0.0
    %3031 = vmatprep.subr.mxu0 0.0
    %3032 = vmatpush2.msra.mxu0 0.0
    %3033 = vmatprep.subr.mxu0 0.0
    %3034 = vmatpush2.msra.mxu0 0.0
    %3035 = vmatprep.mubr.f32.mxu0 0.0
    %3036 = vmatmul.mubr.f32.gmra.mxu0 %v2969
    %v3037 = vpop.f32.mrf.mxu0
    %v3038 = vadd.f32 0.0, %v3037
    %v3039 = vpop.f32.mrf.mxu0
    %3040 = vdwg.mxu0
    %v3041 = vadd.f32 %v2968, %v3038
    %v3042 = vxor.u32 %v3041, 2147483648
    %v3043 = vmul.f32 %v3042, 1.442695
    %v3044 = vpow.pop %v3043
    %v3045 = vadd.f32 %v3044, 1.0
    %v3046 = vrcp.pop %v3045
    %v3047 = vmul.f32 1.0, %v3046
    %v3048 = vtanh.pop %v3041
    %v3049 = vmul.f32 %v3047, %v2956
    %3051 = vrot.lane.b32.xlu0 %v3048, 64
    %v3052 = vpop.permute.xlu0 %3051
    %v3054 = vmul.f32 %v3047, %v3052
    %3056 = vrot.lane.b32.xlu0 %v3054, 32
    %v3057 = vpop.permute.xlu0 %3056
    %v3059 = vadd.f32 %v3049, %v3057
    %v3060 = vtanh.pop %v3059
    %3062 = vrot.lane.b32.xlu0 %v3060, 64
    %v3063 = vpop.permute.xlu0 %3062
    %v3065 = vmul.f32 %v3047, %v3063
    %3067 = vrot.lane.b32.xlu0 %v3065, 32
    %v3068 = vpop.permute.xlu0 %3067
    %3070 = vst.msk [vmem:[#allocation3 + $0xa] sm:$0x3] %vm518, %v3068
    %v3071 = vld [vmem:[#allocation4 + $0xc] sm:$0x3]
    %v3072 = vsel %vm312, %v3068, 0
    %3074 = vmatprep.subr.mxu0 0.0
    %3075 = vmatpush1.msra.mxu0 0.0
    %3076 = vmatprep.subr.mxu0 0.0
    %3077 = vmatpush1.msra.mxu0 0.0
    %3078 = vmatprep.subr.mxu0 0.0
    %3079 = vmatpush1.msra.mxu0 0.0
    %3080 = vmatprep.subr.mxu0 0.0
    %3081 = vmatpush1.msra.mxu0 0.0
    %3082 = vmatprep.subr.mxu0 0.0
    %3083 = vmatpush1.msra.mxu0 0.0
    %3084 = vmatprep.subr.mxu0 0.0
    %3085 = vmatpush1.msra.mxu0 0.0
    %3086 = vmatprep.subr.mxu0 0.0
    %3087 = vmatpush1.msra.mxu0 0.0
    %3088 = vmatprep.subr.mxu0 0.0
    %3089 = vmatpush1.msra.mxu0 0.0
    %3090 = vmatprep.subr.mxu0 0.0
    %3091 = vmatpush1.msra.mxu0 0.0
    %3092 = vmatprep.subr.mxu0 0.0
    %3093 = vmatpush1.msra.mxu0 0.0
    %3094 = vmatprep.subr.mxu0 0.0
    %3095 = vmatpush1.msra.mxu0 0.0
    %3096 = vmatprep.subr.mxu0 0.0
    %3097 = vmatpush1.msra.mxu0 0.0
    %3098 = vmatprep.subr.mxu0 0.0
    %3099 = vmatpush1.msra.mxu0 %v2358
    %3100 = vmatprep.subr.mxu0 0.0
    %3101 = vmatpush1.msra.mxu0 %v2357
    %3102 = vmatprep.subr.mxu0 0.0
    %3103 = vmatpush1.msra.mxu0 %v2356
    %3104 = vmatprep.subr.mxu0 0.0
    %3105 = vmatpush1.msra.mxu0 %v2355
    %3106 = vmatprep.subr.mxu0 0.0
    %3107 = vmatpush2.msra.mxu0 0.0
    %3108 = vmatprep.subr.mxu0 0.0
    %3109 = vmatpush2.msra.mxu0 0.0
    %3110 = vmatprep.subr.mxu0 0.0
    %3111 = vmatpush2.msra.mxu0 0.0
    %3112 = vmatprep.subr.mxu0 0.0
    %3113 = vmatpush2.msra.mxu0 0.0
    %3114 = vmatprep.subr.mxu0 0.0
    %3115 = vmatpush2.msra.mxu0 0.0
    %3116 = vmatprep.subr.mxu0 0.0
    %3117 = vmatpush2.msra.mxu0 0.0
    %3118 = vmatprep.subr.mxu0 0.0
    %3119 = vmatpush2.msra.mxu0 0.0
    %3120 = vmatprep.subr.mxu0 0.0
    %3121 = vmatpush2.msra.mxu0 0.0
    %3122 = vmatprep.subr.mxu0 0.0
    %3123 = vmatpush2.msra.mxu0 0.0
    %3124 = vmatprep.subr.mxu0 0.0
    %3125 = vmatpush2.msra.mxu0 0.0
    %3126 = vmatprep.subr.mxu0 0.0
    %3127 = vmatpush2.msra.mxu0 0.0
    %3128 = vmatprep.subr.mxu0 0.0
    %3129 = vmatpush2.msra.mxu0 0.0
    %3130 = vmatprep.subr.mxu0 0.0
    %3131 = vmatpush2.msra.mxu0 0.0
    %3132 = vmatprep.subr.mxu0 0.0
    %3133 = vmatpush2.msra.mxu0 0.0
    %3134 = vmatprep.subr.mxu0 0.0
    %3135 = vmatpush2.msra.mxu0 0.0
    %3136 = vmatprep.subr.mxu0 0.0
    %3137 = vmatpush2.msra.mxu0 0.0
    %3138 = vmatprep.mubr.f32.mxu0 0.0
    %3139 = vmatmul.mubr.f32.gmra.mxu0 %v3072
    %v3140 = vpop.f32.mrf.mxu0
    %v3141 = vadd.f32 0.0, %v3140
    %v3142 = vpop.f32.mrf.mxu0
    %3143 = vdwg.mxu0
    %v3144 = vadd.f32 %v3071, %v3141
    %v3145 = vxor.u32 %v3144, 2147483648
    %v3146 = vmul.f32 %v3145, 1.442695
    %v3147 = vpow.pop %v3146
    %v3148 = vadd.f32 %v3147, 1.0
    %v3149 = vrcp.pop %v3148
    %v3150 = vmul.f32 1.0, %v3149
    %v3151 = vtanh.pop %v3144
    %v3152 = vmul.f32 %v3150, %v3059
    %3154 = vrot.lane.b32.xlu0 %v3151, 64
    %v3155 = vpop.permute.xlu0 %3154
    %v3157 = vmul.f32 %v3150, %v3155
    %3159 = vrot.lane.b32.xlu0 %v3157, 32
    %v3160 = vpop.permute.xlu0 %3159
    %v3162 = vadd.f32 %v3152, %v3160
    %v3163 = vtanh.pop %v3162
    %3165 = vrot.lane.b32.xlu0 %v3163, 64
    %v3166 = vpop.permute.xlu0 %3165
    %v3168 = vmul.f32 %v3150, %v3166
    %3170 = vrot.lane.b32.xlu0 %v3168, 32
    %v3171 = vpop.permute.xlu0 %3170
    %3173 = vst.msk [vmem:[#allocation3 + $0xc] sm:$0x3] %vm518, %v3171
    %v3174 = vld [vmem:[#allocation4 + $0xe] sm:$0x3]
    %v3175 = vsel %vm312, %v3171, 0
    %3177 = vmatprep.subr.mxu0 0.0
    %3178 = vmatpush1.msra.mxu0 0.0
    %3179 = vmatprep.subr.mxu0 0.0
    %3180 = vmatpush1.msra.mxu0 0.0
    %3181 = vmatprep.subr.mxu0 0.0
    %3182 = vmatpush1.msra.mxu0 0.0
    %3183 = vmatprep.subr.mxu0 0.0
    %3184 = vmatpush1.msra.mxu0 0.0
    %3185 = vmatprep.subr.mxu0 0.0
    %3186 = vmatpush1.msra.mxu0 0.0
    %3187 = vmatprep.subr.mxu0 0.0
    %3188 = vmatpush1.msra.mxu0 0.0
    %3189 = vmatprep.subr.mxu0 0.0
    %3190 = vmatpush1.msra.mxu0 0.0
    %3191 = vmatprep.subr.mxu0 0.0
    %3192 = vmatpush1.msra.mxu0 0.0
    %3193 = vmatprep.subr.mxu0 0.0
    %3194 = vmatpush1.msra.mxu0 0.0
    %3195 = vmatprep.subr.mxu0 0.0
    %3196 = vmatpush1.msra.mxu0 0.0
    %3197 = vmatprep.subr.mxu0 0.0
    %3198 = vmatpush1.msra.mxu0 0.0
    %3199 = vmatprep.subr.mxu0 0.0
    %3200 = vmatpush1.msra.mxu0 0.0
    %3201 = vmatprep.subr.mxu0 0.0
    %3202 = vmatpush1.msra.mxu0 %v2358
    %3203 = vmatprep.subr.mxu0 0.0
    %3204 = vmatpush1.msra.mxu0 %v2357
    %3205 = vmatprep.subr.mxu0 0.0
    %3206 = vmatpush1.msra.mxu0 %v2356
    %3207 = vmatprep.subr.mxu0 0.0
    %3208 = vmatpush1.msra.mxu0 %v2355
    %3209 = vmatprep.subr.mxu0 0.0
    %3210 = vmatpush2.msra.mxu0 0.0
    %3211 = vmatprep.subr.mxu0 0.0
    %3212 = vmatpush2.msra.mxu0 0.0
    %3213 = vmatprep.subr.mxu0 0.0
    %3214 = vmatpush2.msra.mxu0 0.0
    %3215 = vmatprep.subr.mxu0 0.0
    %3216 = vmatpush2.msra.mxu0 0.0
    %3217 = vmatprep.subr.mxu0 0.0
    %3218 = vmatpush2.msra.mxu0 0.0
    %3219 = vmatprep.subr.mxu0 0.0
    %3220 = vmatpush2.msra.mxu0 0.0
    %3221 = vmatprep.subr.mxu0 0.0
    %3222 = vmatpush2.msra.mxu0 0.0
    %3223 = vmatprep.subr.mxu0 0.0
    %3224 = vmatpush2.msra.mxu0 0.0
    %3225 = vmatprep.subr.mxu0 0.0
    %3226 = vmatpush2.msra.mxu0 0.0
    %3227 = vmatprep.subr.mxu0 0.0
    %3228 = vmatpush2.msra.mxu0 0.0
    %3229 = vmatprep.subr.mxu0 0.0
    %3230 = vmatpush2.msra.mxu0 0.0
    %3231 = vmatprep.subr.mxu0 0.0
    %3232 = vmatpush2.msra.mxu0 0.0
    %3233 = vmatprep.subr.mxu0 0.0
    %3234 = vmatpush2.msra.mxu0 0.0
    %3235 = vmatprep.subr.mxu0 0.0
    %3236 = vmatpush2.msra.mxu0 0.0
    %3237 = vmatprep.subr.mxu0 0.0
    %3238 = vmatpush2.msra.mxu0 0.0
    %3239 = vmatprep.subr.mxu0 0.0
    %3240 = vmatpush2.msra.mxu0 0.0
    %3241 = vmatprep.mubr.f32.mxu0 0.0
    %3242 = vmatmul.mubr.f32.gmra.mxu0 %v3175
    %v3243 = vpop.f32.mrf.mxu0
    %v3244 = vadd.f32 0.0, %v3243
    %v3245 = vpop.f32.mrf.mxu0
    %3246 = vdwg.mxu0
    %v3247 = vadd.f32 %v3174, %v3244
    %v3248 = vxor.u32 %v3247, 2147483648
    %v3249 = vmul.f32 %v3248, 1.442695
    %v3250 = vpow.pop %v3249
    %v3251 = vadd.f32 %v3250, 1.0
    %v3252 = vrcp.pop %v3251
    %v3253 = vmul.f32 1.0, %v3252
    %v3254 = vtanh.pop %v3247
    %v3255 = vmul.f32 %v3253, %v3162
    %3257 = vrot.lane.b32.xlu0 %v3254, 64
    %v3258 = vpop.permute.xlu0 %3257
    %v3260 = vmul.f32 %v3253, %v3258
    %3262 = vrot.lane.b32.xlu0 %v3260, 32
    %v3263 = vpop.permute.xlu0 %3262
    %v3265 = vadd.f32 %v3255, %v3263
    %v3266 = vtanh.pop %v3265
    %3268 = vrot.lane.b32.xlu0 %v3266, 64
    %v3269 = vpop.permute.xlu0 %3268
    %v3271 = vmul.f32 %v3253, %v3269
    %3273 = vrot.lane.b32.xlu0 %v3271, 32
    %v3274 = vpop.permute.xlu0 %3273
    %3276 = vst.msk [vmem:[#allocation3 + $0xe] sm:$0x3] %vm518, %v3274
    %v3277 = vld [vmem:[#allocation19] sm:$0xff]
    %v3278 = vld [vmem:[#allocation19 + $0x8] sm:$0xff]
    %v3279 = vld [vmem:[#allocation19 + $0x10] sm:$0xff]
    %v3280 = vld [vmem:[#allocation19 + $0x18] sm:$0xff]
    %v3281 = vld [vmem:[#allocation3] sm:$0xff]
    %v3282 = vld [vmem:[#allocation3 + $0x8] sm:$0xff]
    %v3283 = vld [vmem:[#allocation18] sm:$0xff]
    %v3284 = vld [vmem:[#allocation18 + $0x8] sm:$0xff]
    %v3285 = vld [vmem:[#allocation18 + $0x10] sm:$0xff]
    %v3286 = vld [vmem:[#allocation18 + $0x18] sm:$0xff]
    %v3287 = vld [vmem:[#allocation21] sm:$0x1]
    %v3289 = vlaneseq
    %v3290 = vshrl.u32 %v3289, 7
    %v3291 = vsub.s32 0, %v3290
    %v3292 = vrot.slane %v3287, %v3291
    %v3295 = vsel %vm312, %v3281, 0
    %v3298 = vsel %vm312, %v3282, 0
    %3300 = vmatprep.subr.mxu0 0.0
    %3301 = vmatpush1.msra.mxu0 0.0
    %3302 = vmatprep.subr.mxu0 0.0
    %3303 = vmatpush1.msra.mxu0 0.0
    %3304 = vmatprep.subr.mxu0 0.0
    %3305 = vmatpush1.msra.mxu0 0.0
    %3306 = vmatprep.subr.mxu0 0.0
    %3307 = vmatpush1.msra.mxu0 0.0
    %3308 = vmatprep.subr.mxu0 0.0
    %3309 = vmatpush1.msra.mxu0 0.0
    %3310 = vmatprep.subr.mxu0 0.0
    %3311 = vmatpush1.msra.mxu0 0.0
    %3312 = vmatprep.subr.mxu0 0.0
    %3313 = vmatpush1.msra.mxu0 0.0
    %3314 = vmatprep.subr.mxu0 0.0
    %3315 = vmatpush1.msra.mxu0 0.0
    %3316 = vmatprep.subr.mxu0 0.0
    %3317 = vmatpush1.msra.mxu0 0.0
    %3318 = vmatprep.subr.mxu0 0.0
    %3319 = vmatpush1.msra.mxu0 0.0
    %3320 = vmatprep.subr.mxu0 0.0
    %3321 = vmatpush1.msra.mxu0 0.0
    %3322 = vmatprep.subr.mxu0 0.0
    %3323 = vmatpush1.msra.mxu0 0.0
    %3324 = vmatprep.subr.mxu0 0.0
    %3325 = vmatpush1.msra.mxu0 %v3286
    %3326 = vmatprep.subr.mxu0 0.0
    %3327 = vmatpush1.msra.mxu0 %v3285
    %3328 = vmatprep.subr.mxu0 0.0
    %3329 = vmatpush1.msra.mxu0 %v3284
    %3330 = vmatprep.subr.mxu0 0.0
    %3331 = vmatpush1.msra.mxu0 %v3283
    %3332 = vmatprep.subr.mxu0 0.0
    %3333 = vmatpush2.msra.mxu0 0.0
    %3334 = vmatprep.subr.mxu0 0.0
    %3335 = vmatpush2.msra.mxu0 0.0
    %3336 = vmatprep.subr.mxu0 0.0
    %3337 = vmatpush2.msra.mxu0 0.0
    %3338 = vmatprep.subr.mxu0 0.0
    %3339 = vmatpush2.msra.mxu0 0.0
    %3340 = vmatprep.subr.mxu0 0.0
    %3341 = vmatpush2.msra.mxu0 0.0
    %3342 = vmatprep.subr.mxu0 0.0
    %3343 = vmatpush2.msra.mxu0 0.0
    %3344 = vmatprep.subr.mxu0 0.0
    %3345 = vmatpush2.msra.mxu0 0.0
    %3346 = vmatprep.subr.mxu0 0.0
    %3347 = vmatpush2.msra.mxu0 0.0
    %3348 = vmatprep.subr.mxu0 0.0
    %3349 = vmatpush2.msra.mxu0 0.0
    %3350 = vmatprep.subr.mxu0 0.0
    %3351 = vmatpush2.msra.mxu0 0.0
    %3352 = vmatprep.subr.mxu0 0.0
    %3353 = vmatpush2.msra.mxu0 0.0
    %3354 = vmatprep.subr.mxu0 0.0
    %3355 = vmatpush2.msra.mxu0 0.0
    %3356 = vmatprep.subr.mxu0 0.0
    %3357 = vmatpush2.msra.mxu0 0.0
    %3358 = vmatprep.subr.mxu0 0.0
    %3359 = vmatpush2.msra.mxu0 0.0
    %3360 = vmatprep.subr.mxu0 0.0
    %3361 = vmatpush2.msra.mxu0 0.0
    %3362 = vmatprep.subr.mxu0 0.0
    %3363 = vmatpush2.msra.mxu0 0.0
    %3364 = vmatprep.mubr.f32.mxu0 0.0
    %3365 = vmatmul.mubr.f32.gmra.mxu0 %v3295
    %v3366 = vpop.f32.mrf.mxu0
    %v3367 = vadd.f32 %v3292, %v3366
    %v3368 = vpop.f32.mrf.mxu0
    %3369 = vmatprep.mubr.f32.mxu0 0.0
    %3370 = vmatmul.mubr.f32.gmra.mxu0 %v3298
    %v3371 = vpop.f32.mrf.mxu0
    %v3372 = vadd.f32 %v3292, %v3371
    %v3373 = vpop.f32.mrf.mxu0
    %3374 = vdwg.mxu0
    %3375 = vst [vmem:[#allocation4] sm:$0xff] %v3367
    %3376 = vst [vmem:[#allocation4 + $0x8] sm:$0xff] %v3372
    %v3377 = vld [vmem:[#allocation4] sm:$0x3]
    %3378 = vmatprep.subr.mxu0 0.0
    %3379 = vmatpush1.msra.mxu0 0.0
    %3380 = vmatprep.subr.mxu0 0.0
    %3381 = vmatpush1.msra.mxu0 0.0
    %3382 = vmatprep.subr.mxu0 0.0
    %3383 = vmatpush1.msra.mxu0 0.0
    %3384 = vmatprep.subr.mxu0 0.0
    %3385 = vmatpush1.msra.mxu0 0.0
    %3386 = vmatprep.subr.mxu0 0.0
    %3387 = vmatpush1.msra.mxu0 0.0
    %3388 = vmatprep.subr.mxu0 0.0
    %3389 = vmatpush1.msra.mxu0 0.0
    %3390 = vmatprep.subr.mxu0 0.0
    %3391 = vmatpush1.msra.mxu0 0.0
    %3392 = vmatprep.subr.mxu0 0.0
    %3393 = vmatpush1.msra.mxu0 0.0
    %3394 = vmatprep.subr.mxu0 0.0
    %3395 = vmatpush1.msra.mxu0 0.0
    %3396 = vmatprep.subr.mxu0 0.0
    %3397 = vmatpush1.msra.mxu0 0.0
    %3398 = vmatprep.subr.mxu0 0.0
    %3399 = vmatpush1.msra.mxu0 0.0
    %3400 = vmatprep.subr.mxu0 0.0
    %3401 = vmatpush1.msra.mxu0 0.0
    %3402 = vmatprep.subr.mxu0 0.0
    %3403 = vmatpush1.msra.mxu0 %v3280
    %3404 = vmatprep.subr.mxu0 0.0
    %3405 = vmatpush1.msra.mxu0 %v3279
    %3406 = vmatprep.subr.mxu0 0.0
    %3407 = vmatpush1.msra.mxu0 %v3278
    %3408 = vmatprep.subr.mxu0 0.0
    %3409 = vmatpush1.msra.mxu0 %v3277
    %3410 = vmatprep.subr.mxu0 0.0
    %3411 = vmatpush2.msra.mxu0 0.0
    %3412 = vmatprep.subr.mxu0 0.0
    %3413 = vmatpush2.msra.mxu0 0.0
    %3414 = vmatprep.subr.mxu0 0.0
    %3415 = vmatpush2.msra.mxu0 0.0
    %3416 = vmatprep.subr.mxu0 0.0
    %3417 = vmatpush2.msra.mxu0 0.0
    %3418 = vmatprep.subr.mxu0 0.0
    %3419 = vmatpush2.msra.mxu0 0.0
    %3420 = vmatprep.subr.mxu0 0.0
    %3421 = vmatpush2.msra.mxu0 0.0
    %3422 = vmatprep.subr.mxu0 0.0
    %3423 = vmatpush2.msra.mxu0 0.0
    %3424 = vmatprep.subr.mxu0 0.0
    %3425 = vmatpush2.msra.mxu0 0.0
    %3426 = vmatprep.subr.mxu0 0.0
    %3427 = vmatpush2.msra.mxu0 0.0
    %3428 = vmatprep.subr.mxu0 0.0
    %3429 = vmatpush2.msra.mxu0 0.0
    %3430 = vmatprep.subr.mxu0 0.0
    %3431 = vmatpush2.msra.mxu0 0.0
    %3432 = vmatprep.subr.mxu0 0.0
    %3433 = vmatpush2.msra.mxu0 0.0
    %3434 = vmatprep.subr.mxu0 0.0
    %3435 = vmatpush2.msra.mxu0 0.0
    %3436 = vmatprep.subr.mxu0 0.0
    %3437 = vmatpush2.msra.mxu0 0.0
    %3438 = vmatprep.subr.mxu0 0.0
    %3439 = vmatpush2.msra.mxu0 0.0
    %3440 = vmatprep.subr.mxu0 0.0
    %3441 = vmatpush2.msra.mxu0 0.0
    %3442 = vmatprep.mubr.f32.mxu0 0.0
    %3443 = vmatmul.mubr.f32.gmra.mxu0 %v417
    %v3444 = vpop.f32.mrf.mxu0
    %v3445 = vadd.f32 0.0, %v3444
    %v3446 = vpop.f32.mrf.mxu0
    %3447 = vdwg.mxu0
    %v3448 = vadd.f32 %v3377, %v3445
    %v3449 = vxor.u32 %v3448, 2147483648
    %v3450 = vmul.f32 %v3449, 1.442695
    %v3451 = vpow.pop %v3450
    %v3452 = vadd.f32 %v3451, 1.0
    %v3453 = vrcp.pop %v3452
    %v3454 = vmul.f32 1.0, %v3453
    %v3455 = vtanh.pop %v3448
    %v3456 = vmul.f32 %v3454, 0.0
    %3458 = vrot.lane.b32.xlu0 %v3455, 64
    %v3459 = vpop.permute.xlu0 %3458
    %v3461 = vmul.f32 %v3454, %v3459
    %3463 = vrot.lane.b32.xlu0 %v3461, 32
    %v3464 = vpop.permute.xlu0 %3463
    %v3466 = vadd.f32 %v3456, %v3464
    %v3467 = vtanh.pop %v3466
    %3469 = vrot.lane.b32.xlu0 %v3467, 64
    %v3470 = vpop.permute.xlu0 %3469
    %v3472 = vmul.f32 %v3454, %v3470
    %3474 = vrot.lane.b32.xlu0 %v3472, 32
    %v3475 = vpop.permute.xlu0 %3474
    %3477 = vst.msk [vmem:[#allocation3] sm:$0x3] %vm518, %v3475
    %v3478 = vld [vmem:[#allocation4 + $0x2] sm:$0x3]
    %v3479 = vsel %vm312, %v3475, 0
    %3481 = vmatprep.subr.mxu0 0.0
    %3482 = vmatpush1.msra.mxu0 0.0
    %3483 = vmatprep.subr.mxu0 0.0
    %3484 = vmatpush1.msra.mxu0 0.0
    %3485 = vmatprep.subr.mxu0 0.0
    %3486 = vmatpush1.msra.mxu0 0.0
    %3487 = vmatprep.subr.mxu0 0.0
    %3488 = vmatpush1.msra.mxu0 0.0
    %3489 = vmatprep.subr.mxu0 0.0
    %3490 = vmatpush1.msra.mxu0 0.0
    %3491 = vmatprep.subr.mxu0 0.0
    %3492 = vmatpush1.msra.mxu0 0.0
    %3493 = vmatprep.subr.mxu0 0.0
    %3494 = vmatpush1.msra.mxu0 0.0
    %3495 = vmatprep.subr.mxu0 0.0
    %3496 = vmatpush1.msra.mxu0 0.0
    %3497 = vmatprep.subr.mxu0 0.0
    %3498 = vmatpush1.msra.mxu0 0.0
    %3499 = vmatprep.subr.mxu0 0.0
    %3500 = vmatpush1.msra.mxu0 0.0
    %3501 = vmatprep.subr.mxu0 0.0
    %3502 = vmatpush1.msra.mxu0 0.0
    %3503 = vmatprep.subr.mxu0 0.0
    %3504 = vmatpush1.msra.mxu0 0.0
    %3505 = vmatprep.subr.mxu0 0.0
    %3506 = vmatpush1.msra.mxu0 %v3280
    %3507 = vmatprep.subr.mxu0 0.0
    %3508 = vmatpush1.msra.mxu0 %v3279
    %3509 = vmatprep.subr.mxu0 0.0
    %3510 = vmatpush1.msra.mxu0 %v3278
    %3511 = vmatprep.subr.mxu0 0.0
    %3512 = vmatpush1.msra.mxu0 %v3277
    %3513 = vmatprep.subr.mxu0 0.0
    %3514 = vmatpush2.msra.mxu0 0.0
    %3515 = vmatprep.subr.mxu0 0.0
    %3516 = vmatpush2.msra.mxu0 0.0
    %3517 = vmatprep.subr.mxu0 0.0
    %3518 = vmatpush2.msra.mxu0 0.0
    %3519 = vmatprep.subr.mxu0 0.0
    %3520 = vmatpush2.msra.mxu0 0.0
    %3521 = vmatprep.subr.mxu0 0.0
    %3522 = vmatpush2.msra.mxu0 0.0
    %3523 = vmatprep.subr.mxu0 0.0
    %3524 = vmatpush2.msra.mxu0 0.0
    %3525 = vmatprep.subr.mxu0 0.0
    %3526 = vmatpush2.msra.mxu0 0.0
    %3527 = vmatprep.subr.mxu0 0.0
    %3528 = vmatpush2.msra.mxu0 0.0
    %3529 = vmatprep.subr.mxu0 0.0
    %3530 = vmatpush2.msra.mxu0 0.0
    %3531 = vmatprep.subr.mxu0 0.0
    %3532 = vmatpush2.msra.mxu0 0.0
    %3533 = vmatprep.subr.mxu0 0.0
    %3534 = vmatpush2.msra.mxu0 0.0
    %3535 = vmatprep.subr.mxu0 0.0
    %3536 = vmatpush2.msra.mxu0 0.0
    %3537 = vmatprep.subr.mxu0 0.0
    %3538 = vmatpush2.msra.mxu0 0.0
    %3539 = vmatprep.subr.mxu0 0.0
    %3540 = vmatpush2.msra.mxu0 0.0
    %3541 = vmatprep.subr.mxu0 0.0
    %3542 = vmatpush2.msra.mxu0 0.0
    %3543 = vmatprep.subr.mxu0 0.0
    %3544 = vmatpush2.msra.mxu0 0.0
    %3545 = vmatprep.mubr.f32.mxu0 0.0
    %3546 = vmatmul.mubr.f32.gmra.mxu0 %v3479
    %v3547 = vpop.f32.mrf.mxu0
    %v3548 = vadd.f32 0.0, %v3547
    %v3549 = vpop.f32.mrf.mxu0
    %3550 = vdwg.mxu0
    %v3551 = vadd.f32 %v3478, %v3548
    %v3552 = vxor.u32 %v3551, 2147483648
    %v3553 = vmul.f32 %v3552, 1.442695
    %v3554 = vpow.pop %v3553
    %v3555 = vadd.f32 %v3554, 1.0
    %v3556 = vrcp.pop %v3555
    %v3557 = vmul.f32 1.0, %v3556
    %v3558 = vtanh.pop %v3551
    %v3559 = vmul.f32 %v3557, %v3466
    %3561 = vrot.lane.b32.xlu0 %v3558, 64
    %v3562 = vpop.permute.xlu0 %3561
    %v3564 = vmul.f32 %v3557, %v3562
    %3566 = vrot.lane.b32.xlu0 %v3564, 32
    %v3567 = vpop.permute.xlu0 %3566
    %v3569 = vadd.f32 %v3559, %v3567
    %v3570 = vtanh.pop %v3569
    %3572 = vrot.lane.b32.xlu0 %v3570, 64
    %v3573 = vpop.permute.xlu0 %3572
    %v3575 = vmul.f32 %v3557, %v3573
    %3577 = vrot.lane.b32.xlu0 %v3575, 32
    %v3578 = vpop.permute.xlu0 %3577
    %3580 = vst.msk [vmem:[#allocation3 + $0x2] sm:$0x3] %vm518, %v3578
    %v3581 = vld [vmem:[#allocation4 + $0x4] sm:$0x3]
    %v3582 = vsel %vm312, %v3578, 0
    %3584 = vmatprep.subr.mxu0 0.0
    %3585 = vmatpush1.msra.mxu0 0.0
    %3586 = vmatprep.subr.mxu0 0.0
    %3587 = vmatpush1.msra.mxu0 0.0
    %3588 = vmatprep.subr.mxu0 0.0
    %3589 = vmatpush1.msra.mxu0 0.0
    %3590 = vmatprep.subr.mxu0 0.0
    %3591 = vmatpush1.msra.mxu0 0.0
    %3592 = vmatprep.subr.mxu0 0.0
    %3593 = vmatpush1.msra.mxu0 0.0
    %3594 = vmatprep.subr.mxu0 0.0
    %3595 = vmatpush1.msra.mxu0 0.0
    %3596 = vmatprep.subr.mxu0 0.0
    %3597 = vmatpush1.msra.mxu0 0.0
    %3598 = vmatprep.subr.mxu0 0.0
    %3599 = vmatpush1.msra.mxu0 0.0
    %3600 = vmatprep.subr.mxu0 0.0
    %3601 = vmatpush1.msra.mxu0 0.0
    %3602 = vmatprep.subr.mxu0 0.0
    %3603 = vmatpush1.msra.mxu0 0.0
    %3604 = vmatprep.subr.mxu0 0.0
    %3605 = vmatpush1.msra.mxu0 0.0
    %3606 = vmatprep.subr.mxu0 0.0
    %3607 = vmatpush1.msra.mxu0 0.0
    %3608 = vmatprep.subr.mxu0 0.0
    %3609 = vmatpush1.msra.mxu0 %v3280
    %3610 = vmatprep.subr.mxu0 0.0
    %3611 = vmatpush1.msra.mxu0 %v3279
    %3612 = vmatprep.subr.mxu0 0.0
    %3613 = vmatpush1.msra.mxu0 %v3278
    %3614 = vmatprep.subr.mxu0 0.0
    %3615 = vmatpush1.msra.mxu0 %v3277
    %3616 = vmatprep.subr.mxu0 0.0
    %3617 = vmatpush2.msra.mxu0 0.0
    %3618 = vmatprep.subr.mxu0 0.0
    %3619 = vmatpush2.msra.mxu0 0.0
    %3620 = vmatprep.subr.mxu0 0.0
    %3621 = vmatpush2.msra.mxu0 0.0
    %3622 = vmatprep.subr.mxu0 0.0
    %3623 = vmatpush2.msra.mxu0 0.0
    %3624 = vmatprep.subr.mxu0 0.0
    %3625 = vmatpush2.msra.mxu0 0.0
    %3626 = vmatprep.subr.mxu0 0.0
    %3627 = vmatpush2.msra.mxu0 0.0
    %3628 = vmatprep.subr.mxu0 0.0
    %3629 = vmatpush2.msra.mxu0 0.0
    %3630 = vmatprep.subr.mxu0 0.0
    %3631 = vmatpush2.msra.mxu0 0.0
    %3632 = vmatprep.subr.mxu0 0.0
    %3633 = vmatpush2.msra.mxu0 0.0
    %3634 = vmatprep.subr.mxu0 0.0
    %3635 = vmatpush2.msra.mxu0 0.0
    %3636 = vmatprep.subr.mxu0 0.0
    %3637 = vmatpush2.msra.mxu0 0.0
    %3638 = vmatprep.subr.mxu0 0.0
    %3639 = vmatpush2.msra.mxu0 0.0
    %3640 = vmatprep.subr.mxu0 0.0
    %3641 = vmatpush2.msra.mxu0 0.0
    %3642 = vmatprep.subr.mxu0 0.0
    %3643 = vmatpush2.msra.mxu0 0.0
    %3644 = vmatprep.subr.mxu0 0.0
    %3645 = vmatpush2.msra.mxu0 0.0
    %3646 = vmatprep.subr.mxu0 0.0
    %3647 = vmatpush2.msra.mxu0 0.0
    %3648 = vmatprep.mubr.f32.mxu0 0.0
    %3649 = vmatmul.mubr.f32.gmra.mxu0 %v3582
    %v3650 = vpop.f32.mrf.mxu0
    %v3651 = vadd.f32 0.0, %v3650
    %v3652 = vpop.f32.mrf.mxu0
    %3653 = vdwg.mxu0
    %v3654 = vadd.f32 %v3581, %v3651
    %v3655 = vxor.u32 %v3654, 2147483648
    %v3656 = vmul.f32 %v3655, 1.442695
    %v3657 = vpow.pop %v3656
    %v3658 = vadd.f32 %v3657, 1.0
    %v3659 = vrcp.pop %v3658
    %v3660 = vmul.f32 1.0, %v3659
    %v3661 = vtanh.pop %v3654
    %v3662 = vmul.f32 %v3660, %v3569
    %3664 = vrot.lane.b32.xlu0 %v3661, 64
    %v3665 = vpop.permute.xlu0 %3664
    %v3667 = vmul.f32 %v3660, %v3665
    %3669 = vrot.lane.b32.xlu0 %v3667, 32
    %v3670 = vpop.permute.xlu0 %3669
    %v3672 = vadd.f32 %v3662, %v3670
    %v3673 = vtanh.pop %v3672
    %3675 = vrot.lane.b32.xlu0 %v3673, 64
    %v3676 = vpop.permute.xlu0 %3675
    %v3678 = vmul.f32 %v3660, %v3676
    %3680 = vrot.lane.b32.xlu0 %v3678, 32
    %v3681 = vpop.permute.xlu0 %3680
    %3683 = vst.msk [vmem:[#allocation3 + $0x4] sm:$0x3] %vm518, %v3681
    %v3684 = vld [vmem:[#allocation4 + $0x6] sm:$0x3]
    %v3685 = vsel %vm312, %v3681, 0
    %3687 = vmatprep.subr.mxu0 0.0
    %3688 = vmatpush1.msra.mxu0 0.0
    %3689 = vmatprep.subr.mxu0 0.0
    %3690 = vmatpush1.msra.mxu0 0.0
    %3691 = vmatprep.subr.mxu0 0.0
    %3692 = vmatpush1.msra.mxu0 0.0
    %3693 = vmatprep.subr.mxu0 0.0
    %3694 = vmatpush1.msra.mxu0 0.0
    %3695 = vmatprep.subr.mxu0 0.0
    %3696 = vmatpush1.msra.mxu0 0.0
    %3697 = vmatprep.subr.mxu0 0.0
    %3698 = vmatpush1.msra.mxu0 0.0
    %3699 = vmatprep.subr.mxu0 0.0
    %3700 = vmatpush1.msra.mxu0 0.0
    %3701 = vmatprep.subr.mxu0 0.0
    %3702 = vmatpush1.msra.mxu0 0.0
    %3703 = vmatprep.subr.mxu0 0.0
    %3704 = vmatpush1.msra.mxu0 0.0
    %3705 = vmatprep.subr.mxu0 0.0
    %3706 = vmatpush1.msra.mxu0 0.0
    %3707 = vmatprep.subr.mxu0 0.0
    %3708 = vmatpush1.msra.mxu0 0.0
    %3709 = vmatprep.subr.mxu0 0.0
    %3710 = vmatpush1.msra.mxu0 0.0
    %3711 = vmatprep.subr.mxu0 0.0
    %3712 = vmatpush1.msra.mxu0 %v3280
    %3713 = vmatprep.subr.mxu0 0.0
    %3714 = vmatpush1.msra.mxu0 %v3279
    %3715 = vmatprep.subr.mxu0 0.0
    %3716 = vmatpush1.msra.mxu0 %v3278
    %3717 = vmatprep.subr.mxu0 0.0
    %3718 = vmatpush1.msra.mxu0 %v3277
    %3719 = vmatprep.subr.mxu0 0.0
    %3720 = vmatpush2.msra.mxu0 0.0
    %3721 = vmatprep.subr.mxu0 0.0
    %3722 = vmatpush2.msra.mxu0 0.0
    %3723 = vmatprep.subr.mxu0 0.0
    %3724 = vmatpush2.msra.mxu0 0.0
    %3725 = vmatprep.subr.mxu0 0.0
    %3726 = vmatpush2.msra.mxu0 0.0
    %3727 = vmatprep.subr.mxu0 0.0
    %3728 = vmatpush2.msra.mxu0 0.0
    %3729 = vmatprep.subr.mxu0 0.0
    %3730 = vmatpush2.msra.mxu0 0.0
    %3731 = vmatprep.subr.mxu0 0.0
    %3732 = vmatpush2.msra.mxu0 0.0
    %3733 = vmatprep.subr.mxu0 0.0
    %3734 = vmatpush2.msra.mxu0 0.0
    %3735 = vmatprep.subr.mxu0 0.0
    %3736 = vmatpush2.msra.mxu0 0.0
    %3737 = vmatprep.subr.mxu0 0.0
    %3738 = vmatpush2.msra.mxu0 0.0
    %3739 = vmatprep.subr.mxu0 0.0
    %3740 = vmatpush2.msra.mxu0 0.0
    %3741 = vmatprep.subr.mxu0 0.0
    %3742 = vmatpush2.msra.mxu0 0.0
    %3743 = vmatprep.subr.mxu0 0.0
    %3744 = vmatpush2.msra.mxu0 0.0
    %3745 = vmatprep.subr.mxu0 0.0
    %3746 = vmatpush2.msra.mxu0 0.0
    %3747 = vmatprep.subr.mxu0 0.0
    %3748 = vmatpush2.msra.mxu0 0.0
    %3749 = vmatprep.subr.mxu0 0.0
    %3750 = vmatpush2.msra.mxu0 0.0
    %3751 = vmatprep.mubr.f32.mxu0 0.0
    %3752 = vmatmul.mubr.f32.gmra.mxu0 %v3685
    %v3753 = vpop.f32.mrf.mxu0
    %v3754 = vadd.f32 0.0, %v3753
    %v3755 = vpop.f32.mrf.mxu0
    %3756 = vdwg.mxu0
    %v3757 = vadd.f32 %v3684, %v3754
    %v3758 = vxor.u32 %v3757, 2147483648
    %v3759 = vmul.f32 %v3758, 1.442695
    %v3760 = vpow.pop %v3759
    %v3761 = vadd.f32 %v3760, 1.0
    %v3762 = vrcp.pop %v3761
    %v3763 = vmul.f32 1.0, %v3762
    %v3764 = vtanh.pop %v3757
    %v3765 = vmul.f32 %v3763, %v3672
    %3767 = vrot.lane.b32.xlu0 %v3764, 64
    %v3768 = vpop.permute.xlu0 %3767
    %v3770 = vmul.f32 %v3763, %v3768
    %3772 = vrot.lane.b32.xlu0 %v3770, 32
    %v3773 = vpop.permute.xlu0 %3772
    %v3775 = vadd.f32 %v3765, %v3773
    %v3776 = vtanh.pop %v3775
    %3778 = vrot.lane.b32.xlu0 %v3776, 64
    %v3779 = vpop.permute.xlu0 %3778
    %v3781 = vmul.f32 %v3763, %v3779
    %3783 = vrot.lane.b32.xlu0 %v3781, 32
    %v3784 = vpop.permute.xlu0 %3783
    %3786 = vst.msk [vmem:[#allocation3 + $0x6] sm:$0x3] %vm518, %v3784
    %v3787 = vld [vmem:[#allocation4 + $0x8] sm:$0x3]
    %v3788 = vsel %vm312, %v3784, 0
    %3790 = vmatprep.subr.mxu0 0.0
    %3791 = vmatpush1.msra.mxu0 0.0
    %3792 = vmatprep.subr.mxu0 0.0
    %3793 = vmatpush1.msra.mxu0 0.0
    %3794 = vmatprep.subr.mxu0 0.0
    %3795 = vmatpush1.msra.mxu0 0.0
    %3796 = vmatprep.subr.mxu0 0.0
    %3797 = vmatpush1.msra.mxu0 0.0
    %3798 = vmatprep.subr.mxu0 0.0
    %3799 = vmatpush1.msra.mxu0 0.0
    %3800 = vmatprep.subr.mxu0 0.0
    %3801 = vmatpush1.msra.mxu0 0.0
    %3802 = vmatprep.subr.mxu0 0.0
    %3803 = vmatpush1.msra.mxu0 0.0
    %3804 = vmatprep.subr.mxu0 0.0
    %3805 = vmatpush1.msra.mxu0 0.0
    %3806 = vmatprep.subr.mxu0 0.0
    %3807 = vmatpush1.msra.mxu0 0.0
    %3808 = vmatprep.subr.mxu0 0.0
    %3809 = vmatpush1.msra.mxu0 0.0
    %3810 = vmatprep.subr.mxu0 0.0
    %3811 = vmatpush1.msra.mxu0 0.0
    %3812 = vmatprep.subr.mxu0 0.0
    %3813 = vmatpush1.msra.mxu0 0.0
    %3814 = vmatprep.subr.mxu0 0.0
    %3815 = vmatpush1.msra.mxu0 %v3280
    %3816 = vmatprep.subr.mxu0 0.0
    %3817 = vmatpush1.msra.mxu0 %v3279
    %3818 = vmatprep.subr.mxu0 0.0
    %3819 = vmatpush1.msra.mxu0 %v3278
    %3820 = vmatprep.subr.mxu0 0.0
    %3821 = vmatpush1.msra.mxu0 %v3277
    %3822 = vmatprep.subr.mxu0 0.0
    %3823 = vmatpush2.msra.mxu0 0.0
    %3824 = vmatprep.subr.mxu0 0.0
    %3825 = vmatpush2.msra.mxu0 0.0
    %3826 = vmatprep.subr.mxu0 0.0
    %3827 = vmatpush2.msra.mxu0 0.0
    %3828 = vmatprep.subr.mxu0 0.0
    %3829 = vmatpush2.msra.mxu0 0.0
    %3830 = vmatprep.subr.mxu0 0.0
    %3831 = vmatpush2.msra.mxu0 0.0
    %3832 = vmatprep.subr.mxu0 0.0
    %3833 = vmatpush2.msra.mxu0 0.0
    %3834 = vmatprep.subr.mxu0 0.0
    %3835 = vmatpush2.msra.mxu0 0.0
    %3836 = vmatprep.subr.mxu0 0.0
    %3837 = vmatpush2.msra.mxu0 0.0
    %3838 = vmatprep.subr.mxu0 0.0
    %3839 = vmatpush2.msra.mxu0 0.0
    %3840 = vmatprep.subr.mxu0 0.0
    %3841 = vmatpush2.msra.mxu0 0.0
    %3842 = vmatprep.subr.mxu0 0.0
    %3843 = vmatpush2.msra.mxu0 0.0
    %3844 = vmatprep.subr.mxu0 0.0
    %3845 = vmatpush2.msra.mxu0 0.0
    %3846 = vmatprep.subr.mxu0 0.0
    %3847 = vmatpush2.msra.mxu0 0.0
    %3848 = vmatprep.subr.mxu0 0.0
    %3849 = vmatpush2.msra.mxu0 0.0
    %3850 = vmatprep.subr.mxu0 0.0
    %3851 = vmatpush2.msra.mxu0 0.0
    %3852 = vmatprep.subr.mxu0 0.0
    %3853 = vmatpush2.msra.mxu0 0.0
    %3854 = vmatprep.mubr.f32.mxu0 0.0
    %3855 = vmatmul.mubr.f32.gmra.mxu0 %v3788
    %v3856 = vpop.f32.mrf.mxu0
    %v3857 = vadd.f32 0.0, %v3856
    %v3858 = vpop.f32.mrf.mxu0
    %3859 = vdwg.mxu0
    %v3860 = vadd.f32 %v3787, %v3857
    %v3861 = vxor.u32 %v3860, 2147483648
    %v3862 = vmul.f32 %v3861, 1.442695
    %v3863 = vpow.pop %v3862
    %v3864 = vadd.f32 %v3863, 1.0
    %v3865 = vrcp.pop %v3864
    %v3866 = vmul.f32 1.0, %v3865
    %v3867 = vtanh.pop %v3860
    %v3868 = vmul.f32 %v3866, %v3775
    %3870 = vrot.lane.b32.xlu0 %v3867, 64
    %v3871 = vpop.permute.xlu0 %3870
    %v3873 = vmul.f32 %v3866, %v3871
    %3875 = vrot.lane.b32.xlu0 %v3873, 32
    %v3876 = vpop.permute.xlu0 %3875
    %v3878 = vadd.f32 %v3868, %v3876
    %v3879 = vtanh.pop %v3878
    %3881 = vrot.lane.b32.xlu0 %v3879, 64
    %v3882 = vpop.permute.xlu0 %3881
    %v3884 = vmul.f32 %v3866, %v3882
    %3886 = vrot.lane.b32.xlu0 %v3884, 32
    %v3887 = vpop.permute.xlu0 %3886
    %3889 = vst.msk [vmem:[#allocation3 + $0x8] sm:$0x3] %vm518, %v3887
    %v3890 = vld [vmem:[#allocation4 + $0xa] sm:$0x3]
    %v3891 = vsel %vm312, %v3887, 0
    %3893 = vmatprep.subr.mxu0 0.0
    %3894 = vmatpush1.msra.mxu0 0.0
    %3895 = vmatprep.subr.mxu0 0.0
    %3896 = vmatpush1.msra.mxu0 0.0
    %3897 = vmatprep.subr.mxu0 0.0
    %3898 = vmatpush1.msra.mxu0 0.0
    %3899 = vmatprep.subr.mxu0 0.0
    %3900 = vmatpush1.msra.mxu0 0.0
    %3901 = vmatprep.subr.mxu0 0.0
    %3902 = vmatpush1.msra.mxu0 0.0
    %3903 = vmatprep.subr.mxu0 0.0
    %3904 = vmatpush1.msra.mxu0 0.0
    %3905 = vmatprep.subr.mxu0 0.0
    %3906 = vmatpush1.msra.mxu0 0.0
    %3907 = vmatprep.subr.mxu0 0.0
    %3908 = vmatpush1.msra.mxu0 0.0
    %3909 = vmatprep.subr.mxu0 0.0
    %3910 = vmatpush1.msra.mxu0 0.0
    %3911 = vmatprep.subr.mxu0 0.0
    %3912 = vmatpush1.msra.mxu0 0.0
    %3913 = vmatprep.subr.mxu0 0.0
    %3914 = vmatpush1.msra.mxu0 0.0
    %3915 = vmatprep.subr.mxu0 0.0
    %3916 = vmatpush1.msra.mxu0 0.0
    %3917 = vmatprep.subr.mxu0 0.0
    %3918 = vmatpush1.msra.mxu0 %v3280
    %3919 = vmatprep.subr.mxu0 0.0
    %3920 = vmatpush1.msra.mxu0 %v3279
    %3921 = vmatprep.subr.mxu0 0.0
    %3922 = vmatpush1.msra.mxu0 %v3278
    %3923 = vmatprep.subr.mxu0 0.0
    %3924 = vmatpush1.msra.mxu0 %v3277
    %3925 = vmatprep.subr.mxu0 0.0
    %3926 = vmatpush2.msra.mxu0 0.0
    %3927 = vmatprep.subr.mxu0 0.0
    %3928 = vmatpush2.msra.mxu0 0.0
    %3929 = vmatprep.subr.mxu0 0.0
    %3930 = vmatpush2.msra.mxu0 0.0
    %3931 = vmatprep.subr.mxu0 0.0
    %3932 = vmatpush2.msra.mxu0 0.0
    %3933 = vmatprep.subr.mxu0 0.0
    %3934 = vmatpush2.msra.mxu0 0.0
    %3935 = vmatprep.subr.mxu0 0.0
    %3936 = vmatpush2.msra.mxu0 0.0
    %3937 = vmatprep.subr.mxu0 0.0
    %3938 = vmatpush2.msra.mxu0 0.0
    %3939 = vmatprep.subr.mxu0 0.0
    %3940 = vmatpush2.msra.mxu0 0.0
    %3941 = vmatprep.subr.mxu0 0.0
    %3942 = vmatpush2.msra.mxu0 0.0
    %3943 = vmatprep.subr.mxu0 0.0
    %3944 = vmatpush2.msra.mxu0 0.0
    %3945 = vmatprep.subr.mxu0 0.0
    %3946 = vmatpush2.msra.mxu0 0.0
    %3947 = vmatprep.subr.mxu0 0.0
    %3948 = vmatpush2.msra.mxu0 0.0
    %3949 = vmatprep.subr.mxu0 0.0
    %3950 = vmatpush2.msra.mxu0 0.0
    %3951 = vmatprep.subr.mxu0 0.0
    %3952 = vmatpush2.msra.mxu0 0.0
    %3953 = vmatprep.subr.mxu0 0.0
    %3954 = vmatpush2.msra.mxu0 0.0
    %3955 = vmatprep.subr.mxu0 0.0
    %3956 = vmatpush2.msra.mxu0 0.0
    %3957 = vmatprep.mubr.f32.mxu0 0.0
    %3958 = vmatmul.mubr.f32.gmra.mxu0 %v3891
    %v3959 = vpop.f32.mrf.mxu0
    %v3960 = vadd.f32 0.0, %v3959
    %v3961 = vpop.f32.mrf.mxu0
    %3962 = vdwg.mxu0
    %v3963 = vadd.f32 %v3890, %v3960
    %v3964 = vxor.u32 %v3963, 2147483648
    %v3965 = vmul.f32 %v3964, 1.442695
    %v3966 = vpow.pop %v3965
    %v3967 = vadd.f32 %v3966, 1.0
    %v3968 = vrcp.pop %v3967
    %v3969 = vmul.f32 1.0, %v3968
    %v3970 = vtanh.pop %v3963
    %v3971 = vmul.f32 %v3969, %v3878
    %3973 = vrot.lane.b32.xlu0 %v3970, 64
    %v3974 = vpop.permute.xlu0 %3973
    %v3976 = vmul.f32 %v3969, %v3974
    %3978 = vrot.lane.b32.xlu0 %v3976, 32
    %v3979 = vpop.permute.xlu0 %3978
    %v3981 = vadd.f32 %v3971, %v3979
    %v3982 = vtanh.pop %v3981
    %3984 = vrot.lane.b32.xlu0 %v3982, 64
    %v3985 = vpop.permute.xlu0 %3984
    %v3987 = vmul.f32 %v3969, %v3985
    %3989 = vrot.lane.b32.xlu0 %v3987, 32
    %v3990 = vpop.permute.xlu0 %3989
    %3992 = vst.msk [vmem:[#allocation3 + $0xa] sm:$0x3] %vm518, %v3990
    %v3993 = vld [vmem:[#allocation4 + $0xc] sm:$0x3]
    %v3994 = vsel %vm312, %v3990, 0
    %3996 = vmatprep.subr.mxu0 0.0
    %3997 = vmatpush1.msra.mxu0 0.0
    %3998 = vmatprep.subr.mxu0 0.0
    %3999 = vmatpush1.msra.mxu0 0.0
    %4000 = vmatprep.subr.mxu0 0.0
    %4001 = vmatpush1.msra.mxu0 0.0
    %4002 = vmatprep.subr.mxu0 0.0
    %4003 = vmatpush1.msra.mxu0 0.0
    %4004 = vmatprep.subr.mxu0 0.0
    %4005 = vmatpush1.msra.mxu0 0.0
    %4006 = vmatprep.subr.mxu0 0.0
    %4007 = vmatpush1.msra.mxu0 0.0
    %4008 = vmatprep.subr.mxu0 0.0
    %4009 = vmatpush1.msra.mxu0 0.0
    %4010 = vmatprep.subr.mxu0 0.0
    %4011 = vmatpush1.msra.mxu0 0.0
    %4012 = vmatprep.subr.mxu0 0.0
    %4013 = vmatpush1.msra.mxu0 0.0
    %4014 = vmatprep.subr.mxu0 0.0
    %4015 = vmatpush1.msra.mxu0 0.0
    %4016 = vmatprep.subr.mxu0 0.0
    %4017 = vmatpush1.msra.mxu0 0.0
    %4018 = vmatprep.subr.mxu0 0.0
    %4019 = vmatpush1.msra.mxu0 0.0
    %4020 = vmatprep.subr.mxu0 0.0
    %4021 = vmatpush1.msra.mxu0 %v3280
    %4022 = vmatprep.subr.mxu0 0.0
    %4023 = vmatpush1.msra.mxu0 %v3279
    %4024 = vmatprep.subr.mxu0 0.0
    %4025 = vmatpush1.msra.mxu0 %v3278
    %4026 = vmatprep.subr.mxu0 0.0
    %4027 = vmatpush1.msra.mxu0 %v3277
    %4028 = vmatprep.subr.mxu0 0.0
    %4029 = vmatpush2.msra.mxu0 0.0
    %4030 = vmatprep.subr.mxu0 0.0
    %4031 = vmatpush2.msra.mxu0 0.0
    %4032 = vmatprep.subr.mxu0 0.0
    %4033 = vmatpush2.msra.mxu0 0.0
    %4034 = vmatprep.subr.mxu0 0.0
    %4035 = vmatpush2.msra.mxu0 0.0
    %4036 = vmatprep.subr.mxu0 0.0
    %4037 = vmatpush2.msra.mxu0 0.0
    %4038 = vmatprep.subr.mxu0 0.0
    %4039 = vmatpush2.msra.mxu0 0.0
    %4040 = vmatprep.subr.mxu0 0.0
    %4041 = vmatpush2.msra.mxu0 0.0
    %4042 = vmatprep.subr.mxu0 0.0
    %4043 = vmatpush2.msra.mxu0 0.0
    %4044 = vmatprep.subr.mxu0 0.0
    %4045 = vmatpush2.msra.mxu0 0.0
    %4046 = vmatprep.subr.mxu0 0.0
    %4047 = vmatpush2.msra.mxu0 0.0
    %4048 = vmatprep.subr.mxu0 0.0
    %4049 = vmatpush2.msra.mxu0 0.0
    %4050 = vmatprep.subr.mxu0 0.0
    %4051 = vmatpush2.msra.mxu0 0.0
    %4052 = vmatprep.subr.mxu0 0.0
    %4053 = vmatpush2.msra.mxu0 0.0
    %4054 = vmatprep.subr.mxu0 0.0
    %4055 = vmatpush2.msra.mxu0 0.0
    %4056 = vmatprep.subr.mxu0 0.0
    %4057 = vmatpush2.msra.mxu0 0.0
    %4058 = vmatprep.subr.mxu0 0.0
    %4059 = vmatpush2.msra.mxu0 0.0
    %4060 = vmatprep.mubr.f32.mxu0 0.0
    %4061 = vmatmul.mubr.f32.gmra.mxu0 %v3994
    %v4062 = vpop.f32.mrf.mxu0
    %v4063 = vadd.f32 0.0, %v4062
    %v4064 = vpop.f32.mrf.mxu0
    %4065 = vdwg.mxu0
    %v4066 = vadd.f32 %v3993, %v4063
    %v4067 = vxor.u32 %v4066, 2147483648
    %v4068 = vmul.f32 %v4067, 1.442695
    %v4069 = vpow.pop %v4068
    %v4070 = vadd.f32 %v4069, 1.0
    %v4071 = vrcp.pop %v4070
    %v4072 = vmul.f32 1.0, %v4071
    %v4073 = vtanh.pop %v4066
    %v4074 = vmul.f32 %v4072, %v3981
    %4076 = vrot.lane.b32.xlu0 %v4073, 64
    %v4077 = vpop.permute.xlu0 %4076
    %v4079 = vmul.f32 %v4072, %v4077
    %4081 = vrot.lane.b32.xlu0 %v4079, 32
    %v4082 = vpop.permute.xlu0 %4081
    %v4084 = vadd.f32 %v4074, %v4082
    %v4085 = vtanh.pop %v4084
    %4087 = vrot.lane.b32.xlu0 %v4085, 64
    %v4088 = vpop.permute.xlu0 %4087
    %v4090 = vmul.f32 %v4072, %v4088
    %4092 = vrot.lane.b32.xlu0 %v4090, 32
    %v4093 = vpop.permute.xlu0 %4092
    %4095 = vst.msk [vmem:[#allocation3 + $0xc] sm:$0x3] %vm518, %v4093
    %v4096 = vld [vmem:[#allocation4 + $0xe] sm:$0x3]
    %v4097 = vsel %vm312, %v4093, 0
    %4099 = vmatprep.subr.mxu0 0.0
    %4100 = vmatpush1.msra.mxu0 0.0
    %4101 = vmatprep.subr.mxu0 0.0
    %4102 = vmatpush1.msra.mxu0 0.0
    %4103 = vmatprep.subr.mxu0 0.0
    %4104 = vmatpush1.msra.mxu0 0.0
    %4105 = vmatprep.subr.mxu0 0.0
    %4106 = vmatpush1.msra.mxu0 0.0
    %4107 = vmatprep.subr.mxu0 0.0
    %4108 = vmatpush1.msra.mxu0 0.0
    %4109 = vmatprep.subr.mxu0 0.0
    %4110 = vmatpush1.msra.mxu0 0.0
    %4111 = vmatprep.subr.mxu0 0.0
    %4112 = vmatpush1.msra.mxu0 0.0
    %4113 = vmatprep.subr.mxu0 0.0
    %4114 = vmatpush1.msra.mxu0 0.0
    %4115 = vmatprep.subr.mxu0 0.0
    %4116 = vmatpush1.msra.mxu0 0.0
    %4117 = vmatprep.subr.mxu0 0.0
    %4118 = vmatpush1.msra.mxu0 0.0
    %4119 = vmatprep.subr.mxu0 0.0
    %4120 = vmatpush1.msra.mxu0 0.0
    %4121 = vmatprep.subr.mxu0 0.0
    %4122 = vmatpush1.msra.mxu0 0.0
    %4123 = vmatprep.subr.mxu0 0.0
    %4124 = vmatpush1.msra.mxu0 %v3280
    %4125 = vmatprep.subr.mxu0 0.0
    %4126 = vmatpush1.msra.mxu0 %v3279
    %4127 = vmatprep.subr.mxu0 0.0
    %4128 = vmatpush1.msra.mxu0 %v3278
    %4129 = vmatprep.subr.mxu0 0.0
    %4130 = vmatpush1.msra.mxu0 %v3277
    %4131 = vmatprep.subr.mxu0 0.0
    %4132 = vmatpush2.msra.mxu0 0.0
    %4133 = vmatprep.subr.mxu0 0.0
    %4134 = vmatpush2.msra.mxu0 0.0
    %4135 = vmatprep.subr.mxu0 0.0
    %4136 = vmatpush2.msra.mxu0 0.0
    %4137 = vmatprep.subr.mxu0 0.0
    %4138 = vmatpush2.msra.mxu0 0.0
    %4139 = vmatprep.subr.mxu0 0.0
    %4140 = vmatpush2.msra.mxu0 0.0
    %4141 = vmatprep.subr.mxu0 0.0
    %4142 = vmatpush2.msra.mxu0 0.0
    %4143 = vmatprep.subr.mxu0 0.0
    %4144 = vmatpush2.msra.mxu0 0.0
    %4145 = vmatprep.subr.mxu0 0.0
    %4146 = vmatpush2.msra.mxu0 0.0
    %4147 = vmatprep.subr.mxu0 0.0
    %4148 = vmatpush2.msra.mxu0 0.0
    %4149 = vmatprep.subr.mxu0 0.0
    %4150 = vmatpush2.msra.mxu0 0.0
    %4151 = vmatprep.subr.mxu0 0.0
    %4152 = vmatpush2.msra.mxu0 0.0
    %4153 = vmatprep.subr.mxu0 0.0
    %4154 = vmatpush2.msra.mxu0 0.0
    %4155 = vmatprep.subr.mxu0 0.0
    %4156 = vmatpush2.msra.mxu0 0.0
    %4157 = vmatprep.subr.mxu0 0.0
    %4158 = vmatpush2.msra.mxu0 0.0
    %4159 = vmatprep.subr.mxu0 0.0
    %4160 = vmatpush2.msra.mxu0 0.0
    %4161 = vmatprep.subr.mxu0 0.0
    %4162 = vmatpush2.msra.mxu0 0.0
    %4163 = vmatprep.mubr.f32.mxu0 0.0
    %4164 = vmatmul.mubr.f32.gmra.mxu0 %v4097
    %v4165 = vpop.f32.mrf.mxu0
    %v4166 = vadd.f32 0.0, %v4165
    %v4167 = vpop.f32.mrf.mxu0
    %4168 = vdwg.mxu0
    %v4169 = vadd.f32 %v4096, %v4166
    %v4170 = vxor.u32 %v4169, 2147483648
    %v4171 = vmul.f32 %v4170, 1.442695
    %v4172 = vpow.pop %v4171
    %v4173 = vadd.f32 %v4172, 1.0
    %v4174 = vrcp.pop %v4173
    %v4175 = vmul.f32 1.0, %v4174
    %v4176 = vtanh.pop %v4169
    %v4177 = vmul.f32 %v4175, %v4084
    %4179 = vrot.lane.b32.xlu0 %v4176, 64
    %v4180 = vpop.permute.xlu0 %4179
    %v4182 = vmul.f32 %v4175, %v4180
    %4184 = vrot.lane.b32.xlu0 %v4182, 32
    %v4185 = vpop.permute.xlu0 %4184
    %v4187 = vadd.f32 %v4177, %v4185
    %v4188 = vtanh.pop %v4187
    %4190 = vrot.lane.b32.xlu0 %v4188, 64
    %v4191 = vpop.permute.xlu0 %4190
    %v4193 = vmul.f32 %v4175, %v4191
    %4195 = vrot.lane.b32.xlu0 %v4193, 32
    %v4196 = vpop.permute.xlu0 %4195
    %4198 = vst.msk [vmem:[#allocation3 + $0xe] sm:$0x3] %vm518, %v4196
    %v4199 = vld [vmem:[#allocation3] sm:$0xff]
    %v4200 = vld [vmem:[#allocation3 + $0x8] sm:$0xff]
    %v4201 = vld [vmem:[%s19] sm:$0xff]
    %v4202 = vld [vmem:[%s19 + $0x8] sm:$0xff]
    %v4203 = vld [vmem:[%s19 + $0x10] sm:$0xff]
    %v4204 = vld [vmem:[%s19 + $0x18] sm:$0xff]
    %v4205 = vld [vmem:[#allocation22] sm:$0x1]
    %v4207 = vlaneseq
    %v4208 = vshrl.u32 %v4207, 7
    %v4209 = vsub.s32 0, %v4208
    %v4210 = vrot.slane %v4205, %v4209
    %v4213 = vsel %vm312, %v4199, 0
    %v4216 = vsel %vm312, %v4200, 0
    %4218 = vmatprep.subr.mxu0 0.0
    %4219 = vmatpush1.msra.mxu0 0.0
    %4220 = vmatprep.subr.mxu0 0.0
    %4221 = vmatpush1.msra.mxu0 0.0
    %4222 = vmatprep.subr.mxu0 0.0
    %4223 = vmatpush1.msra.mxu0 0.0
    %4224 = vmatprep.subr.mxu0 0.0
    %4225 = vmatpush1.msra.mxu0 0.0
    %4226 = vmatprep.subr.mxu0 0.0
    %4227 = vmatpush1.msra.mxu0 0.0
    %4228 = vmatprep.subr.mxu0 0.0
    %4229 = vmatpush1.msra.mxu0 0.0
    %4230 = vmatprep.subr.mxu0 0.0
    %4231 = vmatpush1.msra.mxu0 0.0
    %4232 = vmatprep.subr.mxu0 0.0
    %4233 = vmatpush1.msra.mxu0 0.0
    %4234 = vmatprep.subr.mxu0 0.0
    %4235 = vmatpush1.msra.mxu0 0.0
    %4236 = vmatprep.subr.mxu0 0.0
    %4237 = vmatpush1.msra.mxu0 0.0
    %4238 = vmatprep.subr.mxu0 0.0
    %4239 = vmatpush1.msra.mxu0 0.0
    %4240 = vmatprep.subr.mxu0 0.0
    %4241 = vmatpush1.msra.mxu0 0.0
    %4242 = vmatprep.subr.mxu0 0.0
    %4243 = vmatpush1.msra.mxu0 %v4204
    %4244 = vmatprep.subr.mxu0 0.0
    %4245 = vmatpush1.msra.mxu0 %v4203
    %4246 = vmatprep.subr.mxu0 0.0
    %4247 = vmatpush1.msra.mxu0 %v4202
    %4248 = vmatprep.subr.mxu0 0.0
    %4249 = vmatpush1.msra.mxu0 %v4201
    %4250 = vmatprep.subr.mxu0 0.0
    %4251 = vmatpush2.msra.mxu0 0.0
    %4252 = vmatprep.subr.mxu0 0.0
    %4253 = vmatpush2.msra.mxu0 0.0
    %4254 = vmatprep.subr.mxu0 0.0
    %4255 = vmatpush2.msra.mxu0 0.0
    %4256 = vmatprep.subr.mxu0 0.0
    %4257 = vmatpush2.msra.mxu0 0.0
    %4258 = vmatprep.subr.mxu0 0.0
    %4259 = vmatpush2.msra.mxu0 0.0
    %4260 = vmatprep.subr.mxu0 0.0
    %4261 = vmatpush2.msra.mxu0 0.0
    %4262 = vmatprep.subr.mxu0 0.0
    %4263 = vmatpush2.msra.mxu0 0.0
    %4264 = vmatprep.subr.mxu0 0.0
    %4265 = vmatpush2.msra.mxu0 0.0
    %4266 = vmatprep.subr.mxu0 0.0
    %4267 = vmatpush2.msra.mxu0 0.0
    %4268 = vmatprep.subr.mxu0 0.0
    %4269 = vmatpush2.msra.mxu0 0.0
    %4270 = vmatprep.subr.mxu0 0.0
    %4271 = vmatpush2.msra.mxu0 0.0
    %4272 = vmatprep.subr.mxu0 0.0
    %4273 = vmatpush2.msra.mxu0 0.0
    %4274 = vmatprep.subr.mxu0 0.0
    %4275 = vmatpush2.msra.mxu0 0.0
    %4276 = vmatprep.subr.mxu0 0.0
    %4277 = vmatpush2.msra.mxu0 0.0
    %4278 = vmatprep.subr.mxu0 0.0
    %4279 = vmatpush2.msra.mxu0 0.0
    %4280 = vmatprep.subr.mxu0 0.0
    %4281 = vmatpush2.msra.mxu0 0.0
    %4282 = vmatprep.mubr.f32.mxu0 0.0
    %4283 = vmatmul.mubr.f32.gmra.mxu0 %v4213
    %v4284 = vpop.f32.mrf.mxu0
    %v4285 = vadd.f32 %v4210, %v4284
    %v4286 = vpop.f32.mrf.mxu0
    %4287 = vmatprep.mubr.f32.mxu0 0.0
    %4288 = vmatmul.mubr.f32.gmra.mxu0 %v4216
    %v4289 = vpop.f32.mrf.mxu0
    %v4290 = vadd.f32 %v4210, %v4289
    %v4291 = vpop.f32.mrf.mxu0
    %4292 = vdwg.mxu0
    %4293 = vst.msk [vmem:[%s21] sm:$0xff] %vm228, %v4285
    %4294 = vst.msk [vmem:[%s21 + $0x8] sm:$0xff] %vm228, %v4290
    // Predicated region
    $region134: #{rnn_autoencoder_forward.1} parent=1 // pred_check
      _
    $region135: #{rnn_autoencoder_forward.1} parent=1 // pred_check_branch
      %4296 = sbr.rel (0) target = $region137
    $region136: #{rnn_autoencoder_forward.1} parent=1 // pred_region
      _
    $region137: #{rnn_autoencoder_forward.1} parent=1 // pred_fallthru
      _
    // Predicated region
    $region138: #{rnn_autoencoder_forward.1} parent=1 // pred_check
      _
    $region139: #{rnn_autoencoder_forward.1} parent=1 // pred_check_branch
      %4298 = sbr.rel (0) target = $region141
    $region140: #{rnn_autoencoder_forward.1} parent=1 // pred_region
      _
    $region141: #{rnn_autoencoder_forward.1} parent=1 // pred_fallthru
      _
    // Predicated region
    $region142: #{rnn_autoencoder_forward.1} parent=1 // pred_check
      _
    $region143: #{rnn_autoencoder_forward.1} parent=1 // pred_check_branch
      %4300 = sbr.rel (0) target = $region145
    $region144: #{rnn_autoencoder_forward.1} parent=1 // pred_region
      _
    $region145: #{rnn_autoencoder_forward.1} parent=1 // pred_fallthru
      _
    // Predicated region
    $region146: #{rnn_autoencoder_forward.1} parent=1 // pred_check
      _
    $region147: #{rnn_autoencoder_forward.1} parent=1 // pred_check_branch
      %4302 = sbr.rel (0) target = $region149
    $region148: #{rnn_autoencoder_forward.1} parent=1 // pred_region
      _
    $region149: #{rnn_autoencoder_forward.1} parent=1 // pred_fallthru
      _
    %4303 = vsyncpa [#allocation6], 1
    %4304 = vsyncpa [#allocation8], 1
    %4305 = vsyncpa [#allocation11], 1
    %4306 = vsyncpa [#allocation14], 1
    %4307 = vsyncpa [#allocation17], 1
    %4308 = vsyncpa [#allocation20], 1
    %4309 = vsyncpa [#allocation23], 1

</llo_original>
